<compile_context>
chip_gen: v7x
topology: tpu7x:2x2x1
jax: 0.10.0
libtpu: 0.0.40
codegen_flags: <defaults>
</compile_context>

<pallas_src>
import jax
import jax.numpy as jnp
from jax.experimental import pallas as pl
from jax.experimental.pallas import tpu as pltpu

_LPAD = 8  # halo width on the W (sublane) axis; a multiple of 8 keeps the
           # interior write of the padded VMEM buffers sublane-aligned.


def _double_conv_kernel(x_ref, w1_ref, b1_ref, w2_ref, b2_ref, o_ref,
                        xpad, p1, ypad, p2):
    # x_ref:  (1, H, W, Cin)        NHWC image (channels on lanes)
    # w1_ref: (9*Cin, Cmid)         conv1 weights, BN1 scale folded in
    # b1_ref: (1, Cmid)             folded BN1 bias
    # w2_ref: (9*Cmid, Cout)        conv2 weights, BN2 scale folded in
    # b2_ref: (1, Cout)             folded BN2 bias
    # o_ref:  (1, Cout, H*W)        lane-dense output (reshaped to NCHW outside)
    # xpad:   (H+2, W+2*LPAD, Cin)  f32 zero-padded input (VMEM scratch)
    # p1:     (H*W, 9*Cin)          im2col buffer for conv1 (VMEM scratch)
    # ypad:   (H+2, W+2*LPAD, Cmid) f32 zero-padded intermediate (VMEM scratch)
    # p2:     (H*W, 9*Cmid)         im2col buffer for conv2 (VMEM scratch)
    H, W, Cin = x_ref.shape[1], x_ref.shape[2], x_ref.shape[3]
    Cmid = w1_ref.shape[1]
    cdt = p1.dtype                    # MXU operand dtype (f32 or bf16)
    lpad = (xpad.shape[1] - W) // 2   # aligned left-halo width (multiple of 8)

    # ---------------- stage 1: conv1 + BN1 + ReLU ----------------
    # In-kernel zero padding: halo cleared every grid step; interior write is
    # aligned (H axis is untiled, W offset `lpad` is a multiple of 8).
    xpad[...] = jnp.zeros(xpad.shape, xpad.dtype)
    xpad[1:H + 1, lpad:lpad + W, :] = x_ref[0].astype(xpad.dtype)

    # im2col: pay the shifted-slice relayout once per tap, then one big dot.
    for dh in range(3):
        for dw in range(3):
            t = dh * 3 + dw
            c0 = lpad - 1 + dw
            slab = xpad[dh:dh + H, c0:c0 + W, :]              # (H, W, Cin)
            p1[:, t * Cin:(t + 1) * Cin] = slab.reshape(H * W, Cin).astype(cdt)

    z1 = jnp.dot(p1[...], w1_ref[...], preferred_element_type=jnp.float32)
    y1 = jnp.maximum(z1 + b1_ref[...], 0.0)                   # (H*W, Cmid) f32

    # ---------------- stage 2: conv2 + BN2 + ReLU ----------------
    # Intermediate stays in VMEM (no HBM round trip, no second jnp.pad).
    ypad[...] = jnp.zeros(ypad.shape, ypad.dtype)
    ypad[1:H + 1, lpad:lpad + W, :] = y1.reshape(H, W, Cmid).astype(ypad.dtype)

    for dh in range(3):
        for dw in range(3):
            t = dh * 3 + dw
            c0 = lpad - 1 + dw
            slab = ypad[dh:dh + H, c0:c0 + W, :]              # (H, W, Cmid)
            p2[:, t * Cmid:(t + 1) * Cmid] = slab.reshape(H * W, Cmid).astype(cdt)

    z2 = jnp.dot(p2[...], w2_ref[...], preferred_element_type=jnp.float32)
    y2 = jnp.maximum(z2 + b2_ref[...], 0.0)                   # (H*W, Cout) f32

    # Lane-dense store: (Cout, H*W) puts H*W (multiple of 128) on the lane
    # axis, so writeback uses full-width stores instead of 8/128 masked ones.
    o_ref[0] = y2.T.astype(o_ref.dtype)


def fold_bn(gamma, beta, running_mean, running_var, eps=1e-5):
    scale = gamma / jnp.sqrt(running_var + eps)
    bias = beta - running_mean * scale
    return scale, bias


def double_conv(x_nchw, params, *, compute_dtype=jnp.float32):
    """PyTorch-equivalent DoubleConv forward (inference BN). NCHW in / NCHW out."""
    N, Cin, H, W = x_nchw.shape
    w1, w2 = params["w1"], params["w2"]            # HWIO: (3, 3, Ci, Co)
    Cmid, Cout = w1.shape[-1], w2.shape[-1]
    assert H % 8 == 0 and W % 8 == 0, "H, W must be multiples of 8"

    s1, b1 = fold_bn(params["bn1_gamma"], params["bn1_beta"],
                     params["bn1_mean"], params["bn1_var"])
    s2, b2 = fold_bn(params["bn2_gamma"], params["bn2_beta"],
                     params["bn2_mean"], params["bn2_var"])

    # Fold the BN scale into the conv weights (constant-folded at trace time);
    # reshape HWIO -> (9*Cin, Cout) to match the im2col column ordering.
    w1f = (w1 * s1[None, None, None, :]).reshape(9 * Cin, Cmid).astype(compute_dtype)
    w2f = (w2 * s2[None, None, None, :]).reshape(9 * Cmid, Cout).astype(compute_dtype)
    b1f = b1.reshape(1, Cmid).astype(jnp.float32)
    b2f = b2.reshape(1, Cout).astype(jnp.float32)

    x_nhwc = jnp.transpose(x_nchw, (0, 2, 3, 1))   # channels on lanes (glue)

    wpad = W + 2 * _LPAD
    # TODO(synk): for realistic UNet sizes add a row-block grid axis with a
    # 2-row halo and set vmem_limit_bytes so blocks fit v7x's 64 MiB VMEM;
    # at 16x16 whole-image blocks fit trivially.
    grid_spec = pltpu.PrefetchScalarGridSpec(
        num_scalar_prefetch=0,
        grid=(N,),
        in_specs=[
            pl.BlockSpec((1, H, W, Cin), lambda n: (n, 0, 0, 0)),
            pl.BlockSpec((9 * Cin, Cmid), lambda n: (0, 0)),
            pl.BlockSpec((1, Cmid), lambda n: (0, 0)),
            pl.BlockSpec((9 * Cmid, Cout), lambda n: (0, 0)),
            pl.BlockSpec((1, Cout), lambda n: (0, 0)),
        ],
        out_specs=pl.BlockSpec((1, Cout, H * W), lambda n: (n, 0, 0)),
        scratch_shapes=[
            pltpu.VMEM((H + 2, wpad, Cin), jnp.float32),    # padded input
            pltpu.VMEM((H * W, 9 * Cin), compute_dtype),    # im2col, conv1
            pltpu.VMEM((H + 2, wpad, Cmid), jnp.float32),   # padded intermediate
            pltpu.VMEM((H * W, 9 * Cmid), compute_dtype),   # im2col, conv2
        ],
    )

    out_flat = pl.pallas_call(
        _double_conv_kernel,
        out_shape=jax.ShapeDtypeStruct((N, Cout, H * W), x_nchw.dtype),
        grid_spec=grid_spec,
        compiler_params=pltpu.CompilerParams(
            dimension_semantics=("parallel",)),   # N>=2 feeds both v7x TCs
    )(x_nhwc, w1f, b1f, w2f, b2f)

    # (N, Cout, H*W) -> (N, Cout, H, W): pure reshape, no transpose pass.
    return out_flat.reshape(N, Cout, H, W)


def _reference(x_nchw, params):
    """Pure-JAX reference (NCHW conv) for correctness check."""
    def conv(x, w_hwio):
        w_oihw = jnp.transpose(w_hwio, (3, 2, 0, 1))
        return jax.lax.conv_general_dilated(
            x, w_oihw, window_strides=(1, 1), padding=((1, 1), (1, 1)),
            dimension_numbers=("NCHW", "OIHW", "NCHW"))

    s1, b1 = fold_bn(params["bn1_gamma"], params["bn1_beta"],
                     params["bn1_mean"], params["bn1_var"])
    s2, b2 = fold_bn(params["bn2_gamma"], params["bn2_beta"],
                     params["bn2_mean"], params["bn2_var"])

    y = conv(x_nchw, params["w1"])
    y = jnp.maximum(y * s1[None, :, None, None] + b1[None, :, None, None], 0.0)
    y = conv(y, params["w2"])
    y = jnp.maximum(y * s2[None, :, None, None] + b2[None, :, None, None], 0.0)
    return y


def make_params(key, in_channels, out_channels, mid_channels=None):
    if not mid_channels:
        mid_channels = out_channels
    ks = jax.random.split(key, 8)
    # conv weights in HWIO layout: (3, 3, Cin, Cout)
    w1 = jax.random.normal(ks[0], (3, 3, in_channels, mid_channels),
                           jnp.float32) * 0.1
    w2 = jax.random.normal(ks[1], (3, 3, mid_channels, out_channels),
                           jnp.float32) * 0.1
    return {
        "w1": w1,
        "w2": w2,
        "bn1_gamma": 1.0 + 0.1 * jax.random.normal(ks[2], (mid_channels,), jnp.float32),
        "bn1_beta": 0.1 * jax.random.normal(ks[3], (mid_channels,), jnp.float32),
        "bn1_mean": 0.05 * jax.random.normal(ks[4], (mid_channels,), jnp.float32),
        "bn1_var": jnp.abs(1.0 + 0.1 * jax.random.normal(ks[5], (mid_channels,), jnp.float32)),
        "bn2_gamma": 1.0 + 0.1 * jax.random.normal(ks[6], (out_channels,), jnp.float32),
        "bn2_beta": 0.1 * jax.random.normal(ks[7], (out_channels,), jnp.float32),
        "bn2_mean": jnp.zeros((out_channels,), jnp.float32),
        "bn2_var": jnp.ones((out_channels,), jnp.float32),
    }


if __name__ == "__main__":
    key = jax.random.PRNGKey(0)
    k_x, k_p = jax.random.split(key)

    N, Cin, Hs, Ws, Cout = 2, 4, 16, 16, 8
    x = jax.random.normal(k_x, (N, Cin, Hs, Ws), jnp.float32)
    params = make_params(k_p, Cin, Cout)

    ref = _reference(x, params)

    # f32 MXU operands: strict correctness check.
    out = jax.block_until_ready(double_conv(x, params))
    assert out.shape == (N, Cout, Hs, Ws)
    assert jnp.allclose(out, ref, atol=1e-4, rtol=1e-4), "f32 mismatch vs reference"

    # bf16 MXU operands (v6e/v7x fast path), f32 accumulation: looser tolerance.
    out_bf16 = jax.block_until_ready(
        double_conv(x, params, compute_dtype=jnp.bfloat16))
    assert jnp.allclose(out_bf16, ref, atol=5e-2, rtol=5e-2), "bf16 mismatch vs reference"

    print("KERNEL_OK")
</pallas_src>

<mosaic_0001>
module attributes {stable_mosaic.version = 11 : i64} {
  func.func @_double_conv_kernel(%arg0: i32, %arg1: memref<1x16x16x4xf32, #tpu.memory_space<vmem>>, %arg2: memref<36x8xf32, #tpu.memory_space<vmem>>, %arg3: memref<1x8xf32, #tpu.memory_space<vmem>>, %arg4: memref<72x8xf32, #tpu.memory_space<vmem>>, %arg5: memref<1x8xf32, #tpu.memory_space<vmem>>, %arg6: memref<1x8x256xf32, #tpu.memory_space<vmem>>, %arg7: memref<18x32x4xf32, #tpu.memory_space<vmem>>, %arg8: memref<256x36xf32, #tpu.memory_space<vmem>>, %arg9: memref<18x32x8xf32, #tpu.memory_space<vmem>>, %arg10: memref<256x72xf32, #tpu.memory_space<vmem>>) attributes {dimension_semantics = [#tpu.dimension_semantics<parallel>], iteration_bounds = array<i64: 2>, scalar_prefetch = 0 : i64, scratch_operands = 4 : i64, tpu.core_type = #tpu.core_type<tc>, window_params = [{transform_indices = @transform_0, window_bounds = array<i64: 1, 16, 16, 4>}, {pipeline_mode = #tpu.pipeline_mode<synchronous>, transform_indices = @transform_1, window_bounds = array<i64: 36, 8>}, {pipeline_mode = #tpu.pipeline_mode<synchronous>, transform_indices = @transform_2, window_bounds = array<i64: 1, 8>}, {pipeline_mode = #tpu.pipeline_mode<synchronous>, transform_indices = @transform_3, window_bounds = array<i64: 72, 8>}, {pipeline_mode = #tpu.pipeline_mode<synchronous>, transform_indices = @transform_4, window_bounds = array<i64: 1, 8>}, {transform_indices = @transform_5, window_bounds = array<i64: 1, 8, 256>}]} {
    %cst = arith.constant 0.000000e+00 : f32
    %0 = vector.broadcast %cst : f32 to vector<18x32x4xf32>
    %c0 = arith.constant 0 : index
    %c0_0 = arith.constant 0 : index
    %c0_1 = arith.constant 0 : index
    %1 = vector.load %arg7[%c0, %c0_0, %c0_1] : memref<18x32x4xf32, #tpu.memory_space<vmem>>, vector<18x32x4xf32>
    tpu.vector_store %arg7[%c0, %c0_0, %c0_1], %0 {strides = array<i32>} : memref<18x32x4xf32, #tpu.memory_space<vmem>>, vector<18x32x4xf32>,
    %c0_2 = arith.constant 0 : index
    %c0_3 = arith.constant 0 : index
    %c0_4 = arith.constant 0 : index
    %c0_5 = arith.constant 0 : index
    %2 = vector.load %arg1[%c0_2, %c0_3, %c0_4, %c0_5] : memref<1x16x16x4xf32, #tpu.memory_space<vmem>>, vector<1x16x16x4xf32>
    %3 = vector.shape_cast %2 : vector<1x16x16x4xf32> to vector<16x16x4xf32>
    %c1 = arith.constant 1 : index
    %c8 = arith.constant 8 : index
    %c0_6 = arith.constant 0 : index
    %4 = vector.load %arg7[%c1, %c8, %c0_6] : memref<18x32x4xf32, #tpu.memory_space<vmem>>, vector<16x16x4xf32>
    tpu.vector_store %arg7[%c1, %c8, %c0_6], %3 {strides = array<i32>} : memref<18x32x4xf32, #tpu.memory_space<vmem>>, vector<16x16x4xf32>,
    %c0_7 = arith.constant 0 : index
    %c7 = arith.constant 7 : index
    %c0_8 = arith.constant 0 : index
    %5 = vector.load %arg7[%c0_7, %c7, %c0_8] : memref<18x32x4xf32, #tpu.memory_space<vmem>>, vector<16x16x4xf32>
    %6 = vector.shape_cast %5 : vector<16x16x4xf32> to vector<256x4xf32>
    %c0_9 = arith.constant 0 : index
    %c0_10 = arith.constant 0 : index
    %7 = vector.load %arg8[%c0_9, %c0_10] : memref<256x36xf32, #tpu.memory_space<vmem>>, vector<256x4xf32>
    tpu.vector_store %arg8[%c0_9, %c0_10], %6 {strides = array<i32>} : memref<256x36xf32, #tpu.memory_space<vmem>>, vector<256x4xf32>,
    %c0_11 = arith.constant 0 : index
    %c8_12 = arith.constant 8 : index
    %c0_13 = arith.constant 0 : index
    %8 = vector.load %arg7[%c0_11, %c8_12, %c0_13] : memref<18x32x4xf32, #tpu.memory_space<vmem>>, vector<16x16x4xf32>
    %9 = vector.shape_cast %8 : vector<16x16x4xf32> to vector<256x4xf32>
    %c0_14 = arith.constant 0 : index
    %c4 = arith.constant 4 : index
    %10 = vector.load %arg8[%c0_14, %c4] : memref<256x36xf32, #tpu.memory_space<vmem>>, vector<256x4xf32>
    tpu.vector_store %arg8[%c0_14, %c4], %9 {strides = array<i32>} : memref<256x36xf32, #tpu.memory_space<vmem>>, vector<256x4xf32>,
    %c0_15 = arith.constant 0 : index
    %c9 = arith.constant 9 : index
    %c0_16 = arith.constant 0 : index
    %11 = vector.load %arg7[%c0_15, %c9, %c0_16] : memref<18x32x4xf32, #tpu.memory_space<vmem>>, vector<16x16x4xf32>
    %12 = vector.shape_cast %11 : vector<16x16x4xf32> to vector<256x4xf32>
    %c0_17 = arith.constant 0 : index
    %c8_18 = arith.constant 8 : index
    %13 = vector.load %arg8[%c0_17, %c8_18] : memref<256x36xf32, #tpu.memory_space<vmem>>, vector<256x4xf32>
    tpu.vector_store %arg8[%c0_17, %c8_18], %12 {strides = array<i32>} : memref<256x36xf32, #tpu.memory_space<vmem>>, vector<256x4xf32>,
    %c1_19 = arith.constant 1 : index
    %c7_20 = arith.constant 7 : index
    %c0_21 = arith.constant 0 : index
    %14 = vector.load %arg7[%c1_19, %c7_20, %c0_21] : memref<18x32x4xf32, #tpu.memory_space<vmem>>, vector<16x16x4xf32>
    %15 = vector.shape_cast %14 : vector<16x16x4xf32> to vector<256x4xf32>
    %c0_22 = arith.constant 0 : index
    %c12 = arith.constant 12 : index
    %16 = vector.load %arg8[%c0_22, %c12] : memref<256x36xf32, #tpu.memory_space<vmem>>, vector<256x4xf32>
    tpu.vector_store %arg8[%c0_22, %c12], %15 {strides = array<i32>} : memref<256x36xf32, #tpu.memory_space<vmem>>, vector<256x4xf32>,
    %c1_23 = arith.constant 1 : index
    %c8_24 = arith.constant 8 : index
    %c0_25 = arith.constant 0 : index
    %17 = vector.load %arg7[%c1_23, %c8_24, %c0_25] : memref<18x32x4xf32, #tpu.memory_space<vmem>>, vector<16x16x4xf32>
    %18 = vector.shape_cast %17 : vector<16x16x4xf32> to vector<256x4xf32>
    %c0_26 = arith.constant 0 : index
    %c16 = arith.constant 16 : index
    %19 = vector.load %arg8[%c0_26, %c16] : memref<256x36xf32, #tpu.memory_space<vmem>>, vector<256x4xf32>
    tpu.vector_store %arg8[%c0_26, %c16], %18 {strides = array<i32>} : memref<256x36xf32, #tpu.memory_space<vmem>>, vector<256x4xf32>,
    %c1_27 = arith.constant 1 : index
    %c9_28 = arith.constant 9 : index
    %c0_29 = arith.constant 0 : index
    %20 = vector.load %arg7[%c1_27, %c9_28, %c0_29] : memref<18x32x4xf32, #tpu.memory_space<vmem>>, vector<16x16x4xf32>
    %21 = vector.shape_cast %20 : vector<16x16x4xf32> to vector<256x4xf32>
    %c0_30 = arith.constant 0 : index
    %c20 = arith.constant 20 : index
    %22 = vector.load %arg8[%c0_30, %c20] : memref<256x36xf32, #tpu.memory_space<vmem>>, vector<256x4xf32>
    tpu.vector_store %arg8[%c0_30, %c20], %21 {strides = array<i32>} : memref<256x36xf32, #tpu.memory_space<vmem>>, vector<256x4xf32>,
    %c2 = arith.constant 2 : index
    %c7_31 = arith.constant 7 : index
    %c0_32 = arith.constant 0 : index
    %23 = vector.load %arg7[%c2, %c7_31, %c0_32] : memref<18x32x4xf32, #tpu.memory_space<vmem>>, vector<16x16x4xf32>
    %24 = vector.shape_cast %23 : vector<16x16x4xf32> to vector<256x4xf32>
    %c0_33 = arith.constant 0 : index
    %c24 = arith.constant 24 : index
    %25 = vector.load %arg8[%c0_33, %c24] : memref<256x36xf32, #tpu.memory_space<vmem>>, vector<256x4xf32>
    tpu.vector_store %arg8[%c0_33, %c24], %24 {strides = array<i32>} : memref<256x36xf32, #tpu.memory_space<vmem>>, vector<256x4xf32>,
    %c2_34 = arith.constant 2 : index
    %c8_35 = arith.constant 8 : index
    %c0_36 = arith.constant 0 : index
    %26 = vector.load %arg7[%c2_34, %c8_35, %c0_36] : memref<18x32x4xf32, #tpu.memory_space<vmem>>, vector<16x16x4xf32>
    %27 = vector.shape_cast %26 : vector<16x16x4xf32> to vector<256x4xf32>
    %c0_37 = arith.constant 0 : index
    %c28 = arith.constant 28 : index
    %28 = vector.load %arg8[%c0_37, %c28] : memref<256x36xf32, #tpu.memory_space<vmem>>, vector<256x4xf32>
    tpu.vector_store %arg8[%c0_37, %c28], %27 {strides = array<i32>} : memref<256x36xf32, #tpu.memory_space<vmem>>, vector<256x4xf32>,
    %c2_38 = arith.constant 2 : index
    %c9_39 = arith.constant 9 : index
    %c0_40 = arith.constant 0 : index
    %29 = vector.load %arg7[%c2_38, %c9_39, %c0_40] : memref<18x32x4xf32, #tpu.memory_space<vmem>>, vector<16x16x4xf32>
    %30 = vector.shape_cast %29 : vector<16x16x4xf32> to vector<256x4xf32>
    %c0_41 = arith.constant 0 : index
    %c32 = arith.constant 32 : index
    %31 = vector.load %arg8[%c0_41, %c32] : memref<256x36xf32, #tpu.memory_space<vmem>>, vector<256x4xf32>
    tpu.vector_store %arg8[%c0_41, %c32], %30 {strides = array<i32>} : memref<256x36xf32, #tpu.memory_space<vmem>>, vector<256x4xf32>,
    %c0_42 = arith.constant 0 : index
    %c0_43 = arith.constant 0 : index
    %32 = vector.load %arg8[%c0_42, %c0_43] : memref<256x36xf32, #tpu.memory_space<vmem>>, vector<256x36xf32>
    %c0_44 = arith.constant 0 : index
    %c0_45 = arith.constant 0 : index
    %33 = vector.load %arg2[%c0_44, %c0_45] : memref<36x8xf32, #tpu.memory_space<vmem>>, vector<36x8xf32>
    %cst_46 = arith.constant dense<0.000000e+00> : vector<256x8xf32>
    %34 = tpu.matmul %32, %33, %cst_46 {dimension_numbers = #tpu.dot_dimension_numbers<[1], [0], [0], [1], [0, 0, 1, 1], [], []>} : vector<256x36xf32>, vector<36x8xf32>, vector<256x8xf32> -> vector<256x8xf32>
    %c0_47 = arith.constant 0 : index
    %c0_48 = arith.constant 0 : index
    %35 = vector.load %arg3[%c0_47, %c0_48] : memref<1x8xf32, #tpu.memory_space<vmem>>, vector<1x8xf32>
    %36 = vector.broadcast %35 : vector<1x8xf32> to vector<256x8xf32>
    %37 = arith.addf %34, %36 : vector<256x8xf32>
    %cst_49 = arith.constant 0.000000e+00 : f32
    %38 = vector.broadcast %cst_49 : f32 to vector<256x8xf32>
    %39 = arith.maximumf %37, %38 : vector<256x8xf32>
    %cst_50 = arith.constant 0.000000e+00 : f32
    %40 = vector.broadcast %cst_50 : f32 to vector<18x32x8xf32>
    %c0_51 = arith.constant 0 : index
    %c0_52 = arith.constant 0 : index
    %c0_53 = arith.constant 0 : index
    %41 = vector.load %arg9[%c0_51, %c0_52, %c0_53] : memref<18x32x8xf32, #tpu.memory_space<vmem>>, vector<18x32x8xf32>
    tpu.vector_store %arg9[%c0_51, %c0_52, %c0_53], %40 {strides = array<i32>} : memref<18x32x8xf32, #tpu.memory_space<vmem>>, vector<18x32x8xf32>,
    %42 = vector.shape_cast %39 : vector<256x8xf32> to vector<16x16x8xf32>
    %c1_54 = arith.constant 1 : index
    %c8_55 = arith.constant 8 : index
    %c0_56 = arith.constant 0 : index
    %43 = vector.load %arg9[%c1_54, %c8_55, %c0_56] : memref<18x32x8xf32, #tpu.memory_space<vmem>>, vector<16x16x8xf32>
    tpu.vector_store %arg9[%c1_54, %c8_55, %c0_56], %42 {strides = array<i32>} : memref<18x32x8xf32, #tpu.memory_space<vmem>>, vector<16x16x8xf32>,
    %c0_57 = arith.constant 0 : index
    %c7_58 = arith.constant 7 : index
    %c0_59 = arith.constant 0 : index
    %44 = vector.load %arg9[%c0_57, %c7_58, %c0_59] : memref<18x32x8xf32, #tpu.memory_space<vmem>>, vector<16x16x8xf32>
    %45 = vector.shape_cast %44 : vector<16x16x8xf32> to vector<256x8xf32>
    %c0_60 = arith.constant 0 : index
    %c0_61 = arith.constant 0 : index
    %46 = vector.load %arg10[%c0_60, %c0_61] : memref<256x72xf32, #tpu.memory_space<vmem>>, vector<256x8xf32>
    tpu.vector_store %arg10[%c0_60, %c0_61], %45 {strides = array<i32>} : memref<256x72xf32, #tpu.memory_space<vmem>>, vector<256x8xf32>,
    %c0_62 = arith.constant 0 : index
    %c8_63 = arith.constant 8 : index
    %c0_64 = arith.constant 0 : index
    %47 = vector.load %arg9[%c0_62, %c8_63, %c0_64] : memref<18x32x8xf32, #tpu.memory_space<vmem>>, vector<16x16x8xf32>
    %48 = vector.shape_cast %47 : vector<16x16x8xf32> to vector<256x8xf32>
    %c0_65 = arith.constant 0 : index
    %c8_66 = arith.constant 8 : index
    %49 = vector.load %arg10[%c0_65, %c8_66] : memref<256x72xf32, #tpu.memory_space<vmem>>, vector<256x8xf32>
    tpu.vector_store %arg10[%c0_65, %c8_66], %48 {strides = array<i32>} : memref<256x72xf32, #tpu.memory_space<vmem>>, vector<256x8xf32>,
    %c0_67 = arith.constant 0 : index
    %c9_68 = arith.constant 9 : index
    %c0_69 = arith.constant 0 : index
    %50 = vector.load %arg9[%c0_67, %c9_68, %c0_69] : memref<18x32x8xf32, #tpu.memory_space<vmem>>, vector<16x16x8xf32>
    %51 = vector.shape_cast %50 : vector<16x16x8xf32> to vector<256x8xf32>
    %c0_70 = arith.constant 0 : index
    %c16_71 = arith.constant 16 : index
    %52 = vector.load %arg10[%c0_70, %c16_71] : memref<256x72xf32, #tpu.memory_space<vmem>>, vector<256x8xf32>
    tpu.vector_store %arg10[%c0_70, %c16_71], %51 {strides = array<i32>} : memref<256x72xf32, #tpu.memory_space<vmem>>, vector<256x8xf32>,
    %c1_72 = arith.constant 1 : index
    %c7_73 = arith.constant 7 : index
    %c0_74 = arith.constant 0 : index
    %53 = vector.load %arg9[%c1_72, %c7_73, %c0_74] : memref<18x32x8xf32, #tpu.memory_space<vmem>>, vector<16x16x8xf32>
    %54 = vector.shape_cast %53 : vector<16x16x8xf32> to vector<256x8xf32>
    %c0_75 = arith.constant 0 : index
    %c24_76 = arith.constant 24 : index
    %55 = vector.load %arg10[%c0_75, %c24_76] : memref<256x72xf32, #tpu.memory_space<vmem>>, vector<256x8xf32>
    tpu.vector_store %arg10[%c0_75, %c24_76], %54 {strides = array<i32>} : memref<256x72xf32, #tpu.memory_space<vmem>>, vector<256x8xf32>,
    %c1_77 = arith.constant 1 : index
    %c8_78 = arith.constant 8 : index
    %c0_79 = arith.constant 0 : index
    %56 = vector.load %arg9[%c1_77, %c8_78, %c0_79] : memref<18x32x8xf32, #tpu.memory_space<vmem>>, vector<16x16x8xf32>
    %57 = vector.shape_cast %56 : vector<16x16x8xf32> to vector<256x8xf32>
    %c0_80 = arith.constant 0 : index
    %c32_81 = arith.constant 32 : index
    %58 = vector.load %arg10[%c0_80, %c32_81] : memref<256x72xf32, #tpu.memory_space<vmem>>, vector<256x8xf32>
    tpu.vector_store %arg10[%c0_80, %c32_81], %57 {strides = array<i32>} : memref<256x72xf32, #tpu.memory_space<vmem>>, vector<256x8xf32>,
    %c1_82 = arith.constant 1 : index
    %c9_83 = arith.constant 9 : index
    %c0_84 = arith.constant 0 : index
    %59 = vector.load %arg9[%c1_82, %c9_83, %c0_84] : memref<18x32x8xf32, #tpu.memory_space<vmem>>, vector<16x16x8xf32>
    %60 = vector.shape_cast %59 : vector<16x16x8xf32> to vector<256x8xf32>
    %c0_85 = arith.constant 0 : index
    %c40 = arith.constant 40 : index
    %61 = vector.load %arg10[%c0_85, %c40] : memref<256x72xf32, #tpu.memory_space<vmem>>, vector<256x8xf32>
    tpu.vector_store %arg10[%c0_85, %c40], %60 {strides = array<i32>} : memref<256x72xf32, #tpu.memory_space<vmem>>, vector<256x8xf32>,
    %c2_86 = arith.constant 2 : index
    %c7_87 = arith.constant 7 : index
    %c0_88 = arith.constant 0 : index
    %62 = vector.load %arg9[%c2_86, %c7_87, %c0_88] : memref<18x32x8xf32, #tpu.memory_space<vmem>>, vector<16x16x8xf32>
    %63 = vector.shape_cast %62 : vector<16x16x8xf32> to vector<256x8xf32>
    %c0_89 = arith.constant 0 : index
    %c48 = arith.constant 48 : index
    %64 = vector.load %arg10[%c0_89, %c48] : memref<256x72xf32, #tpu.memory_space<vmem>>, vector<256x8xf32>
    tpu.vector_store %arg10[%c0_89, %c48], %63 {strides = array<i32>} : memref<256x72xf32, #tpu.memory_space<vmem>>, vector<256x8xf32>,
    %c2_90 = arith.constant 2 : index
    %c8_91 = arith.constant 8 : index
    %c0_92 = arith.constant 0 : index
    %65 = vector.load %arg9[%c2_90, %c8_91, %c0_92] : memref<18x32x8xf32, #tpu.memory_space<vmem>>, vector<16x16x8xf32>
    %66 = vector.shape_cast %65 : vector<16x16x8xf32> to vector<256x8xf32>
    %c0_93 = arith.constant 0 : index
    %c56 = arith.constant 56 : index
    %67 = vector.load %arg10[%c0_93, %c56] : memref<256x72xf32, #tpu.memory_space<vmem>>, vector<256x8xf32>
    tpu.vector_store %arg10[%c0_93, %c56], %66 {strides = array<i32>} : memref<256x72xf32, #tpu.memory_space<vmem>>, vector<256x8xf32>,
    %c2_94 = arith.constant 2 : index
    %c9_95 = arith.constant 9 : index
    %c0_96 = arith.constant 0 : index
    %68 = vector.load %arg9[%c2_94, %c9_95, %c0_96] : memref<18x32x8xf32, #tpu.memory_space<vmem>>, vector<16x16x8xf32>
    %69 = vector.shape_cast %68 : vector<16x16x8xf32> to vector<256x8xf32>
    %c0_97 = arith.constant 0 : index
    %c64 = arith.constant 64 : index
    %70 = vector.load %arg10[%c0_97, %c64] : memref<256x72xf32, #tpu.memory_space<vmem>>, vector<256x8xf32>
    tpu.vector_store %arg10[%c0_97, %c64], %69 {strides = array<i32>} : memref<256x72xf32, #tpu.memory_space<vmem>>, vector<256x8xf32>,
    %c0_98 = arith.constant 0 : index
    %c0_99 = arith.constant 0 : index
    %71 = vector.load %arg10[%c0_98, %c0_99] : memref<256x72xf32, #tpu.memory_space<vmem>>, vector<256x72xf32>
    %c0_100 = arith.constant 0 : index
    %c0_101 = arith.constant 0 : index
    %72 = vector.load %arg4[%c0_100, %c0_101] : memref<72x8xf32, #tpu.memory_space<vmem>>, vector<72x8xf32>
    %cst_102 = arith.constant dense<0.000000e+00> : vector<256x8xf32>
    %73 = tpu.matmul %71, %72, %cst_102 {dimension_numbers = #tpu.dot_dimension_numbers<[1], [0], [0], [1], [0, 0, 1, 1], [], []>} : vector<256x72xf32>, vector<72x8xf32>, vector<256x8xf32> -> vector<256x8xf32>
    %c0_103 = arith.constant 0 : index
    %c0_104 = arith.constant 0 : index
    %74 = vector.load %arg5[%c0_103, %c0_104] : memref<1x8xf32, #tpu.memory_space<vmem>>, vector<1x8xf32>
    %75 = vector.broadcast %74 : vector<1x8xf32> to vector<256x8xf32>
    %76 = arith.addf %73, %75 : vector<256x8xf32>
    %cst_105 = arith.constant 0.000000e+00 : f32
    %77 = vector.broadcast %cst_105 : f32 to vector<256x8xf32>
    %78 = arith.maximumf %76, %77 : vector<256x8xf32>
    %79 = tpu.transpose %78, [1, 0] : vector<256x8xf32> -> vector<8x256xf32>
    %c0_106 = arith.constant 0 : index
    %c0_107 = arith.constant 0 : index
    %c0_108 = arith.constant 0 : index
    %80 = vector.load %arg6[%c0_106, %c0_107, %c0_108] : memref<1x8x256xf32, #tpu.memory_space<vmem>>, vector<1x8x256xf32>
    %81 = vector.shape_cast %80 : vector<1x8x256xf32> to vector<8x256xf32>
    %82 = vector.shape_cast %79 : vector<8x256xf32> to vector<1x8x256xf32>
    tpu.vector_store %arg6[%c0_106, %c0_107, %c0_108], %82 {strides = array<i32>} : memref<1x8x256xf32, #tpu.memory_space<vmem>>, vector<1x8x256xf32>,
    return
  }
  func.func @transform_0(%arg0: i32) -> (i32, i32, i32, i32) {
    %c0_i32 = arith.constant 0 : i32
    %c0_i32_0 = arith.constant 0 : i32
    %c0_i32_1 = arith.constant 0 : i32
    %c0_i32_2 = arith.constant 0 : i32
    return %arg0, %c0_i32, %c0_i32_0, %c0_i32_1 : i32, i32, i32, i32
  }
  func.func @transform_1(%arg0: i32) -> (i32, i32) {
    %c0_i32 = arith.constant 0 : i32
    %c0_i32_0 = arith.constant 0 : i32
    %c0_i32_1 = arith.constant 0 : i32
    return %c0_i32, %c0_i32_0 : i32, i32
  }
  func.func @transform_2(%arg0: i32) -> (i32, i32) {
    %c0_i32 = arith.constant 0 : i32
    %c0_i32_0 = arith.constant 0 : i32
    %c0_i32_1 = arith.constant 0 : i32
    return %c0_i32, %c0_i32_0 : i32, i32
  }
  func.func @transform_3(%arg0: i32) -> (i32, i32) {
    %c0_i32 = arith.constant 0 : i32
    %c0_i32_0 = arith.constant 0 : i32
    %c0_i32_1 = arith.constant 0 : i32
    return %c0_i32, %c0_i32_0 : i32, i32
  }
  func.func @transform_4(%arg0: i32) -> (i32, i32) {
    %c0_i32 = arith.constant 0 : i32
    %c0_i32_0 = arith.constant 0 : i32
    %c0_i32_1 = arith.constant 0 : i32
    return %c0_i32, %c0_i32_0 : i32, i32
  }
  func.func @transform_5(%arg0: i32) -> (i32, i32, i32) {
    %c0_i32 = arith.constant 0 : i32
    %c0_i32_0 = arith.constant 0 : i32
    %c0_i32_1 = arith.constant 0 : i32
    return %arg0, %c0_i32, %c0_i32_0 : i32, i32, i32
  }
}

</mosaic_0001>

<llo_original>
// kernel: tpu_custom_call.1
$region0: #{tpu_custom_call.1}
  #allocation0 [shape = 'u32[]', space=smem, size = 0x4, offset = 0x4, fixed_abs, tag = 'smem constant byte address 0x4 - core index']
  #allocation1 [shape = 'u32[144,128]{1,0:T(1,128)}', space=vmem, size = 0x12000, scoped, tag = 'internal scratch']
  #allocation2 [shape = 'f32[18,32,4]{2,1,0:T(8,128)}', space=vmem, size = 0x48000, scoped, tag = 'scratch operand']
  #allocation3 [shape = 'f32[256,36]{1,0:T(8,128)}', space=vmem, size = 0x20000, scoped, tag = 'scratch operand']
  #allocation4 [shape = 'f32[18,32,8]{2,1,0:T(8,128)}', space=vmem, size = 0x48000, scoped, tag = 'scratch operand']
  #allocation5 [shape = 'f32[256,72]{1,0:T(8,128)}', space=vmem, size = 0x20000, scoped, tag = 'scratch operand']
  %s0 = inlined_call_operand.vmem [shape: f32[2,16,16,4], index: 0, kind: input, shape index: {}]
  %s1 = inlined_call_operand.vmem [shape: f32[36,8], index: 1, kind: input, shape index: {}]
  %s2 = inlined_call_operand.vmem [shape: f32[1,8], index: 2, kind: input, shape index: {}]
  %s3 = inlined_call_operand.vmem [shape: f32[72,8], index: 3, kind: input, shape index: {}]
  %s4 = inlined_call_operand.vmem [shape: f32[1,8], index: 4, kind: input, shape index: {}]
  %s5 = inlined_call_operand.hbm [shape: f32[2,8,256], index: 5, kind: output, shape index: {}]
  %s6 = sld [smem:[#allocation0]]
  $region53: #{tpu_custom_call.1} parent=0
    _
  %s8 = ssub.s32 1, %s6
  %s9 = scalar_select 0, %s8, %s6
  $region1: #{tpu_custom_call.1} parent=0
    #allocation6 [shape = 'u8[16384]{0}', space=vmem, size = 0x4000, scoped, tag = 'output window, operand 0']
    #allocation7 [shape = 's32[2]{0}', space=sflag, size = 0x8, scoped, tag = 'scoped memory for tpu_custom_call.1']
    %10 = vsyncpa [#allocation7], 0
    %s11 = scalar_lea.sflag [#allocation7], 1
    %12 = vsyncpa %s11, 0
    loop: start=0, step=1, limit=4
    $region2: #{tpu_custom_call.1} parent=1 // loop_pre_header
      _
    $region3: #{tpu_custom_call.1} parent=1 // loop_header
      %s14 = sphi 0, %s18
      %p15 = scmp.ge.s32.totalorder %s14, 4
      %s24 = sphi 0, %s26
      %s27 = sphi 0, %s24
      %s28 = sphi 0, %s27
      %s44 = sphi 0, %s28
      %s48 = sphi 0, %s48
      %s50 = sphi 0, %s48
      %s51 = sphi 0, %s50
      %s65 = sphi 0, %s51
      %s69 = sphi 0, %s69
      %s71 = sphi 0, %s69
      %s72 = sphi 0, %s71
      %s86 = sphi 0, %s72
      %s90 = sphi 0, %s90
      %s92 = sphi 0, %s90
      %s93 = sphi 0, %s92
      %s107 = sphi 0, %s93
      %s111 = sphi 0, %s111
      %s113 = sphi 0, %s111
      %s114 = sphi 0, %s113
      %s128 = sphi 0, %s114
      %s134 = sphi 0, %s136
      %s137 = sphi 0, %s134
      %s138 = sphi 0, %s137
      %s154 = sphi 0, %s138
    $region4: #{tpu_custom_call.1} parent=1 // loop_header_branch
      %17 = sbr.rel (%p15) target = $region8
    $region5: #{tpu_custom_call.1} parent=1 // loop_body
      %s19 = ssub.s32 %s14, 1
      %s20 = ssub.s32 %s14, 2
      %s21 = sadd.s32 %s14, 1
      %s22 = ssub.s32 %s14, %s21
      %p23 = scmp.eq.s32.totalorder %s22, 0
      %s25 = sadd.s32 %s24, 1
      %s26 = scalar_select %p23, %s24, %s25
      %p29 = pneg %p23
      %p30 = scmp.eq.s32.totalorder %s14, 1
      %p31 = por %p29, %p30
      %p32 = scmp.ne.s32.totalorder %s24, %s27
      %p33 = scmp.eq.s32.totalorder %s14, 0
      %p34 = por %p32, %p33
      %p35 = scmp.ne.s32.totalorder %s24, %s27
      %p36 = scmp.eq.s32.totalorder %s19, 1
      %p37 = por %p35, %p36
      %p38 = scmp.ne.s32.totalorder %s27, %s28
      %p39 = scmp.eq.s32.totalorder %s19, 0
      %p40 = por %p38, %p39
      %p41 = scmp.ne.s32.totalorder %s27, %s28
      %p42 = scmp.eq.s32.totalorder %s20, 1
      %p43 = por %p41, %p42
      %p45 = scmp.ne.s32.totalorder %s28, %s44
      %p46 = scmp.eq.s32.totalorder %s20, 0
      %p47 = por %p45, %p46
      %s49 = sadd.s32 %s48, 1
      %p52 = scmp.eq.s32.totalorder %s14, 1
      %p53 = scmp.ne.s32.totalorder %s48, %s50
      %p54 = scmp.eq.s32.totalorder %s14, 0
      %p55 = por %p53, %p54
      %p56 = scmp.ne.s32.totalorder %s48, %s50
      %p57 = scmp.eq.s32.totalorder %s19, 1
      %p58 = por %p56, %p57
      %p59 = scmp.ne.s32.totalorder %s50, %s51
      %p60 = scmp.eq.s32.totalorder %s19, 0
      %p61 = por %p59, %p60
      %p62 = scmp.ne.s32.totalorder %s50, %s51
      %p63 = scmp.eq.s32.totalorder %s20, 1
      %p64 = por %p62, %p63
      %p66 = scmp.ne.s32.totalorder %s51, %s65
      %p67 = scmp.eq.s32.totalorder %s20, 0
      %p68 = por %p66, %p67
      %s70 = sadd.s32 %s69, 1
      %p73 = scmp.eq.s32.totalorder %s14, 1
      %p74 = scmp.ne.s32.totalorder %s69, %s71
      %p75 = scmp.eq.s32.totalorder %s14, 0
      %p76 = por %p74, %p75
      %p77 = scmp.ne.s32.totalorder %s69, %s71
      %p78 = scmp.eq.s32.totalorder %s19, 1
      %p79 = por %p77, %p78
      %p80 = scmp.ne.s32.totalorder %s71, %s72
      %p81 = scmp.eq.s32.totalorder %s19, 0
      %p82 = por %p80, %p81
      %p83 = scmp.ne.s32.totalorder %s71, %s72
      %p84 = scmp.eq.s32.totalorder %s20, 1
      %p85 = por %p83, %p84
      %p87 = scmp.ne.s32.totalorder %s72, %s86
      %p88 = scmp.eq.s32.totalorder %s20, 0
      %p89 = por %p87, %p88
      %s91 = sadd.s32 %s90, 1
      %p94 = scmp.eq.s32.totalorder %s14, 1
      %p95 = scmp.ne.s32.totalorder %s90, %s92
      %p96 = scmp.eq.s32.totalorder %s14, 0
      %p97 = por %p95, %p96
      %p98 = scmp.ne.s32.totalorder %s90, %s92
      %p99 = scmp.eq.s32.totalorder %s19, 1
      %p100 = por %p98, %p99
      %p101 = scmp.ne.s32.totalorder %s92, %s93
      %p102 = scmp.eq.s32.totalorder %s19, 0
      %p103 = por %p101, %p102
      %p104 = scmp.ne.s32.totalorder %s92, %s93
      %p105 = scmp.eq.s32.totalorder %s20, 1
      %p106 = por %p104, %p105
      %p108 = scmp.ne.s32.totalorder %s93, %s107
      %p109 = scmp.eq.s32.totalorder %s20, 0
      %p110 = por %p108, %p109
      %s112 = sadd.s32 %s111, 1
      %p115 = scmp.eq.s32.totalorder %s14, 1
      %p116 = scmp.ne.s32.totalorder %s111, %s113
      %p117 = scmp.eq.s32.totalorder %s14, 0
      %p118 = por %p116, %p117
      %p119 = scmp.ne.s32.totalorder %s111, %s113
      %p120 = scmp.eq.s32.totalorder %s19, 1
      %p121 = por %p119, %p120
      %p122 = scmp.ne.s32.totalorder %s113, %s114
      %p123 = scmp.eq.s32.totalorder %s19, 0
      %p124 = por %p122, %p123
      %p125 = scmp.ne.s32.totalorder %s113, %s114
      %p126 = scmp.eq.s32.totalorder %s20, 1
      %p127 = por %p125, %p126
      %p129 = scmp.ne.s32.totalorder %s114, %s128
      %p130 = scmp.eq.s32.totalorder %s20, 0
      %p131 = por %p129, %p130
      %s132 = ssub.s32 %s14, %s21
      %p133 = scmp.eq.s32.totalorder %s132, 0
      %s135 = sadd.s32 %s134, 1
      %s136 = scalar_select %p133, %s134, %s135
      %p139 = pneg %p133
      %p140 = scmp.eq.s32.totalorder %s14, 1
      %p141 = por %p139, %p140
      %p142 = scmp.ne.s32.totalorder %s134, %s137
      %p143 = scmp.eq.s32.totalorder %s14, 0
      %p144 = por %p142, %p143
      %p145 = scmp.ne.s32.totalorder %s134, %s137
      %p146 = scmp.eq.s32.totalorder %s19, 1
      %p147 = por %p145, %p146
      %p148 = scmp.ne.s32.totalorder %s137, %s138
      %p149 = scmp.eq.s32.totalorder %s19, 0
      %p150 = por %p148, %p149
      %p151 = scmp.ne.s32.totalorder %s137, %s138
      %p152 = scmp.eq.s32.totalorder %s20, 1
      %p153 = por %p151, %p152
      %p155 = scmp.ne.s32.totalorder %s138, %s154
      %p156 = scmp.eq.s32.totalorder %s20, 0
      %p157 = por %p155, %p156
      %p158 = scmp.le.s32.totalorder 1, %s14
      %p159 = scmp.lt.s32.totalorder %s14, 3
      %p160 = pnand %p158, %p159
      %p161 = pneg %p160
      // Predicated region
      $region9: #{tpu_custom_call.1} parent=5 // pred_check
        _
      $region10: #{tpu_custom_call.1} parent=5 // pred_check_branch
        %163 = sbr.rel (%p160) target = $region12
      $region11: #{tpu_custom_call.1} parent=5 // pred_region
        %s164 = ssub.s32 %s14, 1
        // Predicated region
        $region13: #{tpu_custom_call.1} parent=11 // pred_check
          %p165 = pneg %p61
        $region14: #{tpu_custom_call.1} parent=11 // pred_check_branch
          %167 = sbr.rel (%p165) target = $region16
        $region15: #{tpu_custom_call.1} parent=11 // pred_region
          _
        $region16: #{tpu_custom_call.1} parent=11 // pred_fallthru
          _
        // Predicated region
        $region17: #{tpu_custom_call.1} parent=11 // pred_check
          %p168 = pneg %p82
        $region18: #{tpu_custom_call.1} parent=11 // pred_check_branch
          %170 = sbr.rel (%p168) target = $region20
        $region19: #{tpu_custom_call.1} parent=11 // pred_region
          _
        $region20: #{tpu_custom_call.1} parent=11 // pred_fallthru
          _
        // Predicated region
        $region21: #{tpu_custom_call.1} parent=11 // pred_check
          %p171 = pneg %p103
        $region22: #{tpu_custom_call.1} parent=11 // pred_check_branch
          %173 = sbr.rel (%p171) target = $region24
        $region23: #{tpu_custom_call.1} parent=11 // pred_region
          _
        $region24: #{tpu_custom_call.1} parent=11 // pred_fallthru
          _
        // Predicated region
        $region25: #{tpu_custom_call.1} parent=11 // pred_check
          %p174 = pneg %p124
        $region26: #{tpu_custom_call.1} parent=11 // pred_check_branch
          %176 = sbr.rel (%p174) target = $region28
        $region27: #{tpu_custom_call.1} parent=11 // pred_region
          _
        $region28: #{tpu_custom_call.1} parent=11 // pred_fallthru
          _
      $region12: #{tpu_custom_call.1} parent=5 // pred_fallthru
        _
      %p177 = scmp.lt.s32.totalorder %s14, 2
      // Predicated region
      $region29: #{tpu_custom_call.1} parent=5 // pred_check
        %p178 = pneg %p177
      $region30: #{tpu_custom_call.1} parent=5 // pred_check_branch
        %180 = sbr.rel (%p178) target = $region32
      $region31: #{tpu_custom_call.1} parent=5 // pred_region
        // Predicated region
        $region33: #{tpu_custom_call.1} parent=31 // pred_check
          %p181 = pneg %p34
        $region34: #{tpu_custom_call.1} parent=31 // pred_check_branch
          %183 = sbr.rel (%p181) target = $region36
        $region35: #{tpu_custom_call.1} parent=31 // pred_region
          %p184 = scmp.lt.s32.totalorder %s14, 1
          %s185 = scalar_select %p184, %s14, 1
          %s186 = smul.addr %s185, 32
          %s187 = smul.addr %s186, 8
          %s188 = scalar_lea.vmem %s0, %s187
        $region36: #{tpu_custom_call.1} parent=31 // pred_fallthru
          _
      $region32: #{tpu_custom_call.1} parent=5 // pred_fallthru
        _
      %p189 = scmp.le.s32.totalorder 1, %s14
      %p190 = scmp.lt.s32.totalorder %s14, 3
      %p191 = pnand %p189, %p190
      %p192 = pneg %p191
      // Predicated region
      $region37: #{tpu_custom_call.1} parent=5 // pred_check
        _
      $region38: #{tpu_custom_call.1} parent=5 // pred_check_branch
        %194 = sbr.rel (%p191) target = $region40
      $region39: #{tpu_custom_call.1} parent=5 // pred_region
        %s195 = ssub.s32 %s14, 1
        %p196 = scmp.lt.s32.totalorder %s19, 1
        %s197 = scalar_select %p196, %s19, 1
        %s198 = smul.addr %s197, 32
        %s199 = smul.addr %s198, 8
        %s200 = scalar_lea.vmem %s0, %s199
        %p201 = pneg %p40
        %p202 = pneg %p37
        %p203 = pneg %p61
        %p204 = pneg %p58
        %p205 = pneg %p82
        %p206 = pneg %p79
        %p207 = pneg %p103
        %p208 = pneg %p100
        %p209 = pneg %p124
        %p210 = pneg %p121
        %p211 = pneg %p150
        %p212 = pneg %p147
        %s213 = sand.u32 %s137, 1
        %s214 = scalar_lea.sflag [#allocation7], %s213
        %s215 = sand.u32 %s137, 1
        %s216 = smul.addr %s215, 16
        %s217 = scalar_lea.vmem [#allocation6], %s216
        %p218 = scmp.lt.s32.totalorder %s19, 1
        %s219 = scalar_select %p218, %s19, 1
        %s220 = smul.addr %s219, 32
        %s221 = smul.addr %s220, 8
        %s222 = scalar_lea.vmem %s0, %s221
        %vm223 = vcmask 31744
        %224 = vst.msk [vmem:[#allocation2] sm:$0xff] %vm223, 0.0
        %225 = vst.msk [vmem:[#allocation2 + $0x8] sm:$0xff] %vm223, 0.0
        %226 = vst.msk [vmem:[#allocation2 + $0x10] sm:$0xff] %vm223, 0.0
        %227 = vst.msk [vmem:[#allocation2 + $0x18] sm:$0xff] %vm223, 0.0
        %228 = vst.msk [vmem:[#allocation2 + $0x20] sm:$0xff] %vm223, 0.0
        %229 = vst.msk [vmem:[#allocation2 + $0x28] sm:$0xff] %vm223, 0.0
        %230 = vst.msk [vmem:[#allocation2 + $0x30] sm:$0xff] %vm223, 0.0
        %231 = vst.msk [vmem:[#allocation2 + $0x38] sm:$0xff] %vm223, 0.0
        %232 = vst.msk [vmem:[#allocation2 + $0x40] sm:$0xff] %vm223, 0.0
        %233 = vst.msk [vmem:[#allocation2 + $0x48] sm:$0xff] %vm223, 0.0
        %234 = vst.msk [vmem:[#allocation2 + $0x50] sm:$0xff] %vm223, 0.0
        %235 = vst.msk [vmem:[#allocation2 + $0x58] sm:$0xff] %vm223, 0.0
        %236 = vst.msk [vmem:[#allocation2 + $0x60] sm:$0xff] %vm223, 0.0
        %237 = vst.msk [vmem:[#allocation2 + $0x68] sm:$0xff] %vm223, 0.0
        %238 = vst.msk [vmem:[#allocation2 + $0x70] sm:$0xff] %vm223, 0.0
        %239 = vst.msk [vmem:[#allocation2 + $0x78] sm:$0xff] %vm223, 0.0
        %240 = vst.msk [vmem:[#allocation2 + $0x80] sm:$0xff] %vm223, 0.0
        %241 = vst.msk [vmem:[#allocation2 + $0x88] sm:$0xff] %vm223, 0.0
        %242 = vst.msk [vmem:[#allocation2 + $0x90] sm:$0xff] %vm223, 0.0
        %243 = vst.msk [vmem:[#allocation2 + $0x98] sm:$0xff] %vm223, 0.0
        %244 = vst.msk [vmem:[#allocation2 + $0xa0] sm:$0xff] %vm223, 0.0
        %245 = vst.msk [vmem:[#allocation2 + $0xa8] sm:$0xff] %vm223, 0.0
        %246 = vst.msk [vmem:[#allocation2 + $0xb0] sm:$0xff] %vm223, 0.0
        %247 = vst.msk [vmem:[#allocation2 + $0xb8] sm:$0xff] %vm223, 0.0
        %248 = vst.msk [vmem:[#allocation2 + $0xc0] sm:$0xff] %vm223, 0.0
        %249 = vst.msk [vmem:[#allocation2 + $0xc8] sm:$0xff] %vm223, 0.0
        %250 = vst.msk [vmem:[#allocation2 + $0xd0] sm:$0xff] %vm223, 0.0
        %251 = vst.msk [vmem:[#allocation2 + $0xd8] sm:$0xff] %vm223, 0.0
        %252 = vst.msk [vmem:[#allocation2 + $0xe0] sm:$0xff] %vm223, 0.0
        %253 = vst.msk [vmem:[#allocation2 + $0xe8] sm:$0xff] %vm223, 0.0
        %254 = vst.msk [vmem:[#allocation2 + $0xf0] sm:$0xff] %vm223, 0.0
        %255 = vst.msk [vmem:[#allocation2 + $0xf8] sm:$0xff] %vm223, 0.0
        %256 = vst.msk [vmem:[#allocation2 + $0x100] sm:$0xff] %vm223, 0.0
        %257 = vst.msk [vmem:[#allocation2 + $0x108] sm:$0xff] %vm223, 0.0
        %258 = vst.msk [vmem:[#allocation2 + $0x110] sm:$0xff] %vm223, 0.0
        %259 = vst.msk [vmem:[#allocation2 + $0x118] sm:$0xff] %vm223, 0.0
        %260 = vst.msk [vmem:[#allocation2 + $0x120] sm:$0xff] %vm223, 0.0
        %261 = vst.msk [vmem:[#allocation2 + $0x128] sm:$0xff] %vm223, 0.0
        %262 = vst.msk [vmem:[#allocation2 + $0x130] sm:$0xff] %vm223, 0.0
        %263 = vst.msk [vmem:[#allocation2 + $0x138] sm:$0xff] %vm223, 0.0
        %264 = vst.msk [vmem:[#allocation2 + $0x140] sm:$0xff] %vm223, 0.0
        %265 = vst.msk [vmem:[#allocation2 + $0x148] sm:$0xff] %vm223, 0.0
        %266 = vst.msk [vmem:[#allocation2 + $0x150] sm:$0xff] %vm223, 0.0
        %267 = vst.msk [vmem:[#allocation2 + $0x158] sm:$0xff] %vm223, 0.0
        %268 = vst.msk [vmem:[#allocation2 + $0x160] sm:$0xff] %vm223, 0.0
        %269 = vst.msk [vmem:[#allocation2 + $0x168] sm:$0xff] %vm223, 0.0
        %270 = vst.msk [vmem:[#allocation2 + $0x170] sm:$0xff] %vm223, 0.0
        %271 = vst.msk [vmem:[#allocation2 + $0x178] sm:$0xff] %vm223, 0.0
        %272 = vst.msk [vmem:[#allocation2 + $0x180] sm:$0xff] %vm223, 0.0
        %273 = vst.msk [vmem:[#allocation2 + $0x188] sm:$0xff] %vm223, 0.0
        %274 = vst.msk [vmem:[#allocation2 + $0x190] sm:$0xff] %vm223, 0.0
        %275 = vst.msk [vmem:[#allocation2 + $0x198] sm:$0xff] %vm223, 0.0
        %276 = vst.msk [vmem:[#allocation2 + $0x1a0] sm:$0xff] %vm223, 0.0
        %277 = vst.msk [vmem:[#allocation2 + $0x1a8] sm:$0xff] %vm223, 0.0
        %278 = vst.msk [vmem:[#allocation2 + $0x1b0] sm:$0xff] %vm223, 0.0
        %279 = vst.msk [vmem:[#allocation2 + $0x1b8] sm:$0xff] %vm223, 0.0
        %280 = vst.msk [vmem:[#allocation2 + $0x1c0] sm:$0xff] %vm223, 0.0
        %281 = vst.msk [vmem:[#allocation2 + $0x1c8] sm:$0xff] %vm223, 0.0
        %282 = vst.msk [vmem:[#allocation2 + $0x1d0] sm:$0xff] %vm223, 0.0
        %283 = vst.msk [vmem:[#allocation2 + $0x1d8] sm:$0xff] %vm223, 0.0
        %284 = vst.msk [vmem:[#allocation2 + $0x1e0] sm:$0xff] %vm223, 0.0
        %285 = vst.msk [vmem:[#allocation2 + $0x1e8] sm:$0xff] %vm223, 0.0
        %286 = vst.msk [vmem:[#allocation2 + $0x1f0] sm:$0xff] %vm223, 0.0
        %287 = vst.msk [vmem:[#allocation2 + $0x1f8] sm:$0xff] %vm223, 0.0
        %288 = vst.msk [vmem:[#allocation2 + $0x200] sm:$0xff] %vm223, 0.0
        %289 = vst.msk [vmem:[#allocation2 + $0x208] sm:$0xff] %vm223, 0.0
        %290 = vst.msk [vmem:[#allocation2 + $0x210] sm:$0xff] %vm223, 0.0
        %291 = vst.msk [vmem:[#allocation2 + $0x218] sm:$0xff] %vm223, 0.0
        %292 = vst.msk [vmem:[#allocation2 + $0x220] sm:$0xff] %vm223, 0.0
        %293 = vst.msk [vmem:[#allocation2 + $0x228] sm:$0xff] %vm223, 0.0
        %294 = vst.msk [vmem:[#allocation2 + $0x230] sm:$0xff] %vm223, 0.0
        %295 = vst.msk [vmem:[#allocation2 + $0x238] sm:$0xff] %vm223, 0.0
        %v296 = vld [vmem:[%s222] sm:$0xff]
        %v297 = vld [vmem:[%s222 + $0x8] sm:$0xff]
        %v298 = vld [vmem:[%s222 + $0x10] sm:$0xff]
        %v299 = vld [vmem:[%s222 + $0x18] sm:$0xff]
        %v300 = vld [vmem:[%s222 + $0x20] sm:$0xff]
        %v301 = vld [vmem:[%s222 + $0x28] sm:$0xff]
        %v302 = vld [vmem:[%s222 + $0x30] sm:$0xff]
        %v303 = vld [vmem:[%s222 + $0x38] sm:$0xff]
        %v304 = vld [vmem:[%s222 + $0x40] sm:$0xff]
        %v305 = vld [vmem:[%s222 + $0x48] sm:$0xff]
        %v306 = vld [vmem:[%s222 + $0x50] sm:$0xff]
        %v307 = vld [vmem:[%s222 + $0x58] sm:$0xff]
        %v308 = vld [vmem:[%s222 + $0x60] sm:$0xff]
        %v309 = vld [vmem:[%s222 + $0x68] sm:$0xff]
        %v310 = vld [vmem:[%s222 + $0x70] sm:$0xff]
        %v311 = vld [vmem:[%s222 + $0x78] sm:$0xff]
        %v312 = vld [vmem:[%s222 + $0x80] sm:$0xff]
        %v313 = vld [vmem:[%s222 + $0x88] sm:$0xff]
        %v314 = vld [vmem:[%s222 + $0x90] sm:$0xff]
        %v315 = vld [vmem:[%s222 + $0x98] sm:$0xff]
        %v316 = vld [vmem:[%s222 + $0xa0] sm:$0xff]
        %v317 = vld [vmem:[%s222 + $0xa8] sm:$0xff]
        %v318 = vld [vmem:[%s222 + $0xb0] sm:$0xff]
        %v319 = vld [vmem:[%s222 + $0xb8] sm:$0xff]
        %v320 = vld [vmem:[%s222 + $0xc0] sm:$0xff]
        %v321 = vld [vmem:[%s222 + $0xc8] sm:$0xff]
        %v322 = vld [vmem:[%s222 + $0xd0] sm:$0xff]
        %v323 = vld [vmem:[%s222 + $0xd8] sm:$0xff]
        %v324 = vld [vmem:[%s222 + $0xe0] sm:$0xff]
        %v325 = vld [vmem:[%s222 + $0xe8] sm:$0xff]
        %v326 = vld [vmem:[%s222 + $0xf0] sm:$0xff]
        %v327 = vld [vmem:[%s222 + $0xf8] sm:$0xff]
        %s328 = scalar_lea.vmem [#allocation2], 32
        %329 = vst.msk [vmem:[%s328 + $0x8] sm:$0xff] %vm223, %v296
        %330 = vst.msk [vmem:[%s328 + $0x10] sm:$0xff] %vm223, %v297
        %331 = vst.msk [vmem:[%s328 + $0x28] sm:$0xff] %vm223, %v298
        %332 = vst.msk [vmem:[%s328 + $0x30] sm:$0xff] %vm223, %v299
        %333 = vst.msk [vmem:[%s328 + $0x48] sm:$0xff] %vm223, %v300
        %334 = vst.msk [vmem:[%s328 + $0x50] sm:$0xff] %vm223, %v301
        %335 = vst.msk [vmem:[%s328 + $0x68] sm:$0xff] %vm223, %v302
        %336 = vst.msk [vmem:[%s328 + $0x70] sm:$0xff] %vm223, %v303
        %337 = vst.msk [vmem:[%s328 + $0x88] sm:$0xff] %vm223, %v304
        %338 = vst.msk [vmem:[%s328 + $0x90] sm:$0xff] %vm223, %v305
        %339 = vst.msk [vmem:[%s328 + $0xa8] sm:$0xff] %vm223, %v306
        %340 = vst.msk [vmem:[%s328 + $0xb0] sm:$0xff] %vm223, %v307
        %341 = vst.msk [vmem:[%s328 + $0xc8] sm:$0xff] %vm223, %v308
        %342 = vst.msk [vmem:[%s328 + $0xd0] sm:$0xff] %vm223, %v309
        %343 = vst.msk [vmem:[%s328 + $0xe8] sm:$0xff] %vm223, %v310
        %344 = vst.msk [vmem:[%s328 + $0xf0] sm:$0xff] %vm223, %v311
        %345 = vst.msk [vmem:[%s328 + $0x108] sm:$0xff] %vm223, %v312
        %346 = vst.msk [vmem:[%s328 + $0x110] sm:$0xff] %vm223, %v313
        %347 = vst.msk [vmem:[%s328 + $0x128] sm:$0xff] %vm223, %v314
        %348 = vst.msk [vmem:[%s328 + $0x130] sm:$0xff] %vm223, %v315
        %349 = vst.msk [vmem:[%s328 + $0x148] sm:$0xff] %vm223, %v316
        %350 = vst.msk [vmem:[%s328 + $0x150] sm:$0xff] %vm223, %v317
        %351 = vst.msk [vmem:[%s328 + $0x168] sm:$0xff] %vm223, %v318
        %352 = vst.msk [vmem:[%s328 + $0x170] sm:$0xff] %vm223, %v319
        %353 = vst.msk [vmem:[%s328 + $0x188] sm:$0xff] %vm223, %v320
        %354 = vst.msk [vmem:[%s328 + $0x190] sm:$0xff] %vm223, %v321
        %355 = vst.msk [vmem:[%s328 + $0x1a8] sm:$0xff] %vm223, %v322
        %356 = vst.msk [vmem:[%s328 + $0x1b0] sm:$0xff] %vm223, %v323
        %357 = vst.msk [vmem:[%s328 + $0x1c8] sm:$0xff] %vm223, %v324
        %358 = vst.msk [vmem:[%s328 + $0x1d0] sm:$0xff] %vm223, %v325
        %359 = vst.msk [vmem:[%s328 + $0x1e8] sm:$0xff] %vm223, %v326
        %360 = vst.msk [vmem:[%s328 + $0x1f0] sm:$0xff] %vm223, %v327
        %v361 = vld [vmem:[#allocation2 + $0x7] sm:$0xff]
        %v362 = vld [vmem:[#allocation2 + $0xf] sm:$0xff]
        %v363 = vld [vmem:[#allocation2 + $0x27] sm:$0xff]
        %v364 = vld [vmem:[#allocation2 + $0x2f] sm:$0xff]
        %v365 = vld [vmem:[#allocation2 + $0x47] sm:$0xff]
        %v366 = vld [vmem:[#allocation2 + $0x4f] sm:$0xff]
        %v367 = vld [vmem:[#allocation2 + $0x67] sm:$0xff]
        %v368 = vld [vmem:[#allocation2 + $0x6f] sm:$0xff]
        %v369 = vld [vmem:[#allocation2 + $0x87] sm:$0xff]
        %v370 = vld [vmem:[#allocation2 + $0x8f] sm:$0xff]
        %v371 = vld [vmem:[#allocation2 + $0xa7] sm:$0xff]
        %v372 = vld [vmem:[#allocation2 + $0xaf] sm:$0xff]
        %v373 = vld [vmem:[#allocation2 + $0xc7] sm:$0xff]
        %v374 = vld [vmem:[#allocation2 + $0xcf] sm:$0xff]
        %v375 = vld [vmem:[#allocation2 + $0xe7] sm:$0xff]
        %v376 = vld [vmem:[#allocation2 + $0xef] sm:$0xff]
        %v377 = vld [vmem:[#allocation2 + $0x107] sm:$0xff]
        %v378 = vld [vmem:[#allocation2 + $0x10f] sm:$0xff]
        %v379 = vld [vmem:[#allocation2 + $0x127] sm:$0xff]
        %v380 = vld [vmem:[#allocation2 + $0x12f] sm:$0xff]
        %v381 = vld [vmem:[#allocation2 + $0x147] sm:$0xff]
        %v382 = vld [vmem:[#allocation2 + $0x14f] sm:$0xff]
        %v383 = vld [vmem:[#allocation2 + $0x167] sm:$0xff]
        %v384 = vld [vmem:[#allocation2 + $0x16f] sm:$0xff]
        %v385 = vld [vmem:[#allocation2 + $0x187] sm:$0xff]
        %v386 = vld [vmem:[#allocation2 + $0x18f] sm:$0xff]
        %v387 = vld [vmem:[#allocation2 + $0x1a7] sm:$0xff]
        %v388 = vld [vmem:[#allocation2 + $0x1af] sm:$0xff]
        %v389 = vld [vmem:[#allocation2 + $0x1c7] sm:$0xff]
        %v390 = vld [vmem:[#allocation2 + $0x1cf] sm:$0xff]
        %v391 = vld [vmem:[#allocation2 + $0x1e7] sm:$0xff]
        %v392 = vld [vmem:[#allocation2 + $0x1ef] sm:$0xff]
        %393 = vst.msk [vmem:[#allocation3] sm:$0xff] %vm223, %v361
        %394 = vst.msk [vmem:[#allocation3 + $0x8] sm:$0xff] %vm223, %v362
        %395 = vst.msk [vmem:[#allocation3 + $0x10] sm:$0xff] %vm223, %v363
        %396 = vst.msk [vmem:[#allocation3 + $0x18] sm:$0xff] %vm223, %v364
        %397 = vst.msk [vmem:[#allocation3 + $0x20] sm:$0xff] %vm223, %v365
        %398 = vst.msk [vmem:[#allocation3 + $0x28] sm:$0xff] %vm223, %v366
        %399 = vst.msk [vmem:[#allocation3 + $0x30] sm:$0xff] %vm223, %v367
        %400 = vst.msk [vmem:[#allocation3 + $0x38] sm:$0xff] %vm223, %v368
        %401 = vst.msk [vmem:[#allocation3 + $0x40] sm:$0xff] %vm223, %v369
        %402 = vst.msk [vmem:[#allocation3 + $0x48] sm:$0xff] %vm223, %v370
        %403 = vst.msk [vmem:[#allocation3 + $0x50] sm:$0xff] %vm223, %v371
        %404 = vst.msk [vmem:[#allocation3 + $0x58] sm:$0xff] %vm223, %v372
        %405 = vst.msk [vmem:[#allocation3 + $0x60] sm:$0xff] %vm223, %v373
        %406 = vst.msk [vmem:[#allocation3 + $0x68] sm:$0xff] %vm223, %v374
        %407 = vst.msk [vmem:[#allocation3 + $0x70] sm:$0xff] %vm223, %v375
        %408 = vst.msk [vmem:[#allocation3 + $0x78] sm:$0xff] %vm223, %v376
        %409 = vst.msk [vmem:[#allocation3 + $0x80] sm:$0xff] %vm223, %v377
        %410 = vst.msk [vmem:[#allocation3 + $0x88] sm:$0xff] %vm223, %v378
        %411 = vst.msk [vmem:[#allocation3 + $0x90] sm:$0xff] %vm223, %v379
        %412 = vst.msk [vmem:[#allocation3 + $0x98] sm:$0xff] %vm223, %v380
        %413 = vst.msk [vmem:[#allocation3 + $0xa0] sm:$0xff] %vm223, %v381
        %414 = vst.msk [vmem:[#allocation3 + $0xa8] sm:$0xff] %vm223, %v382
        %415 = vst.msk [vmem:[#allocation3 + $0xb0] sm:$0xff] %vm223, %v383
        %416 = vst.msk [vmem:[#allocation3 + $0xb8] sm:$0xff] %vm223, %v384
        %417 = vst.msk [vmem:[#allocation3 + $0xc0] sm:$0xff] %vm223, %v385
        %418 = vst.msk [vmem:[#allocation3 + $0xc8] sm:$0xff] %vm223, %v386
        %419 = vst.msk [vmem:[#allocation3 + $0xd0] sm:$0xff] %vm223, %v387
        %420 = vst.msk [vmem:[#allocation3 + $0xd8] sm:$0xff] %vm223, %v388
        %421 = vst.msk [vmem:[#allocation3 + $0xe0] sm:$0xff] %vm223, %v389
        %422 = vst.msk [vmem:[#allocation3 + $0xe8] sm:$0xff] %vm223, %v390
        %423 = vst.msk [vmem:[#allocation3 + $0xf0] sm:$0xff] %vm223, %v391
        %424 = vst.msk [vmem:[#allocation3 + $0xf8] sm:$0xff] %vm223, %v392
        %v425 = vld [vmem:[#allocation2 + $0x8] sm:$0xff]
        %v426 = vld [vmem:[#allocation2 + $0x10] sm:$0xff]
        %v427 = vld [vmem:[#allocation2 + $0x28] sm:$0xff]
        %v428 = vld [vmem:[#allocation2 + $0x30] sm:$0xff]
        %v429 = vld [vmem:[#allocation2 + $0x48] sm:$0xff]
        %v430 = vld [vmem:[#allocation2 + $0x50] sm:$0xff]
        %v431 = vld [vmem:[#allocation2 + $0x68] sm:$0xff]
        %v432 = vld [vmem:[#allocation2 + $0x70] sm:$0xff]
        %v433 = vld [vmem:[#allocation2 + $0x88] sm:$0xff]
        %v434 = vld [vmem:[#allocation2 + $0x90] sm:$0xff]
        %v435 = vld [vmem:[#allocation2 + $0xa8] sm:$0xff]
        %v436 = vld [vmem:[#allocation2 + $0xb0] sm:$0xff]
        %v437 = vld [vmem:[#allocation2 + $0xc8] sm:$0xff]
        %v438 = vld [vmem:[#allocation2 + $0xd0] sm:$0xff]
        %v439 = vld [vmem:[#allocation2 + $0xe8] sm:$0xff]
        %v440 = vld [vmem:[#allocation2 + $0xf0] sm:$0xff]
        %v441 = vld [vmem:[#allocation2 + $0x108] sm:$0xff]
        %v442 = vld [vmem:[#allocation2 + $0x110] sm:$0xff]
        %v443 = vld [vmem:[#allocation2 + $0x128] sm:$0xff]
        %v444 = vld [vmem:[#allocation2 + $0x130] sm:$0xff]
        %v445 = vld [vmem:[#allocation2 + $0x148] sm:$0xff]
        %v446 = vld [vmem:[#allocation2 + $0x150] sm:$0xff]
        %v447 = vld [vmem:[#allocation2 + $0x168] sm:$0xff]
        %v448 = vld [vmem:[#allocation2 + $0x170] sm:$0xff]
        %v449 = vld [vmem:[#allocation2 + $0x188] sm:$0xff]
        %v450 = vld [vmem:[#allocation2 + $0x190] sm:$0xff]
        %v451 = vld [vmem:[#allocation2 + $0x1a8] sm:$0xff]
        %v452 = vld [vmem:[#allocation2 + $0x1b0] sm:$0xff]
        %v453 = vld [vmem:[#allocation2 + $0x1c8] sm:$0xff]
        %v454 = vld [vmem:[#allocation2 + $0x1d0] sm:$0xff]
        %v455 = vld [vmem:[#allocation2 + $0x1e8] sm:$0xff]
        %v456 = vld [vmem:[#allocation2 + $0x1f0] sm:$0xff]
        %489 = vrot.lane.b32.xlu0 %v425, 4
        %v490 = vpop.permute.xlu0 %489
        %491 = vrot.lane.b32.xlu0 %v426, 4
        %v492 = vpop.permute.xlu0 %491
        %493 = vrot.lane.b32.xlu0 %v427, 4
        %v494 = vpop.permute.xlu0 %493
        %495 = vrot.lane.b32.xlu0 %v428, 4
        %v496 = vpop.permute.xlu0 %495
        %497 = vrot.lane.b32.xlu0 %v429, 4
        %v498 = vpop.permute.xlu0 %497
        %499 = vrot.lane.b32.xlu0 %v430, 4
        %v500 = vpop.permute.xlu0 %499
        %501 = vrot.lane.b32.xlu0 %v431, 4
        %v502 = vpop.permute.xlu0 %501
        %503 = vrot.lane.b32.xlu0 %v432, 4
        %v504 = vpop.permute.xlu0 %503
        %505 = vrot.lane.b32.xlu0 %v433, 4
        %v506 = vpop.permute.xlu0 %505
        %507 = vrot.lane.b32.xlu0 %v434, 4
        %v508 = vpop.permute.xlu0 %507
        %509 = vrot.lane.b32.xlu0 %v435, 4
        %v510 = vpop.permute.xlu0 %509
        %511 = vrot.lane.b32.xlu0 %v436, 4
        %v512 = vpop.permute.xlu0 %511
        %513 = vrot.lane.b32.xlu0 %v437, 4
        %v514 = vpop.permute.xlu0 %513
        %515 = vrot.lane.b32.xlu0 %v438, 4
        %v516 = vpop.permute.xlu0 %515
        %517 = vrot.lane.b32.xlu0 %v439, 4
        %v518 = vpop.permute.xlu0 %517
        %519 = vrot.lane.b32.xlu0 %v440, 4
        %v520 = vpop.permute.xlu0 %519
        %521 = vrot.lane.b32.xlu0 %v441, 4
        %v522 = vpop.permute.xlu0 %521
        %523 = vrot.lane.b32.xlu0 %v442, 4
        %v524 = vpop.permute.xlu0 %523
        %525 = vrot.lane.b32.xlu0 %v443, 4
        %v526 = vpop.permute.xlu0 %525
        %527 = vrot.lane.b32.xlu0 %v444, 4
        %v528 = vpop.permute.xlu0 %527
        %529 = vrot.lane.b32.xlu0 %v445, 4
        %v530 = vpop.permute.xlu0 %529
        %531 = vrot.lane.b32.xlu0 %v446, 4
        %v532 = vpop.permute.xlu0 %531
        %533 = vrot.lane.b32.xlu0 %v447, 4
        %v534 = vpop.permute.xlu0 %533
        %535 = vrot.lane.b32.xlu0 %v448, 4
        %v536 = vpop.permute.xlu0 %535
        %537 = vrot.lane.b32.xlu0 %v449, 4
        %v538 = vpop.permute.xlu0 %537
        %539 = vrot.lane.b32.xlu0 %v450, 4
        %v540 = vpop.permute.xlu0 %539
        %541 = vrot.lane.b32.xlu0 %v451, 4
        %v542 = vpop.permute.xlu0 %541
        %543 = vrot.lane.b32.xlu0 %v452, 4
        %v544 = vpop.permute.xlu0 %543
        %545 = vrot.lane.b32.xlu0 %v453, 4
        %v546 = vpop.permute.xlu0 %545
        %547 = vrot.lane.b32.xlu0 %v454, 4
        %v548 = vpop.permute.xlu0 %547
        %549 = vrot.lane.b32.xlu0 %v455, 4
        %v550 = vpop.permute.xlu0 %549
        %551 = vrot.lane.b32.xlu0 %v456, 4
        %v552 = vpop.permute.xlu0 %551
        %vm585 = vcmask 64544
        %586 = vst.msk [vmem:[#allocation3] sm:$0xff] %vm585, %v490
        %587 = vst.msk [vmem:[#allocation3 + $0x8] sm:$0xff] %vm585, %v492
        %588 = vst.msk [vmem:[#allocation3 + $0x10] sm:$0xff] %vm585, %v494
        %589 = vst.msk [vmem:[#allocation3 + $0x18] sm:$0xff] %vm585, %v496
        %590 = vst.msk [vmem:[#allocation3 + $0x20] sm:$0xff] %vm585, %v498
        %591 = vst.msk [vmem:[#allocation3 + $0x28] sm:$0xff] %vm585, %v500
        %592 = vst.msk [vmem:[#allocation3 + $0x30] sm:$0xff] %vm585, %v502
        %593 = vst.msk [vmem:[#allocation3 + $0x38] sm:$0xff] %vm585, %v504
        %594 = vst.msk [vmem:[#allocation3 + $0x40] sm:$0xff] %vm585, %v506
        %595 = vst.msk [vmem:[#allocation3 + $0x48] sm:$0xff] %vm585, %v508
        %596 = vst.msk [vmem:[#allocation3 + $0x50] sm:$0xff] %vm585, %v510
        %597 = vst.msk [vmem:[#allocation3 + $0x58] sm:$0xff] %vm585, %v512
        %598 = vst.msk [vmem:[#allocation3 + $0x60] sm:$0xff] %vm585, %v514
        %599 = vst.msk [vmem:[#allocation3 + $0x68] sm:$0xff] %vm585, %v516
        %600 = vst.msk [vmem:[#allocation3 + $0x70] sm:$0xff] %vm585, %v518
        %601 = vst.msk [vmem:[#allocation3 + $0x78] sm:$0xff] %vm585, %v520
        %602 = vst.msk [vmem:[#allocation3 + $0x80] sm:$0xff] %vm585, %v522
        %603 = vst.msk [vmem:[#allocation3 + $0x88] sm:$0xff] %vm585, %v524
        %604 = vst.msk [vmem:[#allocation3 + $0x90] sm:$0xff] %vm585, %v526
        %605 = vst.msk [vmem:[#allocation3 + $0x98] sm:$0xff] %vm585, %v528
        %606 = vst.msk [vmem:[#allocation3 + $0xa0] sm:$0xff] %vm585, %v530
        %607 = vst.msk [vmem:[#allocation3 + $0xa8] sm:$0xff] %vm585, %v532
        %608 = vst.msk [vmem:[#allocation3 + $0xb0] sm:$0xff] %vm585, %v534
        %609 = vst.msk [vmem:[#allocation3 + $0xb8] sm:$0xff] %vm585, %v536
        %610 = vst.msk [vmem:[#allocation3 + $0xc0] sm:$0xff] %vm585, %v538
        %611 = vst.msk [vmem:[#allocation3 + $0xc8] sm:$0xff] %vm585, %v540
        %612 = vst.msk [vmem:[#allocation3 + $0xd0] sm:$0xff] %vm585, %v542
        %613 = vst.msk [vmem:[#allocation3 + $0xd8] sm:$0xff] %vm585, %v544
        %614 = vst.msk [vmem:[#allocation3 + $0xe0] sm:$0xff] %vm585, %v546
        %615 = vst.msk [vmem:[#allocation3 + $0xe8] sm:$0xff] %vm585, %v548
        %616 = vst.msk [vmem:[#allocation3 + $0xf0] sm:$0xff] %vm585, %v550
        %617 = vst.msk [vmem:[#allocation3 + $0xf8] sm:$0xff] %vm585, %v552
        %v618 = vld [vmem:[#allocation2 + $0x9] sm:$0xff]
        %v619 = vld [vmem:[#allocation2 + $0x11] sm:$0xff]
        %v620 = vld [vmem:[#allocation2 + $0x29] sm:$0xff]
        %v621 = vld [vmem:[#allocation2 + $0x31] sm:$0xff]
        %v622 = vld [vmem:[#allocation2 + $0x49] sm:$0xff]
        %v623 = vld [vmem:[#allocation2 + $0x51] sm:$0xff]
        %v624 = vld [vmem:[#allocation2 + $0x69] sm:$0xff]
        %v625 = vld [vmem:[#allocation2 + $0x71] sm:$0xff]
        %v626 = vld [vmem:[#allocation2 + $0x89] sm:$0xff]
        %v627 = vld [vmem:[#allocation2 + $0x91] sm:$0xff]
        %v628 = vld [vmem:[#allocation2 + $0xa9] sm:$0xff]
        %v629 = vld [vmem:[#allocation2 + $0xb1] sm:$0xff]
        %v630 = vld [vmem:[#allocation2 + $0xc9] sm:$0xff]
        %v631 = vld [vmem:[#allocation2 + $0xd1] sm:$0xff]
        %v632 = vld [vmem:[#allocation2 + $0xe9] sm:$0xff]
        %v633 = vld [vmem:[#allocation2 + $0xf1] sm:$0xff]
        %v634 = vld [vmem:[#allocation2 + $0x109] sm:$0xff]
        %v635 = vld [vmem:[#allocation2 + $0x111] sm:$0xff]
        %v636 = vld [vmem:[#allocation2 + $0x129] sm:$0xff]
        %v637 = vld [vmem:[#allocation2 + $0x131] sm:$0xff]
        %v638 = vld [vmem:[#allocation2 + $0x149] sm:$0xff]
        %v639 = vld [vmem:[#allocation2 + $0x151] sm:$0xff]
        %v640 = vld [vmem:[#allocation2 + $0x169] sm:$0xff]
        %v641 = vld [vmem:[#allocation2 + $0x171] sm:$0xff]
        %v642 = vld [vmem:[#allocation2 + $0x189] sm:$0xff]
        %v643 = vld [vmem:[#allocation2 + $0x191] sm:$0xff]
        %v644 = vld [vmem:[#allocation2 + $0x1a9] sm:$0xff]
        %v645 = vld [vmem:[#allocation2 + $0x1b1] sm:$0xff]
        %v646 = vld [vmem:[#allocation2 + $0x1c9] sm:$0xff]
        %v647 = vld [vmem:[#allocation2 + $0x1d1] sm:$0xff]
        %v648 = vld [vmem:[#allocation2 + $0x1e9] sm:$0xff]
        %v649 = vld [vmem:[#allocation2 + $0x1f1] sm:$0xff]
        %682 = vrot.lane.b32.xlu0 %v618, 8
        %v683 = vpop.permute.xlu0 %682
        %684 = vrot.lane.b32.xlu0 %v619, 8
        %v685 = vpop.permute.xlu0 %684
        %686 = vrot.lane.b32.xlu0 %v620, 8
        %v687 = vpop.permute.xlu0 %686
        %688 = vrot.lane.b32.xlu0 %v621, 8
        %v689 = vpop.permute.xlu0 %688
        %690 = vrot.lane.b32.xlu0 %v622, 8
        %v691 = vpop.permute.xlu0 %690
        %692 = vrot.lane.b32.xlu0 %v623, 8
        %v693 = vpop.permute.xlu0 %692
        %694 = vrot.lane.b32.xlu0 %v624, 8
        %v695 = vpop.permute.xlu0 %694
        %696 = vrot.lane.b32.xlu0 %v625, 8
        %v697 = vpop.permute.xlu0 %696
        %698 = vrot.lane.b32.xlu0 %v626, 8
        %v699 = vpop.permute.xlu0 %698
        %700 = vrot.lane.b32.xlu0 %v627, 8
        %v701 = vpop.permute.xlu0 %700
        %702 = vrot.lane.b32.xlu0 %v628, 8
        %v703 = vpop.permute.xlu0 %702
        %704 = vrot.lane.b32.xlu0 %v629, 8
        %v705 = vpop.permute.xlu0 %704
        %706 = vrot.lane.b32.xlu0 %v630, 8
        %v707 = vpop.permute.xlu0 %706
        %708 = vrot.lane.b32.xlu0 %v631, 8
        %v709 = vpop.permute.xlu0 %708
        %710 = vrot.lane.b32.xlu0 %v632, 8
        %v711 = vpop.permute.xlu0 %710
        %712 = vrot.lane.b32.xlu0 %v633, 8
        %v713 = vpop.permute.xlu0 %712
        %714 = vrot.lane.b32.xlu0 %v634, 8
        %v715 = vpop.permute.xlu0 %714
        %716 = vrot.lane.b32.xlu0 %v635, 8
        %v717 = vpop.permute.xlu0 %716
        %718 = vrot.lane.b32.xlu0 %v636, 8
        %v719 = vpop.permute.xlu0 %718
        %720 = vrot.lane.b32.xlu0 %v637, 8
        %v721 = vpop.permute.xlu0 %720
        %722 = vrot.lane.b32.xlu0 %v638, 8
        %v723 = vpop.permute.xlu0 %722
        %724 = vrot.lane.b32.xlu0 %v639, 8
        %v725 = vpop.permute.xlu0 %724
        %726 = vrot.lane.b32.xlu0 %v640, 8
        %v727 = vpop.permute.xlu0 %726
        %728 = vrot.lane.b32.xlu0 %v641, 8
        %v729 = vpop.permute.xlu0 %728
        %730 = vrot.lane.b32.xlu0 %v642, 8
        %v731 = vpop.permute.xlu0 %730
        %732 = vrot.lane.b32.xlu0 %v643, 8
        %v733 = vpop.permute.xlu0 %732
        %734 = vrot.lane.b32.xlu0 %v644, 8
        %v735 = vpop.permute.xlu0 %734
        %736 = vrot.lane.b32.xlu0 %v645, 8
        %v737 = vpop.permute.xlu0 %736
        %738 = vrot.lane.b32.xlu0 %v646, 8
        %v739 = vpop.permute.xlu0 %738
        %740 = vrot.lane.b32.xlu0 %v647, 8
        %v741 = vpop.permute.xlu0 %740
        %742 = vrot.lane.b32.xlu0 %v648, 8
        %v743 = vpop.permute.xlu0 %742
        %744 = vrot.lane.b32.xlu0 %v649, 8
        %v745 = vpop.permute.xlu0 %744
        %vm778 = vcmask 97344
        %779 = vst.msk [vmem:[#allocation3] sm:$0xff] %vm778, %v683
        %780 = vst.msk [vmem:[#allocation3 + $0x8] sm:$0xff] %vm778, %v685
        %781 = vst.msk [vmem:[#allocation3 + $0x10] sm:$0xff] %vm778, %v687
        %782 = vst.msk [vmem:[#allocation3 + $0x18] sm:$0xff] %vm778, %v689
        %783 = vst.msk [vmem:[#allocation3 + $0x20] sm:$0xff] %vm778, %v691
        %784 = vst.msk [vmem:[#allocation3 + $0x28] sm:$0xff] %vm778, %v693
        %785 = vst.msk [vmem:[#allocation3 + $0x30] sm:$0xff] %vm778, %v695
        %786 = vst.msk [vmem:[#allocation3 + $0x38] sm:$0xff] %vm778, %v697
        %787 = vst.msk [vmem:[#allocation3 + $0x40] sm:$0xff] %vm778, %v699
        %788 = vst.msk [vmem:[#allocation3 + $0x48] sm:$0xff] %vm778, %v701
        %789 = vst.msk [vmem:[#allocation3 + $0x50] sm:$0xff] %vm778, %v703
        %790 = vst.msk [vmem:[#allocation3 + $0x58] sm:$0xff] %vm778, %v705
        %791 = vst.msk [vmem:[#allocation3 + $0x60] sm:$0xff] %vm778, %v707
        %792 = vst.msk [vmem:[#allocation3 + $0x68] sm:$0xff] %vm778, %v709
        %793 = vst.msk [vmem:[#allocation3 + $0x70] sm:$0xff] %vm778, %v711
        %794 = vst.msk [vmem:[#allocation3 + $0x78] sm:$0xff] %vm778, %v713
        %795 = vst.msk [vmem:[#allocation3 + $0x80] sm:$0xff] %vm778, %v715
        %796 = vst.msk [vmem:[#allocation3 + $0x88] sm:$0xff] %vm778, %v717
        %797 = vst.msk [vmem:[#allocation3 + $0x90] sm:$0xff] %vm778, %v719
        %798 = vst.msk [vmem:[#allocation3 + $0x98] sm:$0xff] %vm778, %v721
        %799 = vst.msk [vmem:[#allocation3 + $0xa0] sm:$0xff] %vm778, %v723
        %800 = vst.msk [vmem:[#allocation3 + $0xa8] sm:$0xff] %vm778, %v725
        %801 = vst.msk [vmem:[#allocation3 + $0xb0] sm:$0xff] %vm778, %v727
        %802 = vst.msk [vmem:[#allocation3 + $0xb8] sm:$0xff] %vm778, %v729
        %803 = vst.msk [vmem:[#allocation3 + $0xc0] sm:$0xff] %vm778, %v731
        %804 = vst.msk [vmem:[#allocation3 + $0xc8] sm:$0xff] %vm778, %v733
        %805 = vst.msk [vmem:[#allocation3 + $0xd0] sm:$0xff] %vm778, %v735
        %806 = vst.msk [vmem:[#allocation3 + $0xd8] sm:$0xff] %vm778, %v737
        %807 = vst.msk [vmem:[#allocation3 + $0xe0] sm:$0xff] %vm778, %v739
        %808 = vst.msk [vmem:[#allocation3 + $0xe8] sm:$0xff] %vm778, %v741
        %809 = vst.msk [vmem:[#allocation3 + $0xf0] sm:$0xff] %vm778, %v743
        %810 = vst.msk [vmem:[#allocation3 + $0xf8] sm:$0xff] %vm778, %v745
        %v811 = vld [vmem:[%s328 + $0x7] sm:$0xff]
        %v812 = vld [vmem:[%s328 + $0xf] sm:$0xff]
        %v813 = vld [vmem:[%s328 + $0x27] sm:$0xff]
        %v814 = vld [vmem:[%s328 + $0x2f] sm:$0xff]
        %v815 = vld [vmem:[%s328 + $0x47] sm:$0xff]
        %v816 = vld [vmem:[%s328 + $0x4f] sm:$0xff]
        %v817 = vld [vmem:[%s328 + $0x67] sm:$0xff]
        %v818 = vld [vmem:[%s328 + $0x6f] sm:$0xff]
        %v819 = vld [vmem:[%s328 + $0x87] sm:$0xff]
        %v820 = vld [vmem:[%s328 + $0x8f] sm:$0xff]
        %v821 = vld [vmem:[%s328 + $0xa7] sm:$0xff]
        %v822 = vld [vmem:[%s328 + $0xaf] sm:$0xff]
        %v823 = vld [vmem:[%s328 + $0xc7] sm:$0xff]
        %v824 = vld [vmem:[%s328 + $0xcf] sm:$0xff]
        %v825 = vld [vmem:[%s328 + $0xe7] sm:$0xff]
        %v826 = vld [vmem:[%s328 + $0xef] sm:$0xff]
        %v827 = vld [vmem:[%s328 + $0x107] sm:$0xff]
        %v828 = vld [vmem:[%s328 + $0x10f] sm:$0xff]
        %v829 = vld [vmem:[%s328 + $0x127] sm:$0xff]
        %v830 = vld [vmem:[%s328 + $0x12f] sm:$0xff]
        %v831 = vld [vmem:[%s328 + $0x147] sm:$0xff]
        %v832 = vld [vmem:[%s328 + $0x14f] sm:$0xff]
        %v833 = vld [vmem:[%s328 + $0x167] sm:$0xff]
        %v834 = vld [vmem:[%s328 + $0x16f] sm:$0xff]
        %v835 = vld [vmem:[%s328 + $0x187] sm:$0xff]
        %v836 = vld [vmem:[%s328 + $0x18f] sm:$0xff]
        %v837 = vld [vmem:[%s328 + $0x1a7] sm:$0xff]
        %v838 = vld [vmem:[%s328 + $0x1af] sm:$0xff]
        %v839 = vld [vmem:[%s328 + $0x1c7] sm:$0xff]
        %v840 = vld [vmem:[%s328 + $0x1cf] sm:$0xff]
        %v841 = vld [vmem:[%s328 + $0x1e7] sm:$0xff]
        %v842 = vld [vmem:[%s328 + $0x1ef] sm:$0xff]
        %875 = vrot.lane.b32.xlu0 %v811, 12
        %v876 = vpop.permute.xlu0 %875
        %877 = vrot.lane.b32.xlu0 %v812, 12
        %v878 = vpop.permute.xlu0 %877
        %879 = vrot.lane.b32.xlu0 %v813, 12
        %v880 = vpop.permute.xlu0 %879
        %881 = vrot.lane.b32.xlu0 %v814, 12
        %v882 = vpop.permute.xlu0 %881
        %883 = vrot.lane.b32.xlu0 %v815, 12
        %v884 = vpop.permute.xlu0 %883
        %885 = vrot.lane.b32.xlu0 %v816, 12
        %v886 = vpop.permute.xlu0 %885
        %887 = vrot.lane.b32.xlu0 %v817, 12
        %v888 = vpop.permute.xlu0 %887
        %889 = vrot.lane.b32.xlu0 %v818, 12
        %v890 = vpop.permute.xlu0 %889
        %891 = vrot.lane.b32.xlu0 %v819, 12
        %v892 = vpop.permute.xlu0 %891
        %893 = vrot.lane.b32.xlu0 %v820, 12
        %v894 = vpop.permute.xlu0 %893
        %895 = vrot.lane.b32.xlu0 %v821, 12
        %v896 = vpop.permute.xlu0 %895
        %897 = vrot.lane.b32.xlu0 %v822, 12
        %v898 = vpop.permute.xlu0 %897
        %899 = vrot.lane.b32.xlu0 %v823, 12
        %v900 = vpop.permute.xlu0 %899
        %901 = vrot.lane.b32.xlu0 %v824, 12
        %v902 = vpop.permute.xlu0 %901
        %903 = vrot.lane.b32.xlu0 %v825, 12
        %v904 = vpop.permute.xlu0 %903
        %905 = vrot.lane.b32.xlu0 %v826, 12
        %v906 = vpop.permute.xlu0 %905
        %907 = vrot.lane.b32.xlu0 %v827, 12
        %v908 = vpop.permute.xlu0 %907
        %909 = vrot.lane.b32.xlu0 %v828, 12
        %v910 = vpop.permute.xlu0 %909
        %911 = vrot.lane.b32.xlu0 %v829, 12
        %v912 = vpop.permute.xlu0 %911
        %913 = vrot.lane.b32.xlu0 %v830, 12
        %v914 = vpop.permute.xlu0 %913
        %915 = vrot.lane.b32.xlu0 %v831, 12
        %v916 = vpop.permute.xlu0 %915
        %917 = vrot.lane.b32.xlu0 %v832, 12
        %v918 = vpop.permute.xlu0 %917
        %919 = vrot.lane.b32.xlu0 %v833, 12
        %v920 = vpop.permute.xlu0 %919
        %921 = vrot.lane.b32.xlu0 %v834, 12
        %v922 = vpop.permute.xlu0 %921
        %923 = vrot.lane.b32.xlu0 %v835, 12
        %v924 = vpop.permute.xlu0 %923
        %925 = vrot.lane.b32.xlu0 %v836, 12
        %v926 = vpop.permute.xlu0 %925
        %927 = vrot.lane.b32.xlu0 %v837, 12
        %v928 = vpop.permute.xlu0 %927
        %929 = vrot.lane.b32.xlu0 %v838, 12
        %v930 = vpop.permute.xlu0 %929
        %931 = vrot.lane.b32.xlu0 %v839, 12
        %v932 = vpop.permute.xlu0 %931
        %933 = vrot.lane.b32.xlu0 %v840, 12
        %v934 = vpop.permute.xlu0 %933
        %935 = vrot.lane.b32.xlu0 %v841, 12
        %v936 = vpop.permute.xlu0 %935
        %937 = vrot.lane.b32.xlu0 %v842, 12
        %v938 = vpop.permute.xlu0 %937
        %vm971 = vcmask 130144
        %972 = vst.msk [vmem:[#allocation3] sm:$0xff] %vm971, %v876
        %973 = vst.msk [vmem:[#allocation3 + $0x8] sm:$0xff] %vm971, %v878
        %974 = vst.msk [vmem:[#allocation3 + $0x10] sm:$0xff] %vm971, %v880
        %975 = vst.msk [vmem:[#allocation3 + $0x18] sm:$0xff] %vm971, %v882
        %976 = vst.msk [vmem:[#allocation3 + $0x20] sm:$0xff] %vm971, %v884
        %977 = vst.msk [vmem:[#allocation3 + $0x28] sm:$0xff] %vm971, %v886
        %978 = vst.msk [vmem:[#allocation3 + $0x30] sm:$0xff] %vm971, %v888
        %979 = vst.msk [vmem:[#allocation3 + $0x38] sm:$0xff] %vm971, %v890
        %980 = vst.msk [vmem:[#allocation3 + $0x40] sm:$0xff] %vm971, %v892
        %981 = vst.msk [vmem:[#allocation3 + $0x48] sm:$0xff] %vm971, %v894
        %982 = vst.msk [vmem:[#allocation3 + $0x50] sm:$0xff] %vm971, %v896
        %983 = vst.msk [vmem:[#allocation3 + $0x58] sm:$0xff] %vm971, %v898
        %984 = vst.msk [vmem:[#allocation3 + $0x60] sm:$0xff] %vm971, %v900
        %985 = vst.msk [vmem:[#allocation3 + $0x68] sm:$0xff] %vm971, %v902
        %986 = vst.msk [vmem:[#allocation3 + $0x70] sm:$0xff] %vm971, %v904
        %987 = vst.msk [vmem:[#allocation3 + $0x78] sm:$0xff] %vm971, %v906
        %988 = vst.msk [vmem:[#allocation3 + $0x80] sm:$0xff] %vm971, %v908
        %989 = vst.msk [vmem:[#allocation3 + $0x88] sm:$0xff] %vm971, %v910
        %990 = vst.msk [vmem:[#allocation3 + $0x90] sm:$0xff] %vm971, %v912
        %991 = vst.msk [vmem:[#allocation3 + $0x98] sm:$0xff] %vm971, %v914
        %992 = vst.msk [vmem:[#allocation3 + $0xa0] sm:$0xff] %vm971, %v916
        %993 = vst.msk [vmem:[#allocation3 + $0xa8] sm:$0xff] %vm971, %v918
        %994 = vst.msk [vmem:[#allocation3 + $0xb0] sm:$0xff] %vm971, %v920
        %995 = vst.msk [vmem:[#allocation3 + $0xb8] sm:$0xff] %vm971, %v922
        %996 = vst.msk [vmem:[#allocation3 + $0xc0] sm:$0xff] %vm971, %v924
        %997 = vst.msk [vmem:[#allocation3 + $0xc8] sm:$0xff] %vm971, %v926
        %998 = vst.msk [vmem:[#allocation3 + $0xd0] sm:$0xff] %vm971, %v928
        %999 = vst.msk [vmem:[#allocation3 + $0xd8] sm:$0xff] %vm971, %v930
        %1000 = vst.msk [vmem:[#allocation3 + $0xe0] sm:$0xff] %vm971, %v932
        %1001 = vst.msk [vmem:[#allocation3 + $0xe8] sm:$0xff] %vm971, %v934
        %1002 = vst.msk [vmem:[#allocation3 + $0xf0] sm:$0xff] %vm971, %v936
        %1003 = vst.msk [vmem:[#allocation3 + $0xf8] sm:$0xff] %vm971, %v938
        %v1004 = vld [vmem:[%s328 + $0x8] sm:$0xff]
        %v1005 = vld [vmem:[%s328 + $0x10] sm:$0xff]
        %v1006 = vld [vmem:[%s328 + $0x28] sm:$0xff]
        %v1007 = vld [vmem:[%s328 + $0x30] sm:$0xff]
        %v1008 = vld [vmem:[%s328 + $0x48] sm:$0xff]
        %v1009 = vld [vmem:[%s328 + $0x50] sm:$0xff]
        %v1010 = vld [vmem:[%s328 + $0x68] sm:$0xff]
        %v1011 = vld [vmem:[%s328 + $0x70] sm:$0xff]
        %v1012 = vld [vmem:[%s328 + $0x88] sm:$0xff]
        %v1013 = vld [vmem:[%s328 + $0x90] sm:$0xff]
        %v1014 = vld [vmem:[%s328 + $0xa8] sm:$0xff]
        %v1015 = vld [vmem:[%s328 + $0xb0] sm:$0xff]
        %v1016 = vld [vmem:[%s328 + $0xc8] sm:$0xff]
        %v1017 = vld [vmem:[%s328 + $0xd0] sm:$0xff]
        %v1018 = vld [vmem:[%s328 + $0xe8] sm:$0xff]
        %v1019 = vld [vmem:[%s328 + $0xf0] sm:$0xff]
        %v1020 = vld [vmem:[%s328 + $0x108] sm:$0xff]
        %v1021 = vld [vmem:[%s328 + $0x110] sm:$0xff]
        %v1022 = vld [vmem:[%s328 + $0x128] sm:$0xff]
        %v1023 = vld [vmem:[%s328 + $0x130] sm:$0xff]
        %v1024 = vld [vmem:[%s328 + $0x148] sm:$0xff]
        %v1025 = vld [vmem:[%s328 + $0x150] sm:$0xff]
        %v1026 = vld [vmem:[%s328 + $0x168] sm:$0xff]
        %v1027 = vld [vmem:[%s328 + $0x170] sm:$0xff]
        %v1028 = vld [vmem:[%s328 + $0x188] sm:$0xff]
        %v1029 = vld [vmem:[%s328 + $0x190] sm:$0xff]
        %v1030 = vld [vmem:[%s328 + $0x1a8] sm:$0xff]
        %v1031 = vld [vmem:[%s328 + $0x1b0] sm:$0xff]
        %v1032 = vld [vmem:[%s328 + $0x1c8] sm:$0xff]
        %v1033 = vld [vmem:[%s328 + $0x1d0] sm:$0xff]
        %v1034 = vld [vmem:[%s328 + $0x1e8] sm:$0xff]
        %v1035 = vld [vmem:[%s328 + $0x1f0] sm:$0xff]
        %1068 = vrot.lane.b32.xlu0 %v1004, 16
        %v1069 = vpop.permute.xlu0 %1068
        %1070 = vrot.lane.b32.xlu0 %v1005, 16
        %v1071 = vpop.permute.xlu0 %1070
        %1072 = vrot.lane.b32.xlu0 %v1006, 16
        %v1073 = vpop.permute.xlu0 %1072
        %1074 = vrot.lane.b32.xlu0 %v1007, 16
        %v1075 = vpop.permute.xlu0 %1074
        %1076 = vrot.lane.b32.xlu0 %v1008, 16
        %v1077 = vpop.permute.xlu0 %1076
        %1078 = vrot.lane.b32.xlu0 %v1009, 16
        %v1079 = vpop.permute.xlu0 %1078
        %1080 = vrot.lane.b32.xlu0 %v1010, 16
        %v1081 = vpop.permute.xlu0 %1080
        %1082 = vrot.lane.b32.xlu0 %v1011, 16
        %v1083 = vpop.permute.xlu0 %1082
        %1084 = vrot.lane.b32.xlu0 %v1012, 16
        %v1085 = vpop.permute.xlu0 %1084
        %1086 = vrot.lane.b32.xlu0 %v1013, 16
        %v1087 = vpop.permute.xlu0 %1086
        %1088 = vrot.lane.b32.xlu0 %v1014, 16
        %v1089 = vpop.permute.xlu0 %1088
        %1090 = vrot.lane.b32.xlu0 %v1015, 16
        %v1091 = vpop.permute.xlu0 %1090
        %1092 = vrot.lane.b32.xlu0 %v1016, 16
        %v1093 = vpop.permute.xlu0 %1092
        %1094 = vrot.lane.b32.xlu0 %v1017, 16
        %v1095 = vpop.permute.xlu0 %1094
        %1096 = vrot.lane.b32.xlu0 %v1018, 16
        %v1097 = vpop.permute.xlu0 %1096
        %1098 = vrot.lane.b32.xlu0 %v1019, 16
        %v1099 = vpop.permute.xlu0 %1098
        %1100 = vrot.lane.b32.xlu0 %v1020, 16
        %v1101 = vpop.permute.xlu0 %1100
        %1102 = vrot.lane.b32.xlu0 %v1021, 16
        %v1103 = vpop.permute.xlu0 %1102
        %1104 = vrot.lane.b32.xlu0 %v1022, 16
        %v1105 = vpop.permute.xlu0 %1104
        %1106 = vrot.lane.b32.xlu0 %v1023, 16
        %v1107 = vpop.permute.xlu0 %1106
        %1108 = vrot.lane.b32.xlu0 %v1024, 16
        %v1109 = vpop.permute.xlu0 %1108
        %1110 = vrot.lane.b32.xlu0 %v1025, 16
        %v1111 = vpop.permute.xlu0 %1110
        %1112 = vrot.lane.b32.xlu0 %v1026, 16
        %v1113 = vpop.permute.xlu0 %1112
        %1114 = vrot.lane.b32.xlu0 %v1027, 16
        %v1115 = vpop.permute.xlu0 %1114
        %1116 = vrot.lane.b32.xlu0 %v1028, 16
        %v1117 = vpop.permute.xlu0 %1116
        %1118 = vrot.lane.b32.xlu0 %v1029, 16
        %v1119 = vpop.permute.xlu0 %1118
        %1120 = vrot.lane.b32.xlu0 %v1030, 16
        %v1121 = vpop.permute.xlu0 %1120
        %1122 = vrot.lane.b32.xlu0 %v1031, 16
        %v1123 = vpop.permute.xlu0 %1122
        %1124 = vrot.lane.b32.xlu0 %v1032, 16
        %v1125 = vpop.permute.xlu0 %1124
        %1126 = vrot.lane.b32.xlu0 %v1033, 16
        %v1127 = vpop.permute.xlu0 %1126
        %1128 = vrot.lane.b32.xlu0 %v1034, 16
        %v1129 = vpop.permute.xlu0 %1128
        %1130 = vrot.lane.b32.xlu0 %v1035, 16
        %v1131 = vpop.permute.xlu0 %1130
        %vm1164 = vcmask 162944
        %1165 = vst.msk [vmem:[#allocation3] sm:$0xff] %vm1164, %v1069
        %1166 = vst.msk [vmem:[#allocation3 + $0x8] sm:$0xff] %vm1164, %v1071
        %1167 = vst.msk [vmem:[#allocation3 + $0x10] sm:$0xff] %vm1164, %v1073
        %1168 = vst.msk [vmem:[#allocation3 + $0x18] sm:$0xff] %vm1164, %v1075
        %1169 = vst.msk [vmem:[#allocation3 + $0x20] sm:$0xff] %vm1164, %v1077
        %1170 = vst.msk [vmem:[#allocation3 + $0x28] sm:$0xff] %vm1164, %v1079
        %1171 = vst.msk [vmem:[#allocation3 + $0x30] sm:$0xff] %vm1164, %v1081
        %1172 = vst.msk [vmem:[#allocation3 + $0x38] sm:$0xff] %vm1164, %v1083
        %1173 = vst.msk [vmem:[#allocation3 + $0x40] sm:$0xff] %vm1164, %v1085
        %1174 = vst.msk [vmem:[#allocation3 + $0x48] sm:$0xff] %vm1164, %v1087
        %1175 = vst.msk [vmem:[#allocation3 + $0x50] sm:$0xff] %vm1164, %v1089
        %1176 = vst.msk [vmem:[#allocation3 + $0x58] sm:$0xff] %vm1164, %v1091
        %1177 = vst.msk [vmem:[#allocation3 + $0x60] sm:$0xff] %vm1164, %v1093
        %1178 = vst.msk [vmem:[#allocation3 + $0x68] sm:$0xff] %vm1164, %v1095
        %1179 = vst.msk [vmem:[#allocation3 + $0x70] sm:$0xff] %vm1164, %v1097
        %1180 = vst.msk [vmem:[#allocation3 + $0x78] sm:$0xff] %vm1164, %v1099
        %1181 = vst.msk [vmem:[#allocation3 + $0x80] sm:$0xff] %vm1164, %v1101
        %1182 = vst.msk [vmem:[#allocation3 + $0x88] sm:$0xff] %vm1164, %v1103
        %1183 = vst.msk [vmem:[#allocation3 + $0x90] sm:$0xff] %vm1164, %v1105
        %1184 = vst.msk [vmem:[#allocation3 + $0x98] sm:$0xff] %vm1164, %v1107
        %1185 = vst.msk [vmem:[#allocation3 + $0xa0] sm:$0xff] %vm1164, %v1109
        %1186 = vst.msk [vmem:[#allocation3 + $0xa8] sm:$0xff] %vm1164, %v1111
        %1187 = vst.msk [vmem:[#allocation3 + $0xb0] sm:$0xff] %vm1164, %v1113
        %1188 = vst.msk [vmem:[#allocation3 + $0xb8] sm:$0xff] %vm1164, %v1115
        %1189 = vst.msk [vmem:[#allocation3 + $0xc0] sm:$0xff] %vm1164, %v1117
        %1190 = vst.msk [vmem:[#allocation3 + $0xc8] sm:$0xff] %vm1164, %v1119
        %1191 = vst.msk [vmem:[#allocation3 + $0xd0] sm:$0xff] %vm1164, %v1121
        %1192 = vst.msk [vmem:[#allocation3 + $0xd8] sm:$0xff] %vm1164, %v1123
        %1193 = vst.msk [vmem:[#allocation3 + $0xe0] sm:$0xff] %vm1164, %v1125
        %1194 = vst.msk [vmem:[#allocation3 + $0xe8] sm:$0xff] %vm1164, %v1127
        %1195 = vst.msk [vmem:[#allocation3 + $0xf0] sm:$0xff] %vm1164, %v1129
        %1196 = vst.msk [vmem:[#allocation3 + $0xf8] sm:$0xff] %vm1164, %v1131
        %v1197 = vld [vmem:[%s328 + $0x9] sm:$0xff]
        %v1198 = vld [vmem:[%s328 + $0x11] sm:$0xff]
        %v1199 = vld [vmem:[%s328 + $0x29] sm:$0xff]
        %v1200 = vld [vmem:[%s328 + $0x31] sm:$0xff]
        %v1201 = vld [vmem:[%s328 + $0x49] sm:$0xff]
        %v1202 = vld [vmem:[%s328 + $0x51] sm:$0xff]
        %v1203 = vld [vmem:[%s328 + $0x69] sm:$0xff]
        %v1204 = vld [vmem:[%s328 + $0x71] sm:$0xff]
        %v1205 = vld [vmem:[%s328 + $0x89] sm:$0xff]
        %v1206 = vld [vmem:[%s328 + $0x91] sm:$0xff]
        %v1207 = vld [vmem:[%s328 + $0xa9] sm:$0xff]
        %v1208 = vld [vmem:[%s328 + $0xb1] sm:$0xff]
        %v1209 = vld [vmem:[%s328 + $0xc9] sm:$0xff]
        %v1210 = vld [vmem:[%s328 + $0xd1] sm:$0xff]
        %v1211 = vld [vmem:[%s328 + $0xe9] sm:$0xff]
        %v1212 = vld [vmem:[%s328 + $0xf1] sm:$0xff]
        %v1213 = vld [vmem:[%s328 + $0x109] sm:$0xff]
        %v1214 = vld [vmem:[%s328 + $0x111] sm:$0xff]
        %v1215 = vld [vmem:[%s328 + $0x129] sm:$0xff]
        %v1216 = vld [vmem:[%s328 + $0x131] sm:$0xff]
        %v1217 = vld [vmem:[%s328 + $0x149] sm:$0xff]
        %v1218 = vld [vmem:[%s328 + $0x151] sm:$0xff]
        %v1219 = vld [vmem:[%s328 + $0x169] sm:$0xff]
        %v1220 = vld [vmem:[%s328 + $0x171] sm:$0xff]
        %v1221 = vld [vmem:[%s328 + $0x189] sm:$0xff]
        %v1222 = vld [vmem:[%s328 + $0x191] sm:$0xff]
        %v1223 = vld [vmem:[%s328 + $0x1a9] sm:$0xff]
        %v1224 = vld [vmem:[%s328 + $0x1b1] sm:$0xff]
        %v1225 = vld [vmem:[%s328 + $0x1c9] sm:$0xff]
        %v1226 = vld [vmem:[%s328 + $0x1d1] sm:$0xff]
        %v1227 = vld [vmem:[%s328 + $0x1e9] sm:$0xff]
        %v1228 = vld [vmem:[%s328 + $0x1f1] sm:$0xff]
        %1261 = vrot.lane.b32.xlu0 %v1197, 20
        %v1262 = vpop.permute.xlu0 %1261
        %1263 = vrot.lane.b32.xlu0 %v1198, 20
        %v1264 = vpop.permute.xlu0 %1263
        %1265 = vrot.lane.b32.xlu0 %v1199, 20
        %v1266 = vpop.permute.xlu0 %1265
        %1267 = vrot.lane.b32.xlu0 %v1200, 20
        %v1268 = vpop.permute.xlu0 %1267
        %1269 = vrot.lane.b32.xlu0 %v1201, 20
        %v1270 = vpop.permute.xlu0 %1269
        %1271 = vrot.lane.b32.xlu0 %v1202, 20
        %v1272 = vpop.permute.xlu0 %1271
        %1273 = vrot.lane.b32.xlu0 %v1203, 20
        %v1274 = vpop.permute.xlu0 %1273
        %1275 = vrot.lane.b32.xlu0 %v1204, 20
        %v1276 = vpop.permute.xlu0 %1275
        %1277 = vrot.lane.b32.xlu0 %v1205, 20
        %v1278 = vpop.permute.xlu0 %1277
        %1279 = vrot.lane.b32.xlu0 %v1206, 20
        %v1280 = vpop.permute.xlu0 %1279
        %1281 = vrot.lane.b32.xlu0 %v1207, 20
        %v1282 = vpop.permute.xlu0 %1281
        %1283 = vrot.lane.b32.xlu0 %v1208, 20
        %v1284 = vpop.permute.xlu0 %1283
        %1285 = vrot.lane.b32.xlu0 %v1209, 20
        %v1286 = vpop.permute.xlu0 %1285
        %1287 = vrot.lane.b32.xlu0 %v1210, 20
        %v1288 = vpop.permute.xlu0 %1287
        %1289 = vrot.lane.b32.xlu0 %v1211, 20
        %v1290 = vpop.permute.xlu0 %1289
        %1291 = vrot.lane.b32.xlu0 %v1212, 20
        %v1292 = vpop.permute.xlu0 %1291
        %1293 = vrot.lane.b32.xlu0 %v1213, 20
        %v1294 = vpop.permute.xlu0 %1293
        %1295 = vrot.lane.b32.xlu0 %v1214, 20
        %v1296 = vpop.permute.xlu0 %1295
        %1297 = vrot.lane.b32.xlu0 %v1215, 20
        %v1298 = vpop.permute.xlu0 %1297
        %1299 = vrot.lane.b32.xlu0 %v1216, 20
        %v1300 = vpop.permute.xlu0 %1299
        %1301 = vrot.lane.b32.xlu0 %v1217, 20
        %v1302 = vpop.permute.xlu0 %1301
        %1303 = vrot.lane.b32.xlu0 %v1218, 20
        %v1304 = vpop.permute.xlu0 %1303
        %1305 = vrot.lane.b32.xlu0 %v1219, 20
        %v1306 = vpop.permute.xlu0 %1305
        %1307 = vrot.lane.b32.xlu0 %v1220, 20
        %v1308 = vpop.permute.xlu0 %1307
        %1309 = vrot.lane.b32.xlu0 %v1221, 20
        %v1310 = vpop.permute.xlu0 %1309
        %1311 = vrot.lane.b32.xlu0 %v1222, 20
        %v1312 = vpop.permute.xlu0 %1311
        %1313 = vrot.lane.b32.xlu0 %v1223, 20
        %v1314 = vpop.permute.xlu0 %1313
        %1315 = vrot.lane.b32.xlu0 %v1224, 20
        %v1316 = vpop.permute.xlu0 %1315
        %1317 = vrot.lane.b32.xlu0 %v1225, 20
        %v1318 = vpop.permute.xlu0 %1317
        %1319 = vrot.lane.b32.xlu0 %v1226, 20
        %v1320 = vpop.permute.xlu0 %1319
        %1321 = vrot.lane.b32.xlu0 %v1227, 20
        %v1322 = vpop.permute.xlu0 %1321
        %1323 = vrot.lane.b32.xlu0 %v1228, 20
        %v1324 = vpop.permute.xlu0 %1323
        %vm1357 = vcmask 195744
        %1358 = vst.msk [vmem:[#allocation3] sm:$0xff] %vm1357, %v1262
        %1359 = vst.msk [vmem:[#allocation3 + $0x8] sm:$0xff] %vm1357, %v1264
        %1360 = vst.msk [vmem:[#allocation3 + $0x10] sm:$0xff] %vm1357, %v1266
        %1361 = vst.msk [vmem:[#allocation3 + $0x18] sm:$0xff] %vm1357, %v1268
        %1362 = vst.msk [vmem:[#allocation3 + $0x20] sm:$0xff] %vm1357, %v1270
        %1363 = vst.msk [vmem:[#allocation3 + $0x28] sm:$0xff] %vm1357, %v1272
        %1364 = vst.msk [vmem:[#allocation3 + $0x30] sm:$0xff] %vm1357, %v1274
        %1365 = vst.msk [vmem:[#allocation3 + $0x38] sm:$0xff] %vm1357, %v1276
        %1366 = vst.msk [vmem:[#allocation3 + $0x40] sm:$0xff] %vm1357, %v1278
        %1367 = vst.msk [vmem:[#allocation3 + $0x48] sm:$0xff] %vm1357, %v1280
        %1368 = vst.msk [vmem:[#allocation3 + $0x50] sm:$0xff] %vm1357, %v1282
        %1369 = vst.msk [vmem:[#allocation3 + $0x58] sm:$0xff] %vm1357, %v1284
        %1370 = vst.msk [vmem:[#allocation3 + $0x60] sm:$0xff] %vm1357, %v1286
        %1371 = vst.msk [vmem:[#allocation3 + $0x68] sm:$0xff] %vm1357, %v1288
        %1372 = vst.msk [vmem:[#allocation3 + $0x70] sm:$0xff] %vm1357, %v1290
        %1373 = vst.msk [vmem:[#allocation3 + $0x78] sm:$0xff] %vm1357, %v1292
        %1374 = vst.msk [vmem:[#allocation3 + $0x80] sm:$0xff] %vm1357, %v1294
        %1375 = vst.msk [vmem:[#allocation3 + $0x88] sm:$0xff] %vm1357, %v1296
        %1376 = vst.msk [vmem:[#allocation3 + $0x90] sm:$0xff] %vm1357, %v1298
        %1377 = vst.msk [vmem:[#allocation3 + $0x98] sm:$0xff] %vm1357, %v1300
        %1378 = vst.msk [vmem:[#allocation3 + $0xa0] sm:$0xff] %vm1357, %v1302
        %1379 = vst.msk [vmem:[#allocation3 + $0xa8] sm:$0xff] %vm1357, %v1304
        %1380 = vst.msk [vmem:[#allocation3 + $0xb0] sm:$0xff] %vm1357, %v1306
        %1381 = vst.msk [vmem:[#allocation3 + $0xb8] sm:$0xff] %vm1357, %v1308
        %1382 = vst.msk [vmem:[#allocation3 + $0xc0] sm:$0xff] %vm1357, %v1310
        %1383 = vst.msk [vmem:[#allocation3 + $0xc8] sm:$0xff] %vm1357, %v1312
        %1384 = vst.msk [vmem:[#allocation3 + $0xd0] sm:$0xff] %vm1357, %v1314
        %1385 = vst.msk [vmem:[#allocation3 + $0xd8] sm:$0xff] %vm1357, %v1316
        %1386 = vst.msk [vmem:[#allocation3 + $0xe0] sm:$0xff] %vm1357, %v1318
        %1387 = vst.msk [vmem:[#allocation3 + $0xe8] sm:$0xff] %vm1357, %v1320
        %1388 = vst.msk [vmem:[#allocation3 + $0xf0] sm:$0xff] %vm1357, %v1322
        %1389 = vst.msk [vmem:[#allocation3 + $0xf8] sm:$0xff] %vm1357, %v1324
        %s1390 = scalar_lea.vmem [#allocation2], 64
        %v1391 = vld [vmem:[%s1390 + $0x7] sm:$0xff]
        %v1392 = vld [vmem:[%s1390 + $0xf] sm:$0xff]
        %v1393 = vld [vmem:[%s1390 + $0x27] sm:$0xff]
        %v1394 = vld [vmem:[%s1390 + $0x2f] sm:$0xff]
        %v1395 = vld [vmem:[%s1390 + $0x47] sm:$0xff]
        %v1396 = vld [vmem:[%s1390 + $0x4f] sm:$0xff]
        %v1397 = vld [vmem:[%s1390 + $0x67] sm:$0xff]
        %v1398 = vld [vmem:[%s1390 + $0x6f] sm:$0xff]
        %v1399 = vld [vmem:[%s1390 + $0x87] sm:$0xff]
        %v1400 = vld [vmem:[%s1390 + $0x8f] sm:$0xff]
        %v1401 = vld [vmem:[%s1390 + $0xa7] sm:$0xff]
        %v1402 = vld [vmem:[%s1390 + $0xaf] sm:$0xff]
        %v1403 = vld [vmem:[%s1390 + $0xc7] sm:$0xff]
        %v1404 = vld [vmem:[%s1390 + $0xcf] sm:$0xff]
        %v1405 = vld [vmem:[%s1390 + $0xe7] sm:$0xff]
        %v1406 = vld [vmem:[%s1390 + $0xef] sm:$0xff]
        %v1407 = vld [vmem:[%s1390 + $0x107] sm:$0xff]
        %v1408 = vld [vmem:[%s1390 + $0x10f] sm:$0xff]
        %v1409 = vld [vmem:[%s1390 + $0x127] sm:$0xff]
        %v1410 = vld [vmem:[%s1390 + $0x12f] sm:$0xff]
        %v1411 = vld [vmem:[%s1390 + $0x147] sm:$0xff]
        %v1412 = vld [vmem:[%s1390 + $0x14f] sm:$0xff]
        %v1413 = vld [vmem:[%s1390 + $0x167] sm:$0xff]
        %v1414 = vld [vmem:[%s1390 + $0x16f] sm:$0xff]
        %v1415 = vld [vmem:[%s1390 + $0x187] sm:$0xff]
        %v1416 = vld [vmem:[%s1390 + $0x18f] sm:$0xff]
        %v1417 = vld [vmem:[%s1390 + $0x1a7] sm:$0xff]
        %v1418 = vld [vmem:[%s1390 + $0x1af] sm:$0xff]
        %v1419 = vld [vmem:[%s1390 + $0x1c7] sm:$0xff]
        %v1420 = vld [vmem:[%s1390 + $0x1cf] sm:$0xff]
        %v1421 = vld [vmem:[%s1390 + $0x1e7] sm:$0xff]
        %v1422 = vld [vmem:[%s1390 + $0x1ef] sm:$0xff]
        %1455 = vrot.lane.b32.xlu0 %v1391, 24
        %v1456 = vpop.permute.xlu0 %1455
        %1457 = vrot.lane.b32.xlu0 %v1392, 24
        %v1458 = vpop.permute.xlu0 %1457
        %1459 = vrot.lane.b32.xlu0 %v1393, 24
        %v1460 = vpop.permute.xlu0 %1459
        %1461 = vrot.lane.b32.xlu0 %v1394, 24
        %v1462 = vpop.permute.xlu0 %1461
        %1463 = vrot.lane.b32.xlu0 %v1395, 24
        %v1464 = vpop.permute.xlu0 %1463
        %1465 = vrot.lane.b32.xlu0 %v1396, 24
        %v1466 = vpop.permute.xlu0 %1465
        %1467 = vrot.lane.b32.xlu0 %v1397, 24
        %v1468 = vpop.permute.xlu0 %1467
        %1469 = vrot.lane.b32.xlu0 %v1398, 24
        %v1470 = vpop.permute.xlu0 %1469
        %1471 = vrot.lane.b32.xlu0 %v1399, 24
        %v1472 = vpop.permute.xlu0 %1471
        %1473 = vrot.lane.b32.xlu0 %v1400, 24
        %v1474 = vpop.permute.xlu0 %1473
        %1475 = vrot.lane.b32.xlu0 %v1401, 24
        %v1476 = vpop.permute.xlu0 %1475
        %1477 = vrot.lane.b32.xlu0 %v1402, 24
        %v1478 = vpop.permute.xlu0 %1477
        %1479 = vrot.lane.b32.xlu0 %v1403, 24
        %v1480 = vpop.permute.xlu0 %1479
        %1481 = vrot.lane.b32.xlu0 %v1404, 24
        %v1482 = vpop.permute.xlu0 %1481
        %1483 = vrot.lane.b32.xlu0 %v1405, 24
        %v1484 = vpop.permute.xlu0 %1483
        %1485 = vrot.lane.b32.xlu0 %v1406, 24
        %v1486 = vpop.permute.xlu0 %1485
        %1487 = vrot.lane.b32.xlu0 %v1407, 24
        %v1488 = vpop.permute.xlu0 %1487
        %1489 = vrot.lane.b32.xlu0 %v1408, 24
        %v1490 = vpop.permute.xlu0 %1489
        %1491 = vrot.lane.b32.xlu0 %v1409, 24
        %v1492 = vpop.permute.xlu0 %1491
        %1493 = vrot.lane.b32.xlu0 %v1410, 24
        %v1494 = vpop.permute.xlu0 %1493
        %1495 = vrot.lane.b32.xlu0 %v1411, 24
        %v1496 = vpop.permute.xlu0 %1495
        %1497 = vrot.lane.b32.xlu0 %v1412, 24
        %v1498 = vpop.permute.xlu0 %1497
        %1499 = vrot.lane.b32.xlu0 %v1413, 24
        %v1500 = vpop.permute.xlu0 %1499
        %1501 = vrot.lane.b32.xlu0 %v1414, 24
        %v1502 = vpop.permute.xlu0 %1501
        %1503 = vrot.lane.b32.xlu0 %v1415, 24
        %v1504 = vpop.permute.xlu0 %1503
        %1505 = vrot.lane.b32.xlu0 %v1416, 24
        %v1506 = vpop.permute.xlu0 %1505
        %1507 = vrot.lane.b32.xlu0 %v1417, 24
        %v1508 = vpop.permute.xlu0 %1507
        %1509 = vrot.lane.b32.xlu0 %v1418, 24
        %v1510 = vpop.permute.xlu0 %1509
        %1511 = vrot.lane.b32.xlu0 %v1419, 24
        %v1512 = vpop.permute.xlu0 %1511
        %1513 = vrot.lane.b32.xlu0 %v1420, 24
        %v1514 = vpop.permute.xlu0 %1513
        %1515 = vrot.lane.b32.xlu0 %v1421, 24
        %v1516 = vpop.permute.xlu0 %1515
        %1517 = vrot.lane.b32.xlu0 %v1422, 24
        %v1518 = vpop.permute.xlu0 %1517
        %vm1551 = vcmask 228544
        %1552 = vst.msk [vmem:[#allocation3] sm:$0xff] %vm1551, %v1456
        %1553 = vst.msk [vmem:[#allocation3 + $0x8] sm:$0xff] %vm1551, %v1458
        %1554 = vst.msk [vmem:[#allocation3 + $0x10] sm:$0xff] %vm1551, %v1460
        %1555 = vst.msk [vmem:[#allocation3 + $0x18] sm:$0xff] %vm1551, %v1462
        %1556 = vst.msk [vmem:[#allocation3 + $0x20] sm:$0xff] %vm1551, %v1464
        %1557 = vst.msk [vmem:[#allocation3 + $0x28] sm:$0xff] %vm1551, %v1466
        %1558 = vst.msk [vmem:[#allocation3 + $0x30] sm:$0xff] %vm1551, %v1468
        %1559 = vst.msk [vmem:[#allocation3 + $0x38] sm:$0xff] %vm1551, %v1470
        %1560 = vst.msk [vmem:[#allocation3 + $0x40] sm:$0xff] %vm1551, %v1472
        %1561 = vst.msk [vmem:[#allocation3 + $0x48] sm:$0xff] %vm1551, %v1474
        %1562 = vst.msk [vmem:[#allocation3 + $0x50] sm:$0xff] %vm1551, %v1476
        %1563 = vst.msk [vmem:[#allocation3 + $0x58] sm:$0xff] %vm1551, %v1478
        %1564 = vst.msk [vmem:[#allocation3 + $0x60] sm:$0xff] %vm1551, %v1480
        %1565 = vst.msk [vmem:[#allocation3 + $0x68] sm:$0xff] %vm1551, %v1482
        %1566 = vst.msk [vmem:[#allocation3 + $0x70] sm:$0xff] %vm1551, %v1484
        %1567 = vst.msk [vmem:[#allocation3 + $0x78] sm:$0xff] %vm1551, %v1486
        %1568 = vst.msk [vmem:[#allocation3 + $0x80] sm:$0xff] %vm1551, %v1488
        %1569 = vst.msk [vmem:[#allocation3 + $0x88] sm:$0xff] %vm1551, %v1490
        %1570 = vst.msk [vmem:[#allocation3 + $0x90] sm:$0xff] %vm1551, %v1492
        %1571 = vst.msk [vmem:[#allocation3 + $0x98] sm:$0xff] %vm1551, %v1494
        %1572 = vst.msk [vmem:[#allocation3 + $0xa0] sm:$0xff] %vm1551, %v1496
        %1573 = vst.msk [vmem:[#allocation3 + $0xa8] sm:$0xff] %vm1551, %v1498
        %1574 = vst.msk [vmem:[#allocation3 + $0xb0] sm:$0xff] %vm1551, %v1500
        %1575 = vst.msk [vmem:[#allocation3 + $0xb8] sm:$0xff] %vm1551, %v1502
        %1576 = vst.msk [vmem:[#allocation3 + $0xc0] sm:$0xff] %vm1551, %v1504
        %1577 = vst.msk [vmem:[#allocation3 + $0xc8] sm:$0xff] %vm1551, %v1506
        %1578 = vst.msk [vmem:[#allocation3 + $0xd0] sm:$0xff] %vm1551, %v1508
        %1579 = vst.msk [vmem:[#allocation3 + $0xd8] sm:$0xff] %vm1551, %v1510
        %1580 = vst.msk [vmem:[#allocation3 + $0xe0] sm:$0xff] %vm1551, %v1512
        %1581 = vst.msk [vmem:[#allocation3 + $0xe8] sm:$0xff] %vm1551, %v1514
        %1582 = vst.msk [vmem:[#allocation3 + $0xf0] sm:$0xff] %vm1551, %v1516
        %1583 = vst.msk [vmem:[#allocation3 + $0xf8] sm:$0xff] %vm1551, %v1518
        %v1584 = vld [vmem:[%s1390 + $0x8] sm:$0xff]
        %v1585 = vld [vmem:[%s1390 + $0x10] sm:$0xff]
        %v1586 = vld [vmem:[%s1390 + $0x28] sm:$0xff]
        %v1587 = vld [vmem:[%s1390 + $0x30] sm:$0xff]
        %v1588 = vld [vmem:[%s1390 + $0x48] sm:$0xff]
        %v1589 = vld [vmem:[%s1390 + $0x50] sm:$0xff]
        %v1590 = vld [vmem:[%s1390 + $0x68] sm:$0xff]
        %v1591 = vld [vmem:[%s1390 + $0x70] sm:$0xff]
        %v1592 = vld [vmem:[%s1390 + $0x88] sm:$0xff]
        %v1593 = vld [vmem:[%s1390 + $0x90] sm:$0xff]
        %v1594 = vld [vmem:[%s1390 + $0xa8] sm:$0xff]
        %v1595 = vld [vmem:[%s1390 + $0xb0] sm:$0xff]
        %v1596 = vld [vmem:[%s1390 + $0xc8] sm:$0xff]
        %v1597 = vld [vmem:[%s1390 + $0xd0] sm:$0xff]
        %v1598 = vld [vmem:[%s1390 + $0xe8] sm:$0xff]
        %v1599 = vld [vmem:[%s1390 + $0xf0] sm:$0xff]
        %v1600 = vld [vmem:[%s1390 + $0x108] sm:$0xff]
        %v1601 = vld [vmem:[%s1390 + $0x110] sm:$0xff]
        %v1602 = vld [vmem:[%s1390 + $0x128] sm:$0xff]
        %v1603 = vld [vmem:[%s1390 + $0x130] sm:$0xff]
        %v1604 = vld [vmem:[%s1390 + $0x148] sm:$0xff]
        %v1605 = vld [vmem:[%s1390 + $0x150] sm:$0xff]
        %v1606 = vld [vmem:[%s1390 + $0x168] sm:$0xff]
        %v1607 = vld [vmem:[%s1390 + $0x170] sm:$0xff]
        %v1608 = vld [vmem:[%s1390 + $0x188] sm:$0xff]
        %v1609 = vld [vmem:[%s1390 + $0x190] sm:$0xff]
        %v1610 = vld [vmem:[%s1390 + $0x1a8] sm:$0xff]
        %v1611 = vld [vmem:[%s1390 + $0x1b0] sm:$0xff]
        %v1612 = vld [vmem:[%s1390 + $0x1c8] sm:$0xff]
        %v1613 = vld [vmem:[%s1390 + $0x1d0] sm:$0xff]
        %v1614 = vld [vmem:[%s1390 + $0x1e8] sm:$0xff]
        %v1615 = vld [vmem:[%s1390 + $0x1f0] sm:$0xff]
        %1648 = vrot.lane.b32.xlu0 %v1584, 28
        %v1649 = vpop.permute.xlu0 %1648
        %1650 = vrot.lane.b32.xlu0 %v1585, 28
        %v1651 = vpop.permute.xlu0 %1650
        %1652 = vrot.lane.b32.xlu0 %v1586, 28
        %v1653 = vpop.permute.xlu0 %1652
        %1654 = vrot.lane.b32.xlu0 %v1587, 28
        %v1655 = vpop.permute.xlu0 %1654
        %1656 = vrot.lane.b32.xlu0 %v1588, 28
        %v1657 = vpop.permute.xlu0 %1656
        %1658 = vrot.lane.b32.xlu0 %v1589, 28
        %v1659 = vpop.permute.xlu0 %1658
        %1660 = vrot.lane.b32.xlu0 %v1590, 28
        %v1661 = vpop.permute.xlu0 %1660
        %1662 = vrot.lane.b32.xlu0 %v1591, 28
        %v1663 = vpop.permute.xlu0 %1662
        %1664 = vrot.lane.b32.xlu0 %v1592, 28
        %v1665 = vpop.permute.xlu0 %1664
        %1666 = vrot.lane.b32.xlu0 %v1593, 28
        %v1667 = vpop.permute.xlu0 %1666
        %1668 = vrot.lane.b32.xlu0 %v1594, 28
        %v1669 = vpop.permute.xlu0 %1668
        %1670 = vrot.lane.b32.xlu0 %v1595, 28
        %v1671 = vpop.permute.xlu0 %1670
        %1672 = vrot.lane.b32.xlu0 %v1596, 28
        %v1673 = vpop.permute.xlu0 %1672
        %1674 = vrot.lane.b32.xlu0 %v1597, 28
        %v1675 = vpop.permute.xlu0 %1674
        %1676 = vrot.lane.b32.xlu0 %v1598, 28
        %v1677 = vpop.permute.xlu0 %1676
        %1678 = vrot.lane.b32.xlu0 %v1599, 28
        %v1679 = vpop.permute.xlu0 %1678
        %1680 = vrot.lane.b32.xlu0 %v1600, 28
        %v1681 = vpop.permute.xlu0 %1680
        %1682 = vrot.lane.b32.xlu0 %v1601, 28
        %v1683 = vpop.permute.xlu0 %1682
        %1684 = vrot.lane.b32.xlu0 %v1602, 28
        %v1685 = vpop.permute.xlu0 %1684
        %1686 = vrot.lane.b32.xlu0 %v1603, 28
        %v1687 = vpop.permute.xlu0 %1686
        %1688 = vrot.lane.b32.xlu0 %v1604, 28
        %v1689 = vpop.permute.xlu0 %1688
        %1690 = vrot.lane.b32.xlu0 %v1605, 28
        %v1691 = vpop.permute.xlu0 %1690
        %1692 = vrot.lane.b32.xlu0 %v1606, 28
        %v1693 = vpop.permute.xlu0 %1692
        %1694 = vrot.lane.b32.xlu0 %v1607, 28
        %v1695 = vpop.permute.xlu0 %1694
        %1696 = vrot.lane.b32.xlu0 %v1608, 28
        %v1697 = vpop.permute.xlu0 %1696
        %1698 = vrot.lane.b32.xlu0 %v1609, 28
        %v1699 = vpop.permute.xlu0 %1698
        %1700 = vrot.lane.b32.xlu0 %v1610, 28
        %v1701 = vpop.permute.xlu0 %1700
        %1702 = vrot.lane.b32.xlu0 %v1611, 28
        %v1703 = vpop.permute.xlu0 %1702
        %1704 = vrot.lane.b32.xlu0 %v1612, 28
        %v1705 = vpop.permute.xlu0 %1704
        %1706 = vrot.lane.b32.xlu0 %v1613, 28
        %v1707 = vpop.permute.xlu0 %1706
        %1708 = vrot.lane.b32.xlu0 %v1614, 28
        %v1709 = vpop.permute.xlu0 %1708
        %1710 = vrot.lane.b32.xlu0 %v1615, 28
        %v1711 = vpop.permute.xlu0 %1710
        %vm1744 = vcmask 261344
        %1745 = vst.msk [vmem:[#allocation3] sm:$0xff] %vm1744, %v1649
        %1746 = vst.msk [vmem:[#allocation3 + $0x8] sm:$0xff] %vm1744, %v1651
        %1747 = vst.msk [vmem:[#allocation3 + $0x10] sm:$0xff] %vm1744, %v1653
        %1748 = vst.msk [vmem:[#allocation3 + $0x18] sm:$0xff] %vm1744, %v1655
        %1749 = vst.msk [vmem:[#allocation3 + $0x20] sm:$0xff] %vm1744, %v1657
        %1750 = vst.msk [vmem:[#allocation3 + $0x28] sm:$0xff] %vm1744, %v1659
        %1751 = vst.msk [vmem:[#allocation3 + $0x30] sm:$0xff] %vm1744, %v1661
        %1752 = vst.msk [vmem:[#allocation3 + $0x38] sm:$0xff] %vm1744, %v1663
        %1753 = vst.msk [vmem:[#allocation3 + $0x40] sm:$0xff] %vm1744, %v1665
        %1754 = vst.msk [vmem:[#allocation3 + $0x48] sm:$0xff] %vm1744, %v1667
        %1755 = vst.msk [vmem:[#allocation3 + $0x50] sm:$0xff] %vm1744, %v1669
        %1756 = vst.msk [vmem:[#allocation3 + $0x58] sm:$0xff] %vm1744, %v1671
        %1757 = vst.msk [vmem:[#allocation3 + $0x60] sm:$0xff] %vm1744, %v1673
        %1758 = vst.msk [vmem:[#allocation3 + $0x68] sm:$0xff] %vm1744, %v1675
        %1759 = vst.msk [vmem:[#allocation3 + $0x70] sm:$0xff] %vm1744, %v1677
        %1760 = vst.msk [vmem:[#allocation3 + $0x78] sm:$0xff] %vm1744, %v1679
        %1761 = vst.msk [vmem:[#allocation3 + $0x80] sm:$0xff] %vm1744, %v1681
        %1762 = vst.msk [vmem:[#allocation3 + $0x88] sm:$0xff] %vm1744, %v1683
        %1763 = vst.msk [vmem:[#allocation3 + $0x90] sm:$0xff] %vm1744, %v1685
        %1764 = vst.msk [vmem:[#allocation3 + $0x98] sm:$0xff] %vm1744, %v1687
        %1765 = vst.msk [vmem:[#allocation3 + $0xa0] sm:$0xff] %vm1744, %v1689
        %1766 = vst.msk [vmem:[#allocation3 + $0xa8] sm:$0xff] %vm1744, %v1691
        %1767 = vst.msk [vmem:[#allocation3 + $0xb0] sm:$0xff] %vm1744, %v1693
        %1768 = vst.msk [vmem:[#allocation3 + $0xb8] sm:$0xff] %vm1744, %v1695
        %1769 = vst.msk [vmem:[#allocation3 + $0xc0] sm:$0xff] %vm1744, %v1697
        %1770 = vst.msk [vmem:[#allocation3 + $0xc8] sm:$0xff] %vm1744, %v1699
        %1771 = vst.msk [vmem:[#allocation3 + $0xd0] sm:$0xff] %vm1744, %v1701
        %1772 = vst.msk [vmem:[#allocation3 + $0xd8] sm:$0xff] %vm1744, %v1703
        %1773 = vst.msk [vmem:[#allocation3 + $0xe0] sm:$0xff] %vm1744, %v1705
        %1774 = vst.msk [vmem:[#allocation3 + $0xe8] sm:$0xff] %vm1744, %v1707
        %1775 = vst.msk [vmem:[#allocation3 + $0xf0] sm:$0xff] %vm1744, %v1709
        %1776 = vst.msk [vmem:[#allocation3 + $0xf8] sm:$0xff] %vm1744, %v1711
        %v1777 = vld [vmem:[%s1390 + $0x9] sm:$0xff]
        %v1778 = vld [vmem:[%s1390 + $0x11] sm:$0xff]
        %v1779 = vld [vmem:[%s1390 + $0x29] sm:$0xff]
        %v1780 = vld [vmem:[%s1390 + $0x31] sm:$0xff]
        %v1781 = vld [vmem:[%s1390 + $0x49] sm:$0xff]
        %v1782 = vld [vmem:[%s1390 + $0x51] sm:$0xff]
        %v1783 = vld [vmem:[%s1390 + $0x69] sm:$0xff]
        %v1784 = vld [vmem:[%s1390 + $0x71] sm:$0xff]
        %v1785 = vld [vmem:[%s1390 + $0x89] sm:$0xff]
        %v1786 = vld [vmem:[%s1390 + $0x91] sm:$0xff]
        %v1787 = vld [vmem:[%s1390 + $0xa9] sm:$0xff]
        %v1788 = vld [vmem:[%s1390 + $0xb1] sm:$0xff]
        %v1789 = vld [vmem:[%s1390 + $0xc9] sm:$0xff]
        %v1790 = vld [vmem:[%s1390 + $0xd1] sm:$0xff]
        %v1791 = vld [vmem:[%s1390 + $0xe9] sm:$0xff]
        %v1792 = vld [vmem:[%s1390 + $0xf1] sm:$0xff]
        %v1793 = vld [vmem:[%s1390 + $0x109] sm:$0xff]
        %v1794 = vld [vmem:[%s1390 + $0x111] sm:$0xff]
        %v1795 = vld [vmem:[%s1390 + $0x129] sm:$0xff]
        %v1796 = vld [vmem:[%s1390 + $0x131] sm:$0xff]
        %v1797 = vld [vmem:[%s1390 + $0x149] sm:$0xff]
        %v1798 = vld [vmem:[%s1390 + $0x151] sm:$0xff]
        %v1799 = vld [vmem:[%s1390 + $0x169] sm:$0xff]
        %v1800 = vld [vmem:[%s1390 + $0x171] sm:$0xff]
        %v1801 = vld [vmem:[%s1390 + $0x189] sm:$0xff]
        %v1802 = vld [vmem:[%s1390 + $0x191] sm:$0xff]
        %v1803 = vld [vmem:[%s1390 + $0x1a9] sm:$0xff]
        %v1804 = vld [vmem:[%s1390 + $0x1b1] sm:$0xff]
        %v1805 = vld [vmem:[%s1390 + $0x1c9] sm:$0xff]
        %v1806 = vld [vmem:[%s1390 + $0x1d1] sm:$0xff]
        %v1807 = vld [vmem:[%s1390 + $0x1e9] sm:$0xff]
        %v1808 = vld [vmem:[%s1390 + $0x1f1] sm:$0xff]
        %1841 = vrot.lane.b32.xlu0 %v1777, 32
        %v1842 = vpop.permute.xlu0 %1841
        %1843 = vrot.lane.b32.xlu0 %v1778, 32
        %v1844 = vpop.permute.xlu0 %1843
        %1845 = vrot.lane.b32.xlu0 %v1779, 32
        %v1846 = vpop.permute.xlu0 %1845
        %1847 = vrot.lane.b32.xlu0 %v1780, 32
        %v1848 = vpop.permute.xlu0 %1847
        %1849 = vrot.lane.b32.xlu0 %v1781, 32
        %v1850 = vpop.permute.xlu0 %1849
        %1851 = vrot.lane.b32.xlu0 %v1782, 32
        %v1852 = vpop.permute.xlu0 %1851
        %1853 = vrot.lane.b32.xlu0 %v1783, 32
        %v1854 = vpop.permute.xlu0 %1853
        %1855 = vrot.lane.b32.xlu0 %v1784, 32
        %v1856 = vpop.permute.xlu0 %1855
        %1857 = vrot.lane.b32.xlu0 %v1785, 32
        %v1858 = vpop.permute.xlu0 %1857
        %1859 = vrot.lane.b32.xlu0 %v1786, 32
        %v1860 = vpop.permute.xlu0 %1859
        %1861 = vrot.lane.b32.xlu0 %v1787, 32
        %v1862 = vpop.permute.xlu0 %1861
        %1863 = vrot.lane.b32.xlu0 %v1788, 32
        %v1864 = vpop.permute.xlu0 %1863
        %1865 = vrot.lane.b32.xlu0 %v1789, 32
        %v1866 = vpop.permute.xlu0 %1865
        %1867 = vrot.lane.b32.xlu0 %v1790, 32
        %v1868 = vpop.permute.xlu0 %1867
        %1869 = vrot.lane.b32.xlu0 %v1791, 32
        %v1870 = vpop.permute.xlu0 %1869
        %1871 = vrot.lane.b32.xlu0 %v1792, 32
        %v1872 = vpop.permute.xlu0 %1871
        %1873 = vrot.lane.b32.xlu0 %v1793, 32
        %v1874 = vpop.permute.xlu0 %1873
        %1875 = vrot.lane.b32.xlu0 %v1794, 32
        %v1876 = vpop.permute.xlu0 %1875
        %1877 = vrot.lane.b32.xlu0 %v1795, 32
        %v1878 = vpop.permute.xlu0 %1877
        %1879 = vrot.lane.b32.xlu0 %v1796, 32
        %v1880 = vpop.permute.xlu0 %1879
        %1881 = vrot.lane.b32.xlu0 %v1797, 32
        %v1882 = vpop.permute.xlu0 %1881
        %1883 = vrot.lane.b32.xlu0 %v1798, 32
        %v1884 = vpop.permute.xlu0 %1883
        %1885 = vrot.lane.b32.xlu0 %v1799, 32
        %v1886 = vpop.permute.xlu0 %1885
        %1887 = vrot.lane.b32.xlu0 %v1800, 32
        %v1888 = vpop.permute.xlu0 %1887
        %1889 = vrot.lane.b32.xlu0 %v1801, 32
        %v1890 = vpop.permute.xlu0 %1889
        %1891 = vrot.lane.b32.xlu0 %v1802, 32
        %v1892 = vpop.permute.xlu0 %1891
        %1893 = vrot.lane.b32.xlu0 %v1803, 32
        %v1894 = vpop.permute.xlu0 %1893
        %1895 = vrot.lane.b32.xlu0 %v1804, 32
        %v1896 = vpop.permute.xlu0 %1895
        %1897 = vrot.lane.b32.xlu0 %v1805, 32
        %v1898 = vpop.permute.xlu0 %1897
        %1899 = vrot.lane.b32.xlu0 %v1806, 32
        %v1900 = vpop.permute.xlu0 %1899
        %1901 = vrot.lane.b32.xlu0 %v1807, 32
        %v1902 = vpop.permute.xlu0 %1901
        %1903 = vrot.lane.b32.xlu0 %v1808, 32
        %v1904 = vpop.permute.xlu0 %1903
        %vm1937 = vcmask 294144
        %1938 = vst.msk [vmem:[#allocation3] sm:$0xff] %vm1937, %v1842
        %1939 = vst.msk [vmem:[#allocation3 + $0x8] sm:$0xff] %vm1937, %v1844
        %1940 = vst.msk [vmem:[#allocation3 + $0x10] sm:$0xff] %vm1937, %v1846
        %1941 = vst.msk [vmem:[#allocation3 + $0x18] sm:$0xff] %vm1937, %v1848
        %1942 = vst.msk [vmem:[#allocation3 + $0x20] sm:$0xff] %vm1937, %v1850
        %1943 = vst.msk [vmem:[#allocation3 + $0x28] sm:$0xff] %vm1937, %v1852
        %1944 = vst.msk [vmem:[#allocation3 + $0x30] sm:$0xff] %vm1937, %v1854
        %1945 = vst.msk [vmem:[#allocation3 + $0x38] sm:$0xff] %vm1937, %v1856
        %1946 = vst.msk [vmem:[#allocation3 + $0x40] sm:$0xff] %vm1937, %v1858
        %1947 = vst.msk [vmem:[#allocation3 + $0x48] sm:$0xff] %vm1937, %v1860
        %1948 = vst.msk [vmem:[#allocation3 + $0x50] sm:$0xff] %vm1937, %v1862
        %1949 = vst.msk [vmem:[#allocation3 + $0x58] sm:$0xff] %vm1937, %v1864
        %1950 = vst.msk [vmem:[#allocation3 + $0x60] sm:$0xff] %vm1937, %v1866
        %1951 = vst.msk [vmem:[#allocation3 + $0x68] sm:$0xff] %vm1937, %v1868
        %1952 = vst.msk [vmem:[#allocation3 + $0x70] sm:$0xff] %vm1937, %v1870
        %1953 = vst.msk [vmem:[#allocation3 + $0x78] sm:$0xff] %vm1937, %v1872
        %1954 = vst.msk [vmem:[#allocation3 + $0x80] sm:$0xff] %vm1937, %v1874
        %1955 = vst.msk [vmem:[#allocation3 + $0x88] sm:$0xff] %vm1937, %v1876
        %1956 = vst.msk [vmem:[#allocation3 + $0x90] sm:$0xff] %vm1937, %v1878
        %1957 = vst.msk [vmem:[#allocation3 + $0x98] sm:$0xff] %vm1937, %v1880
        %1958 = vst.msk [vmem:[#allocation3 + $0xa0] sm:$0xff] %vm1937, %v1882
        %1959 = vst.msk [vmem:[#allocation3 + $0xa8] sm:$0xff] %vm1937, %v1884
        %1960 = vst.msk [vmem:[#allocation3 + $0xb0] sm:$0xff] %vm1937, %v1886
        %1961 = vst.msk [vmem:[#allocation3 + $0xb8] sm:$0xff] %vm1937, %v1888
        %1962 = vst.msk [vmem:[#allocation3 + $0xc0] sm:$0xff] %vm1937, %v1890
        %1963 = vst.msk [vmem:[#allocation3 + $0xc8] sm:$0xff] %vm1937, %v1892
        %1964 = vst.msk [vmem:[#allocation3 + $0xd0] sm:$0xff] %vm1937, %v1894
        %1965 = vst.msk [vmem:[#allocation3 + $0xd8] sm:$0xff] %vm1937, %v1896
        %1966 = vst.msk [vmem:[#allocation3 + $0xe0] sm:$0xff] %vm1937, %v1898
        %1967 = vst.msk [vmem:[#allocation3 + $0xe8] sm:$0xff] %vm1937, %v1900
        %1968 = vst.msk [vmem:[#allocation3 + $0xf0] sm:$0xff] %vm1937, %v1902
        %1969 = vst.msk [vmem:[#allocation3 + $0xf8] sm:$0xff] %vm1937, %v1904
        %v1970 = vld [vmem:[#allocation3] sm:$0xff]
        %v1971 = vld [vmem:[#allocation3 + $0x8] sm:$0xff]
        %v1972 = vld [vmem:[#allocation3 + $0x10] sm:$0xff]
        %v1973 = vld [vmem:[#allocation3 + $0x18] sm:$0xff]
        %v1974 = vld [vmem:[#allocation3 + $0x20] sm:$0xff]
        %v1975 = vld [vmem:[#allocation3 + $0x28] sm:$0xff]
        %v1976 = vld [vmem:[#allocation3 + $0x30] sm:$0xff]
        %v1977 = vld [vmem:[#allocation3 + $0x38] sm:$0xff]
        %v1978 = vld [vmem:[#allocation3 + $0x40] sm:$0xff]
        %v1979 = vld [vmem:[#allocation3 + $0x48] sm:$0xff]
        %v1980 = vld [vmem:[#allocation3 + $0x50] sm:$0xff]
        %v1981 = vld [vmem:[#allocation3 + $0x58] sm:$0xff]
        %v1982 = vld [vmem:[#allocation3 + $0x60] sm:$0xff]
        %v1983 = vld [vmem:[#allocation3 + $0x68] sm:$0xff]
        %v1984 = vld [vmem:[#allocation3 + $0x70] sm:$0xff]
        %v1985 = vld [vmem:[#allocation3 + $0x78] sm:$0xff]
        %v1986 = vld [vmem:[#allocation3 + $0x80] sm:$0xff]
        %v1987 = vld [vmem:[#allocation3 + $0x88] sm:$0xff]
        %v1988 = vld [vmem:[#allocation3 + $0x90] sm:$0xff]
        %v1989 = vld [vmem:[#allocation3 + $0x98] sm:$0xff]
        %v1990 = vld [vmem:[#allocation3 + $0xa0] sm:$0xff]
        %v1991 = vld [vmem:[#allocation3 + $0xa8] sm:$0xff]
        %v1992 = vld [vmem:[#allocation3 + $0xb0] sm:$0xff]
        %v1993 = vld [vmem:[#allocation3 + $0xb8] sm:$0xff]
        %v1994 = vld [vmem:[#allocation3 + $0xc0] sm:$0xff]
        %v1995 = vld [vmem:[#allocation3 + $0xc8] sm:$0xff]
        %v1996 = vld [vmem:[#allocation3 + $0xd0] sm:$0xff]
        %v1997 = vld [vmem:[#allocation3 + $0xd8] sm:$0xff]
        %v1998 = vld [vmem:[#allocation3 + $0xe0] sm:$0xff]
        %v1999 = vld [vmem:[#allocation3 + $0xe8] sm:$0xff]
        %v2000 = vld [vmem:[#allocation3 + $0xf0] sm:$0xff]
        %v2001 = vld [vmem:[#allocation3 + $0xf8] sm:$0xff]
        %v2002 = vld [vmem:[%s1] sm:$0xff]
        %v2003 = vld [vmem:[%s1 + $0x8] sm:$0xff]
        %v2004 = vld [vmem:[%s1 + $0x10] sm:$0xff]
        %v2005 = vld [vmem:[%s1 + $0x18] sm:$0xff]
        %v2006 = vld [vmem:[%s1 + $0x20] sm:$0xf]
        %v2007 = vld [vmem:[%s2] sm:$0x1]
        %v2009 = vlaneseq
        %v2010 = vshrl.u32 %v2009, 7
        %v2011 = vsub.s32 0, %v2010
        %v2012 = vrot.slane %v2007, %v2011
        %vm2014 = vcmask 293888
        %v2016 = vsel %vm2014, %v1970, 0
        %v2019 = vsel %vm2014, %v1971, 0
        %v2022 = vsel %vm2014, %v1972, 0
        %v2025 = vsel %vm2014, %v1973, 0
        %v2028 = vsel %vm2014, %v1974, 0
        %v2031 = vsel %vm2014, %v1975, 0
        %v2034 = vsel %vm2014, %v1976, 0
        %v2037 = vsel %vm2014, %v1977, 0
        %v2040 = vsel %vm2014, %v1978, 0
        %v2043 = vsel %vm2014, %v1979, 0
        %v2046 = vsel %vm2014, %v1980, 0
        %v2049 = vsel %vm2014, %v1981, 0
        %v2052 = vsel %vm2014, %v1982, 0
        %v2055 = vsel %vm2014, %v1983, 0
        %v2058 = vsel %vm2014, %v1984, 0
        %v2061 = vsel %vm2014, %v1985, 0
        %v2064 = vsel %vm2014, %v1986, 0
        %v2067 = vsel %vm2014, %v1987, 0
        %v2070 = vsel %vm2014, %v1988, 0
        %v2073 = vsel %vm2014, %v1989, 0
        %v2076 = vsel %vm2014, %v1990, 0
        %v2079 = vsel %vm2014, %v1991, 0
        %v2082 = vsel %vm2014, %v1992, 0
        %v2085 = vsel %vm2014, %v1993, 0
        %v2088 = vsel %vm2014, %v1994, 0
        %v2091 = vsel %vm2014, %v1995, 0
        %v2094 = vsel %vm2014, %v1996, 0
        %v2097 = vsel %vm2014, %v1997, 0
        %v2100 = vsel %vm2014, %v1998, 0
        %v2103 = vsel %vm2014, %v1999, 0
        %v2106 = vsel %vm2014, %v2000, 0
        %v2109 = vsel %vm2014, %v2001, 0
        %vm2111 = vcmask 1043456
        %v2113 = vsel %vm2111, %v2006, 0
        %2115 = vmatprep.subr.mxu0 0.0
        %2116 = vmatpush1.msra.mxu0 %v2002
        %2117 = vmatprep.subr.mxu0 0.0
        %2118 = vmatpush1.msra.mxu0 %v2003
        %2119 = vmatprep.subr.mxu0 0.0
        %2120 = vmatpush1.msra.mxu0 %v2004
        %2121 = vmatprep.subr.mxu0 0.0
        %2122 = vmatpush1.msra.mxu0 %v2005
        %2123 = vmatprep.subr.mxu0 0.0
        %2124 = vmatpush1.msra.mxu0 %v2113
        %2125 = vmatprep.subr.mxu0 0.0
        %2126 = vmatpush1.msra.mxu0 0.0
        %2127 = vmatprep.subr.mxu0 0.0
        %2128 = vmatpush1.msra.mxu0 0.0
        %2129 = vmatprep.subr.mxu0 0.0
        %2130 = vmatpush1.msra.mxu0 0.0
        %2131 = vmatprep.subr.mxu0 0.0
        %2132 = vmatpush1.msra.mxu0 0.0
        %2133 = vmatprep.subr.mxu0 0.0
        %2134 = vmatpush1.msra.mxu0 0.0
        %2135 = vmatprep.subr.mxu0 0.0
        %2136 = vmatpush1.msra.mxu0 0.0
        %2137 = vmatprep.subr.mxu0 0.0
        %2138 = vmatpush1.msra.mxu0 0.0
        %2139 = vmatprep.subr.mxu0 0.0
        %2140 = vmatpush1.msra.mxu0 0.0
        %2141 = vmatprep.subr.mxu0 0.0
        %2142 = vmatpush1.msra.mxu0 0.0
        %2143 = vmatprep.subr.mxu0 0.0
        %2144 = vmatpush1.msra.mxu0 0.0
        %2145 = vmatprep.subr.mxu0 0.0
        %2146 = vmatpush1.msra.mxu0 0.0
        %2147 = vmatprep.subr.mxu0 0.0
        %2148 = vmatpush1.msra.mxu0 0.0
        %2149 = vmatprep.subr.mxu0 0.0
        %2150 = vmatpush1.msra.mxu0 0.0
        %2151 = vmatprep.subr.mxu0 0.0
        %2152 = vmatpush1.msra.mxu0 0.0
        %2153 = vmatprep.subr.mxu0 0.0
        %2154 = vmatpush1.msra.mxu0 0.0
        %2155 = vmatprep.subr.mxu0 0.0
        %2156 = vmatpush1.msra.mxu0 0.0
        %2157 = vmatprep.subr.mxu0 0.0
        %2158 = vmatpush1.msra.mxu0 0.0
        %2159 = vmatprep.subr.mxu0 0.0
        %2160 = vmatpush1.msra.mxu0 0.0
        %2161 = vmatprep.subr.mxu0 0.0
        %2162 = vmatpush1.msra.mxu0 0.0
        %2163 = vmatprep.subr.mxu0 0.0
        %2164 = vmatpush1.msra.mxu0 0.0
        %2165 = vmatprep.subr.mxu0 0.0
        %2166 = vmatpush1.msra.mxu0 0.0
        %2167 = vmatprep.subr.mxu0 0.0
        %2168 = vmatpush1.msra.mxu0 0.0
        %2169 = vmatprep.subr.mxu0 0.0
        %2170 = vmatpush1.msra.mxu0 0.0
        %2171 = vmatprep.subr.mxu0 0.0
        %2172 = vmatpush1.msra.mxu0 0.0
        %2173 = vmatprep.subr.mxu0 0.0
        %2174 = vmatpush1.msra.mxu0 0.0
        %2175 = vmatprep.subr.mxu0 0.0
        %2176 = vmatpush1.msra.mxu0 0.0
        %2177 = vmatprep.subr.mxu0 0.0
        %2178 = vmatpush1.msra.mxu0 0.0
        %2179 = vmatprep.mubr.f32.mxu0 0.0
        %2180 = vmatmul.mubr.f32.gmra.mrb[0].mxu0 %v2016
        %v2181 = vpop.f32.mrb[0].mxu0
        %v2182 = vadd.f32 %v2012, %v2181
        %v2183 = vpop.f32.mrb[0].mxu0
        %2184 = vmatprep.mubr.f32.mxu0 0.0
        %2185 = vmatmul.mubr.f32.gmra.mrb[0].mxu0 %v2019
        %v2186 = vpop.f32.mrb[0].mxu0
        %v2187 = vadd.f32 %v2012, %v2186
        %v2188 = vpop.f32.mrb[0].mxu0
        %2189 = vmatprep.mubr.f32.mxu0 0.0
        %2190 = vmatmul.mubr.f32.gmra.mrb[0].mxu0 %v2022
        %v2191 = vpop.f32.mrb[0].mxu0
        %v2192 = vadd.f32 %v2012, %v2191
        %v2193 = vpop.f32.mrb[0].mxu0
        %2194 = vmatprep.mubr.f32.mxu0 0.0
        %2195 = vmatmul.mubr.f32.gmra.mrb[0].mxu0 %v2025
        %v2196 = vpop.f32.mrb[0].mxu0
        %v2197 = vadd.f32 %v2012, %v2196
        %v2198 = vpop.f32.mrb[0].mxu0
        %2199 = vmatprep.mubr.f32.mxu0 0.0
        %2200 = vmatmul.mubr.f32.gmra.mrb[0].mxu0 %v2028
        %v2201 = vpop.f32.mrb[0].mxu0
        %v2202 = vadd.f32 %v2012, %v2201
        %v2203 = vpop.f32.mrb[0].mxu0
        %2204 = vmatprep.mubr.f32.mxu0 0.0
        %2205 = vmatmul.mubr.f32.gmra.mrb[0].mxu0 %v2031
        %v2206 = vpop.f32.mrb[0].mxu0
        %v2207 = vadd.f32 %v2012, %v2206
        %v2208 = vpop.f32.mrb[0].mxu0
        %2209 = vmatprep.mubr.f32.mxu0 0.0
        %2210 = vmatmul.mubr.f32.gmra.mrb[0].mxu0 %v2034
        %v2211 = vpop.f32.mrb[0].mxu0
        %v2212 = vadd.f32 %v2012, %v2211
        %v2213 = vpop.f32.mrb[0].mxu0
        %2214 = vmatprep.mubr.f32.mxu0 0.0
        %2215 = vmatmul.mubr.f32.gmra.mrb[0].mxu0 %v2037
        %v2216 = vpop.f32.mrb[0].mxu0
        %v2217 = vadd.f32 %v2012, %v2216
        %v2218 = vpop.f32.mrb[0].mxu0
        %2219 = vmatprep.mubr.f32.mxu0 0.0
        %2220 = vmatmul.mubr.f32.gmra.mrb[0].mxu0 %v2040
        %v2221 = vpop.f32.mrb[0].mxu0
        %v2222 = vadd.f32 %v2012, %v2221
        %v2223 = vpop.f32.mrb[0].mxu0
        %2224 = vmatprep.mubr.f32.mxu0 0.0
        %2225 = vmatmul.mubr.f32.gmra.mrb[0].mxu0 %v2043
        %v2226 = vpop.f32.mrb[0].mxu0
        %v2227 = vadd.f32 %v2012, %v2226
        %v2228 = vpop.f32.mrb[0].mxu0
        %2229 = vmatprep.mubr.f32.mxu0 0.0
        %2230 = vmatmul.mubr.f32.gmra.mrb[0].mxu0 %v2046
        %v2231 = vpop.f32.mrb[0].mxu0
        %v2232 = vadd.f32 %v2012, %v2231
        %v2233 = vpop.f32.mrb[0].mxu0
        %2234 = vmatprep.mubr.f32.mxu0 0.0
        %2235 = vmatmul.mubr.f32.gmra.mrb[0].mxu0 %v2049
        %v2236 = vpop.f32.mrb[0].mxu0
        %v2237 = vadd.f32 %v2012, %v2236
        %v2238 = vpop.f32.mrb[0].mxu0
        %2239 = vmatprep.mubr.f32.mxu0 0.0
        %2240 = vmatmul.mubr.f32.gmra.mrb[0].mxu0 %v2052
        %v2241 = vpop.f32.mrb[0].mxu0
        %v2242 = vadd.f32 %v2012, %v2241
        %v2243 = vpop.f32.mrb[0].mxu0
        %2244 = vmatprep.mubr.f32.mxu0 0.0
        %2245 = vmatmul.mubr.f32.gmra.mrb[0].mxu0 %v2055
        %v2246 = vpop.f32.mrb[0].mxu0
        %v2247 = vadd.f32 %v2012, %v2246
        %v2248 = vpop.f32.mrb[0].mxu0
        %2249 = vmatprep.mubr.f32.mxu0 0.0
        %2250 = vmatmul.mubr.f32.gmra.mrb[0].mxu0 %v2058
        %v2251 = vpop.f32.mrb[0].mxu0
        %v2252 = vadd.f32 %v2012, %v2251
        %v2253 = vpop.f32.mrb[0].mxu0
        %2254 = vmatprep.mubr.f32.mxu0 0.0
        %2255 = vmatmul.mubr.f32.gmra.mrb[0].mxu0 %v2061
        %v2256 = vpop.f32.mrb[0].mxu0
        %v2257 = vadd.f32 %v2012, %v2256
        %v2258 = vpop.f32.mrb[0].mxu0
        %2259 = vmatprep.mubr.f32.mxu0 0.0
        %2260 = vmatmul.mubr.f32.gmra.mrb[0].mxu0 %v2064
        %v2261 = vpop.f32.mrb[0].mxu0
        %v2262 = vadd.f32 %v2012, %v2261
        %v2263 = vpop.f32.mrb[0].mxu0
        %2264 = vmatprep.mubr.f32.mxu0 0.0
        %2265 = vmatmul.mubr.f32.gmra.mrb[0].mxu0 %v2067
        %v2266 = vpop.f32.mrb[0].mxu0
        %v2267 = vadd.f32 %v2012, %v2266
        %v2268 = vpop.f32.mrb[0].mxu0
        %2269 = vmatprep.mubr.f32.mxu0 0.0
        %2270 = vmatmul.mubr.f32.gmra.mrb[0].mxu0 %v2070
        %v2271 = vpop.f32.mrb[0].mxu0
        %v2272 = vadd.f32 %v2012, %v2271
        %v2273 = vpop.f32.mrb[0].mxu0
        %2274 = vmatprep.mubr.f32.mxu0 0.0
        %2275 = vmatmul.mubr.f32.gmra.mrb[0].mxu0 %v2073
        %v2276 = vpop.f32.mrb[0].mxu0
        %v2277 = vadd.f32 %v2012, %v2276
        %v2278 = vpop.f32.mrb[0].mxu0
        %2279 = vmatprep.mubr.f32.mxu0 0.0
        %2280 = vmatmul.mubr.f32.gmra.mrb[0].mxu0 %v2076
        %v2281 = vpop.f32.mrb[0].mxu0
        %v2282 = vadd.f32 %v2012, %v2281
        %v2283 = vpop.f32.mrb[0].mxu0
        %2284 = vmatprep.mubr.f32.mxu0 0.0
        %2285 = vmatmul.mubr.f32.gmra.mrb[0].mxu0 %v2079
        %v2286 = vpop.f32.mrb[0].mxu0
        %v2287 = vadd.f32 %v2012, %v2286
        %v2288 = vpop.f32.mrb[0].mxu0
        %2289 = vmatprep.mubr.f32.mxu0 0.0
        %2290 = vmatmul.mubr.f32.gmra.mrb[0].mxu0 %v2082
        %v2291 = vpop.f32.mrb[0].mxu0
        %v2292 = vadd.f32 %v2012, %v2291
        %v2293 = vpop.f32.mrb[0].mxu0
        %2294 = vmatprep.mubr.f32.mxu0 0.0
        %2295 = vmatmul.mubr.f32.gmra.mrb[0].mxu0 %v2085
        %v2296 = vpop.f32.mrb[0].mxu0
        %v2297 = vadd.f32 %v2012, %v2296
        %v2298 = vpop.f32.mrb[0].mxu0
        %2299 = vmatprep.mubr.f32.mxu0 0.0
        %2300 = vmatmul.mubr.f32.gmra.mrb[0].mxu0 %v2088
        %v2301 = vpop.f32.mrb[0].mxu0
        %v2302 = vadd.f32 %v2012, %v2301
        %v2303 = vpop.f32.mrb[0].mxu0
        %2304 = vmatprep.mubr.f32.mxu0 0.0
        %2305 = vmatmul.mubr.f32.gmra.mrb[0].mxu0 %v2091
        %v2306 = vpop.f32.mrb[0].mxu0
        %v2307 = vadd.f32 %v2012, %v2306
        %v2308 = vpop.f32.mrb[0].mxu0
        %2309 = vmatprep.mubr.f32.mxu0 0.0
        %2310 = vmatmul.mubr.f32.gmra.mrb[0].mxu0 %v2094
        %v2311 = vpop.f32.mrb[0].mxu0
        %v2312 = vadd.f32 %v2012, %v2311
        %v2313 = vpop.f32.mrb[0].mxu0
        %2314 = vmatprep.mubr.f32.mxu0 0.0
        %2315 = vmatmul.mubr.f32.gmra.mrb[0].mxu0 %v2097
        %v2316 = vpop.f32.mrb[0].mxu0
        %v2317 = vadd.f32 %v2012, %v2316
        %v2318 = vpop.f32.mrb[0].mxu0
        %2319 = vmatprep.mubr.f32.mxu0 0.0
        %2320 = vmatmul.mubr.f32.gmra.mrb[0].mxu0 %v2100
        %v2321 = vpop.f32.mrb[0].mxu0
        %v2322 = vadd.f32 %v2012, %v2321
        %v2323 = vpop.f32.mrb[0].mxu0
        %2324 = vmatprep.mubr.f32.mxu0 0.0
        %2325 = vmatmul.mubr.f32.gmra.mrb[0].mxu0 %v2103
        %v2326 = vpop.f32.mrb[0].mxu0
        %v2327 = vadd.f32 %v2012, %v2326
        %v2328 = vpop.f32.mrb[0].mxu0
        %2329 = vmatprep.mubr.f32.mxu0 0.0
        %2330 = vmatmul.mubr.f32.gmra.mrb[0].mxu0 %v2106
        %v2331 = vpop.f32.mrb[0].mxu0
        %v2332 = vadd.f32 %v2012, %v2331
        %v2333 = vpop.f32.mrb[0].mxu0
        %2334 = vmatprep.mubr.f32.mxu0 0.0
        %2335 = vmatmul.mubr.f32.gmra.mrb[0].mxu0 %v2109
        %v2336 = vpop.f32.mrb[0].mxu0
        %v2337 = vadd.f32 %v2012, %v2336
        %v2338 = vpop.f32.mrb[0].mxu0
        %2339 = vdwg.mxu0
        %v2340 = vmax.f32 %v2182, 0.0
        %v2341 = vmax.f32 %v2187, 0.0
        %v2342 = vmax.f32 %v2192, 0.0
        %v2343 = vmax.f32 %v2197, 0.0
        %v2344 = vmax.f32 %v2202, 0.0
        %v2345 = vmax.f32 %v2207, 0.0
        %v2346 = vmax.f32 %v2212, 0.0
        %v2347 = vmax.f32 %v2217, 0.0
        %v2348 = vmax.f32 %v2222, 0.0
        %v2349 = vmax.f32 %v2227, 0.0
        %v2350 = vmax.f32 %v2232, 0.0
        %v2351 = vmax.f32 %v2237, 0.0
        %v2352 = vmax.f32 %v2242, 0.0
        %v2353 = vmax.f32 %v2247, 0.0
        %v2354 = vmax.f32 %v2252, 0.0
        %v2355 = vmax.f32 %v2257, 0.0
        %v2356 = vmax.f32 %v2262, 0.0
        %v2357 = vmax.f32 %v2267, 0.0
        %v2358 = vmax.f32 %v2272, 0.0
        %v2359 = vmax.f32 %v2277, 0.0
        %v2360 = vmax.f32 %v2282, 0.0
        %v2361 = vmax.f32 %v2287, 0.0
        %v2362 = vmax.f32 %v2292, 0.0
        %v2363 = vmax.f32 %v2297, 0.0
        %v2364 = vmax.f32 %v2302, 0.0
        %v2365 = vmax.f32 %v2307, 0.0
        %v2366 = vmax.f32 %v2312, 0.0
        %v2367 = vmax.f32 %v2317, 0.0
        %v2368 = vmax.f32 %v2322, 0.0
        %v2369 = vmax.f32 %v2327, 0.0
        %v2370 = vmax.f32 %v2332, 0.0
        %v2371 = vmax.f32 %v2337, 0.0
        %vm2372 = vcmask 64512
        %2373 = vst.msk [vmem:[#allocation4] sm:$0xff] %vm2372, 0.0
        %2374 = vst.msk [vmem:[#allocation4 + $0x8] sm:$0xff] %vm2372, 0.0
        %2375 = vst.msk [vmem:[#allocation4 + $0x10] sm:$0xff] %vm2372, 0.0
        %2376 = vst.msk [vmem:[#allocation4 + $0x18] sm:$0xff] %vm2372, 0.0
        %2377 = vst.msk [vmem:[#allocation4 + $0x20] sm:$0xff] %vm2372, 0.0
        %2378 = vst.msk [vmem:[#allocation4 + $0x28] sm:$0xff] %vm2372, 0.0
        %2379 = vst.msk [vmem:[#allocation4 + $0x30] sm:$0xff] %vm2372, 0.0
        %2380 = vst.msk [vmem:[#allocation4 + $0x38] sm:$0xff] %vm2372, 0.0
        %2381 = vst.msk [vmem:[#allocation4 + $0x40] sm:$0xff] %vm2372, 0.0
        %2382 = vst.msk [vmem:[#allocation4 + $0x48] sm:$0xff] %vm2372, 0.0
        %2383 = vst.msk [vmem:[#allocation4 + $0x50] sm:$0xff] %vm2372, 0.0
        %2384 = vst.msk [vmem:[#allocation4 + $0x58] sm:$0xff] %vm2372, 0.0
        %2385 = vst.msk [vmem:[#allocation4 + $0x60] sm:$0xff] %vm2372, 0.0
        %2386 = vst.msk [vmem:[#allocation4 + $0x68] sm:$0xff] %vm2372, 0.0
        %2387 = vst.msk [vmem:[#allocation4 + $0x70] sm:$0xff] %vm2372, 0.0
        %2388 = vst.msk [vmem:[#allocation4 + $0x78] sm:$0xff] %vm2372, 0.0
        %2389 = vst.msk [vmem:[#allocation4 + $0x80] sm:$0xff] %vm2372, 0.0
        %2390 = vst.msk [vmem:[#allocation4 + $0x88] sm:$0xff] %vm2372, 0.0
        %2391 = vst.msk [vmem:[#allocation4 + $0x90] sm:$0xff] %vm2372, 0.0
        %2392 = vst.msk [vmem:[#allocation4 + $0x98] sm:$0xff] %vm2372, 0.0
        %2393 = vst.msk [vmem:[#allocation4 + $0xa0] sm:$0xff] %vm2372, 0.0
        %2394 = vst.msk [vmem:[#allocation4 + $0xa8] sm:$0xff] %vm2372, 0.0
        %2395 = vst.msk [vmem:[#allocation4 + $0xb0] sm:$0xff] %vm2372, 0.0
        %2396 = vst.msk [vmem:[#allocation4 + $0xb8] sm:$0xff] %vm2372, 0.0
        %2397 = vst.msk [vmem:[#allocation4 + $0xc0] sm:$0xff] %vm2372, 0.0
        %2398 = vst.msk [vmem:[#allocation4 + $0xc8] sm:$0xff] %vm2372, 0.0
        %2399 = vst.msk [vmem:[#allocation4 + $0xd0] sm:$0xff] %vm2372, 0.0
        %2400 = vst.msk [vmem:[#allocation4 + $0xd8] sm:$0xff] %vm2372, 0.0
        %2401 = vst.msk [vmem:[#allocation4 + $0xe0] sm:$0xff] %vm2372, 0.0
        %2402 = vst.msk [vmem:[#allocation4 + $0xe8] sm:$0xff] %vm2372, 0.0
        %2403 = vst.msk [vmem:[#allocation4 + $0xf0] sm:$0xff] %vm2372, 0.0
        %2404 = vst.msk [vmem:[#allocation4 + $0xf8] sm:$0xff] %vm2372, 0.0
        %2405 = vst.msk [vmem:[#allocation4 + $0x100] sm:$0xff] %vm2372, 0.0
        %2406 = vst.msk [vmem:[#allocation4 + $0x108] sm:$0xff] %vm2372, 0.0
        %2407 = vst.msk [vmem:[#allocation4 + $0x110] sm:$0xff] %vm2372, 0.0
        %2408 = vst.msk [vmem:[#allocation4 + $0x118] sm:$0xff] %vm2372, 0.0
        %2409 = vst.msk [vmem:[#allocation4 + $0x120] sm:$0xff] %vm2372, 0.0
        %2410 = vst.msk [vmem:[#allocation4 + $0x128] sm:$0xff] %vm2372, 0.0
        %2411 = vst.msk [vmem:[#allocation4 + $0x130] sm:$0xff] %vm2372, 0.0
        %2412 = vst.msk [vmem:[#allocation4 + $0x138] sm:$0xff] %vm2372, 0.0
        %2413 = vst.msk [vmem:[#allocation4 + $0x140] sm:$0xff] %vm2372, 0.0
        %2414 = vst.msk [vmem:[#allocation4 + $0x148] sm:$0xff] %vm2372, 0.0
        %2415 = vst.msk [vmem:[#allocation4 + $0x150] sm:$0xff] %vm2372, 0.0
        %2416 = vst.msk [vmem:[#allocation4 + $0x158] sm:$0xff] %vm2372, 0.0
        %2417 = vst.msk [vmem:[#allocation4 + $0x160] sm:$0xff] %vm2372, 0.0
        %2418 = vst.msk [vmem:[#allocation4 + $0x168] sm:$0xff] %vm2372, 0.0
        %2419 = vst.msk [vmem:[#allocation4 + $0x170] sm:$0xff] %vm2372, 0.0
        %2420 = vst.msk [vmem:[#allocation4 + $0x178] sm:$0xff] %vm2372, 0.0
        %2421 = vst.msk [vmem:[#allocation4 + $0x180] sm:$0xff] %vm2372, 0.0
        %2422 = vst.msk [vmem:[#allocation4 + $0x188] sm:$0xff] %vm2372, 0.0
        %2423 = vst.msk [vmem:[#allocation4 + $0x190] sm:$0xff] %vm2372, 0.0
        %2424 = vst.msk [vmem:[#allocation4 + $0x198] sm:$0xff] %vm2372, 0.0
        %2425 = vst.msk [vmem:[#allocation4 + $0x1a0] sm:$0xff] %vm2372, 0.0
        %2426 = vst.msk [vmem:[#allocation4 + $0x1a8] sm:$0xff] %vm2372, 0.0
        %2427 = vst.msk [vmem:[#allocation4 + $0x1b0] sm:$0xff] %vm2372, 0.0
        %2428 = vst.msk [vmem:[#allocation4 + $0x1b8] sm:$0xff] %vm2372, 0.0
        %2429 = vst.msk [vmem:[#allocation4 + $0x1c0] sm:$0xff] %vm2372, 0.0
        %2430 = vst.msk [vmem:[#allocation4 + $0x1c8] sm:$0xff] %vm2372, 0.0
        %2431 = vst.msk [vmem:[#allocation4 + $0x1d0] sm:$0xff] %vm2372, 0.0
        %2432 = vst.msk [vmem:[#allocation4 + $0x1d8] sm:$0xff] %vm2372, 0.0
        %2433 = vst.msk [vmem:[#allocation4 + $0x1e0] sm:$0xff] %vm2372, 0.0
        %2434 = vst.msk [vmem:[#allocation4 + $0x1e8] sm:$0xff] %vm2372, 0.0
        %2435 = vst.msk [vmem:[#allocation4 + $0x1f0] sm:$0xff] %vm2372, 0.0
        %2436 = vst.msk [vmem:[#allocation4 + $0x1f8] sm:$0xff] %vm2372, 0.0
        %2437 = vst.msk [vmem:[#allocation4 + $0x200] sm:$0xff] %vm2372, 0.0
        %2438 = vst.msk [vmem:[#allocation4 + $0x208] sm:$0xff] %vm2372, 0.0
        %2439 = vst.msk [vmem:[#allocation4 + $0x210] sm:$0xff] %vm2372, 0.0
        %2440 = vst.msk [vmem:[#allocation4 + $0x218] sm:$0xff] %vm2372, 0.0
        %2441 = vst.msk [vmem:[#allocation4 + $0x220] sm:$0xff] %vm2372, 0.0
        %2442 = vst.msk [vmem:[#allocation4 + $0x228] sm:$0xff] %vm2372, 0.0
        %2443 = vst.msk [vmem:[#allocation4 + $0x230] sm:$0xff] %vm2372, 0.0
        %2444 = vst.msk [vmem:[#allocation4 + $0x238] sm:$0xff] %vm2372, 0.0
        %s2445 = scalar_lea.vmem [#allocation4], 32
        %2446 = vst.msk [vmem:[%s2445 + $0x8] sm:$0xff] %vm2372, %v2340
        %2447 = vst.msk [vmem:[%s2445 + $0x10] sm:$0xff] %vm2372, %v2341
        %2448 = vst.msk [vmem:[%s2445 + $0x28] sm:$0xff] %vm2372, %v2342
        %2449 = vst.msk [vmem:[%s2445 + $0x30] sm:$0xff] %vm2372, %v2343
        %2450 = vst.msk [vmem:[%s2445 + $0x48] sm:$0xff] %vm2372, %v2344
        %2451 = vst.msk [vmem:[%s2445 + $0x50] sm:$0xff] %vm2372, %v2345
        %2452 = vst.msk [vmem:[%s2445 + $0x68] sm:$0xff] %vm2372, %v2346
        %2453 = vst.msk [vmem:[%s2445 + $0x70] sm:$0xff] %vm2372, %v2347
        %2454 = vst.msk [vmem:[%s2445 + $0x88] sm:$0xff] %vm2372, %v2348
        %2455 = vst.msk [vmem:[%s2445 + $0x90] sm:$0xff] %vm2372, %v2349
        %2456 = vst.msk [vmem:[%s2445 + $0xa8] sm:$0xff] %vm2372, %v2350
        %2457 = vst.msk [vmem:[%s2445 + $0xb0] sm:$0xff] %vm2372, %v2351
        %2458 = vst.msk [vmem:[%s2445 + $0xc8] sm:$0xff] %vm2372, %v2352
        %2459 = vst.msk [vmem:[%s2445 + $0xd0] sm:$0xff] %vm2372, %v2353
        %2460 = vst.msk [vmem:[%s2445 + $0xe8] sm:$0xff] %vm2372, %v2354
        %2461 = vst.msk [vmem:[%s2445 + $0xf0] sm:$0xff] %vm2372, %v2355
        %2462 = vst.msk [vmem:[%s2445 + $0x108] sm:$0xff] %vm2372, %v2356
        %2463 = vst.msk [vmem:[%s2445 + $0x110] sm:$0xff] %vm2372, %v2357
        %2464 = vst.msk [vmem:[%s2445 + $0x128] sm:$0xff] %vm2372, %v2358
        %2465 = vst.msk [vmem:[%s2445 + $0x130] sm:$0xff] %vm2372, %v2359
        %2466 = vst.msk [vmem:[%s2445 + $0x148] sm:$0xff] %vm2372, %v2360
        %2467 = vst.msk [vmem:[%s2445 + $0x150] sm:$0xff] %vm2372, %v2361
        %2468 = vst.msk [vmem:[%s2445 + $0x168] sm:$0xff] %vm2372, %v2362
        %2469 = vst.msk [vmem:[%s2445 + $0x170] sm:$0xff] %vm2372, %v2363
        %2470 = vst.msk [vmem:[%s2445 + $0x188] sm:$0xff] %vm2372, %v2364
        %2471 = vst.msk [vmem:[%s2445 + $0x190] sm:$0xff] %vm2372, %v2365
        %2472 = vst.msk [vmem:[%s2445 + $0x1a8] sm:$0xff] %vm2372, %v2366
        %2473 = vst.msk [vmem:[%s2445 + $0x1b0] sm:$0xff] %vm2372, %v2367
        %2474 = vst.msk [vmem:[%s2445 + $0x1c8] sm:$0xff] %vm2372, %v2368
        %2475 = vst.msk [vmem:[%s2445 + $0x1d0] sm:$0xff] %vm2372, %v2369
        %2476 = vst.msk [vmem:[%s2445 + $0x1e8] sm:$0xff] %vm2372, %v2370
        %2477 = vst.msk [vmem:[%s2445 + $0x1f0] sm:$0xff] %vm2372, %v2371
        %v2478 = vld [vmem:[#allocation4 + $0x7] sm:$0xff]
        %v2479 = vld [vmem:[#allocation4 + $0xf] sm:$0xff]
        %v2480 = vld [vmem:[#allocation4 + $0x27] sm:$0xff]
        %v2481 = vld [vmem:[#allocation4 + $0x2f] sm:$0xff]
        %v2482 = vld [vmem:[#allocation4 + $0x47] sm:$0xff]
        %v2483 = vld [vmem:[#allocation4 + $0x4f] sm:$0xff]
        %v2484 = vld [vmem:[#allocation4 + $0x67] sm:$0xff]
        %v2485 = vld [vmem:[#allocation4 + $0x6f] sm:$0xff]
        %v2486 = vld [vmem:[#allocation4 + $0x87] sm:$0xff]
        %v2487 = vld [vmem:[#allocation4 + $0x8f] sm:$0xff]
        %v2488 = vld [vmem:[#allocation4 + $0xa7] sm:$0xff]
        %v2489 = vld [vmem:[#allocation4 + $0xaf] sm:$0xff]
        %v2490 = vld [vmem:[#allocation4 + $0xc7] sm:$0xff]
        %v2491 = vld [vmem:[#allocation4 + $0xcf] sm:$0xff]
        %v2492 = vld [vmem:[#allocation4 + $0xe7] sm:$0xff]
        %v2493 = vld [vmem:[#allocation4 + $0xef] sm:$0xff]
        %v2494 = vld [vmem:[#allocation4 + $0x107] sm:$0xff]
        %v2495 = vld [vmem:[#allocation4 + $0x10f] sm:$0xff]
        %v2496 = vld [vmem:[#allocation4 + $0x127] sm:$0xff]
        %v2497 = vld [vmem:[#allocation4 + $0x12f] sm:$0xff]
        %v2498 = vld [vmem:[#allocation4 + $0x147] sm:$0xff]
        %v2499 = vld [vmem:[#allocation4 + $0x14f] sm:$0xff]
        %v2500 = vld [vmem:[#allocation4 + $0x167] sm:$0xff]
        %v2501 = vld [vmem:[#allocation4 + $0x16f] sm:$0xff]
        %v2502 = vld [vmem:[#allocation4 + $0x187] sm:$0xff]
        %v2503 = vld [vmem:[#allocation4 + $0x18f] sm:$0xff]
        %v2504 = vld [vmem:[#allocation4 + $0x1a7] sm:$0xff]
        %v2505 = vld [vmem:[#allocation4 + $0x1af] sm:$0xff]
        %v2506 = vld [vmem:[#allocation4 + $0x1c7] sm:$0xff]
        %v2507 = vld [vmem:[#allocation4 + $0x1cf] sm:$0xff]
        %v2508 = vld [vmem:[#allocation4 + $0x1e7] sm:$0xff]
        %v2509 = vld [vmem:[#allocation4 + $0x1ef] sm:$0xff]
        %2510 = vst.msk [vmem:[#allocation5] sm:$0xff] %vm2372, %v2478
        %2511 = vst.msk [vmem:[#allocation5 + $0x8] sm:$0xff] %vm2372, %v2479
        %2512 = vst.msk [vmem:[#allocation5 + $0x10] sm:$0xff] %vm2372, %v2480
        %2513 = vst.msk [vmem:[#allocation5 + $0x18] sm:$0xff] %vm2372, %v2481
        %2514 = vst.msk [vmem:[#allocation5 + $0x20] sm:$0xff] %vm2372, %v2482
        %2515 = vst.msk [vmem:[#allocation5 + $0x28] sm:$0xff] %vm2372, %v2483
        %2516 = vst.msk [vmem:[#allocation5 + $0x30] sm:$0xff] %vm2372, %v2484
        %2517 = vst.msk [vmem:[#allocation5 + $0x38] sm:$0xff] %vm2372, %v2485
        %2518 = vst.msk [vmem:[#allocation5 + $0x40] sm:$0xff] %vm2372, %v2486
        %2519 = vst.msk [vmem:[#allocation5 + $0x48] sm:$0xff] %vm2372, %v2487
        %2520 = vst.msk [vmem:[#allocation5 + $0x50] sm:$0xff] %vm2372, %v2488
        %2521 = vst.msk [vmem:[#allocation5 + $0x58] sm:$0xff] %vm2372, %v2489
        %2522 = vst.msk [vmem:[#allocation5 + $0x60] sm:$0xff] %vm2372, %v2490
        %2523 = vst.msk [vmem:[#allocation5 + $0x68] sm:$0xff] %vm2372, %v2491
        %2524 = vst.msk [vmem:[#allocation5 + $0x70] sm:$0xff] %vm2372, %v2492
        %2525 = vst.msk [vmem:[#allocation5 + $0x78] sm:$0xff] %vm2372, %v2493
        %2526 = vst.msk [vmem:[#allocation5 + $0x80] sm:$0xff] %vm2372, %v2494
        %2527 = vst.msk [vmem:[#allocation5 + $0x88] sm:$0xff] %vm2372, %v2495
        %2528 = vst.msk [vmem:[#allocation5 + $0x90] sm:$0xff] %vm2372, %v2496
        %2529 = vst.msk [vmem:[#allocation5 + $0x98] sm:$0xff] %vm2372, %v2497
        %2530 = vst.msk [vmem:[#allocation5 + $0xa0] sm:$0xff] %vm2372, %v2498
        %2531 = vst.msk [vmem:[#allocation5 + $0xa8] sm:$0xff] %vm2372, %v2499
        %2532 = vst.msk [vmem:[#allocation5 + $0xb0] sm:$0xff] %vm2372, %v2500
        %2533 = vst.msk [vmem:[#allocation5 + $0xb8] sm:$0xff] %vm2372, %v2501
        %2534 = vst.msk [vmem:[#allocation5 + $0xc0] sm:$0xff] %vm2372, %v2502
        %2535 = vst.msk [vmem:[#allocation5 + $0xc8] sm:$0xff] %vm2372, %v2503
        %2536 = vst.msk [vmem:[#allocation5 + $0xd0] sm:$0xff] %vm2372, %v2504
        %2537 = vst.msk [vmem:[#allocation5 + $0xd8] sm:$0xff] %vm2372, %v2505
        %2538 = vst.msk [vmem:[#allocation5 + $0xe0] sm:$0xff] %vm2372, %v2506
        %2539 = vst.msk [vmem:[#allocation5 + $0xe8] sm:$0xff] %vm2372, %v2507
        %2540 = vst.msk [vmem:[#allocation5 + $0xf0] sm:$0xff] %vm2372, %v2508
        %2541 = vst.msk [vmem:[#allocation5 + $0xf8] sm:$0xff] %vm2372, %v2509
        %v2542 = vld [vmem:[#allocation4 + $0x8] sm:$0xff]
        %v2543 = vld [vmem:[#allocation4 + $0x10] sm:$0xff]
        %v2544 = vld [vmem:[#allocation4 + $0x28] sm:$0xff]
        %v2545 = vld [vmem:[#allocation4 + $0x30] sm:$0xff]
        %v2546 = vld [vmem:[#allocation4 + $0x48] sm:$0xff]
        %v2547 = vld [vmem:[#allocation4 + $0x50] sm:$0xff]
        %v2548 = vld [vmem:[#allocation4 + $0x68] sm:$0xff]
        %v2549 = vld [vmem:[#allocation4 + $0x70] sm:$0xff]
        %v2550 = vld [vmem:[#allocation4 + $0x88] sm:$0xff]
        %v2551 = vld [vmem:[#allocation4 + $0x90] sm:$0xff]
        %v2552 = vld [vmem:[#allocation4 + $0xa8] sm:$0xff]
        %v2553 = vld [vmem:[#allocation4 + $0xb0] sm:$0xff]
        %v2554 = vld [vmem:[#allocation4 + $0xc8] sm:$0xff]
        %v2555 = vld [vmem:[#allocation4 + $0xd0] sm:$0xff]
        %v2556 = vld [vmem:[#allocation4 + $0xe8] sm:$0xff]
        %v2557 = vld [vmem:[#allocation4 + $0xf0] sm:$0xff]
        %v2558 = vld [vmem:[#allocation4 + $0x108] sm:$0xff]
        %v2559 = vld [vmem:[#allocation4 + $0x110] sm:$0xff]
        %v2560 = vld [vmem:[#allocation4 + $0x128] sm:$0xff]
        %v2561 = vld [vmem:[#allocation4 + $0x130] sm:$0xff]
        %v2562 = vld [vmem:[#allocation4 + $0x148] sm:$0xff]
        %v2563 = vld [vmem:[#allocation4 + $0x150] sm:$0xff]
        %v2564 = vld [vmem:[#allocation4 + $0x168] sm:$0xff]
        %v2565 = vld [vmem:[#allocation4 + $0x170] sm:$0xff]
        %v2566 = vld [vmem:[#allocation4 + $0x188] sm:$0xff]
        %v2567 = vld [vmem:[#allocation4 + $0x190] sm:$0xff]
        %v2568 = vld [vmem:[#allocation4 + $0x1a8] sm:$0xff]
        %v2569 = vld [vmem:[#allocation4 + $0x1b0] sm:$0xff]
        %v2570 = vld [vmem:[#allocation4 + $0x1c8] sm:$0xff]
        %v2571 = vld [vmem:[#allocation4 + $0x1d0] sm:$0xff]
        %v2572 = vld [vmem:[#allocation4 + $0x1e8] sm:$0xff]
        %v2573 = vld [vmem:[#allocation4 + $0x1f0] sm:$0xff]
        %2606 = vrot.lane.b32.xlu0 %v2542, 8
        %v2607 = vpop.permute.xlu0 %2606
        %2608 = vrot.lane.b32.xlu0 %v2543, 8
        %v2609 = vpop.permute.xlu0 %2608
        %2610 = vrot.lane.b32.xlu0 %v2544, 8
        %v2611 = vpop.permute.xlu0 %2610
        %2612 = vrot.lane.b32.xlu0 %v2545, 8
        %v2613 = vpop.permute.xlu0 %2612
        %2614 = vrot.lane.b32.xlu0 %v2546, 8
        %v2615 = vpop.permute.xlu0 %2614
        %2616 = vrot.lane.b32.xlu0 %v2547, 8
        %v2617 = vpop.permute.xlu0 %2616
        %2618 = vrot.lane.b32.xlu0 %v2548, 8
        %v2619 = vpop.permute.xlu0 %2618
        %2620 = vrot.lane.b32.xlu0 %v2549, 8
        %v2621 = vpop.permute.xlu0 %2620
        %2622 = vrot.lane.b32.xlu0 %v2550, 8
        %v2623 = vpop.permute.xlu0 %2622
        %2624 = vrot.lane.b32.xlu0 %v2551, 8
        %v2625 = vpop.permute.xlu0 %2624
        %2626 = vrot.lane.b32.xlu0 %v2552, 8
        %v2627 = vpop.permute.xlu0 %2626
        %2628 = vrot.lane.b32.xlu0 %v2553, 8
        %v2629 = vpop.permute.xlu0 %2628
        %2630 = vrot.lane.b32.xlu0 %v2554, 8
        %v2631 = vpop.permute.xlu0 %2630
        %2632 = vrot.lane.b32.xlu0 %v2555, 8
        %v2633 = vpop.permute.xlu0 %2632
        %2634 = vrot.lane.b32.xlu0 %v2556, 8
        %v2635 = vpop.permute.xlu0 %2634
        %2636 = vrot.lane.b32.xlu0 %v2557, 8
        %v2637 = vpop.permute.xlu0 %2636
        %2638 = vrot.lane.b32.xlu0 %v2558, 8
        %v2639 = vpop.permute.xlu0 %2638
        %2640 = vrot.lane.b32.xlu0 %v2559, 8
        %v2641 = vpop.permute.xlu0 %2640
        %2642 = vrot.lane.b32.xlu0 %v2560, 8
        %v2643 = vpop.permute.xlu0 %2642
        %2644 = vrot.lane.b32.xlu0 %v2561, 8
        %v2645 = vpop.permute.xlu0 %2644
        %2646 = vrot.lane.b32.xlu0 %v2562, 8
        %v2647 = vpop.permute.xlu0 %2646
        %2648 = vrot.lane.b32.xlu0 %v2563, 8
        %v2649 = vpop.permute.xlu0 %2648
        %2650 = vrot.lane.b32.xlu0 %v2564, 8
        %v2651 = vpop.permute.xlu0 %2650
        %2652 = vrot.lane.b32.xlu0 %v2565, 8
        %v2653 = vpop.permute.xlu0 %2652
        %2654 = vrot.lane.b32.xlu0 %v2566, 8
        %v2655 = vpop.permute.xlu0 %2654
        %2656 = vrot.lane.b32.xlu0 %v2567, 8
        %v2657 = vpop.permute.xlu0 %2656
        %2658 = vrot.lane.b32.xlu0 %v2568, 8
        %v2659 = vpop.permute.xlu0 %2658
        %2660 = vrot.lane.b32.xlu0 %v2569, 8
        %v2661 = vpop.permute.xlu0 %2660
        %2662 = vrot.lane.b32.xlu0 %v2570, 8
        %v2663 = vpop.permute.xlu0 %2662
        %2664 = vrot.lane.b32.xlu0 %v2571, 8
        %v2665 = vpop.permute.xlu0 %2664
        %2666 = vrot.lane.b32.xlu0 %v2572, 8
        %v2667 = vpop.permute.xlu0 %2666
        %2668 = vrot.lane.b32.xlu0 %v2573, 8
        %v2669 = vpop.permute.xlu0 %2668
        %vm2702 = vcmask 130112
        %2703 = vst.msk [vmem:[#allocation5] sm:$0xff] %vm2702, %v2607
        %2704 = vst.msk [vmem:[#allocation5 + $0x8] sm:$0xff] %vm2702, %v2609
        %2705 = vst.msk [vmem:[#allocation5 + $0x10] sm:$0xff] %vm2702, %v2611
        %2706 = vst.msk [vmem:[#allocation5 + $0x18] sm:$0xff] %vm2702, %v2613
        %2707 = vst.msk [vmem:[#allocation5 + $0x20] sm:$0xff] %vm2702, %v2615
        %2708 = vst.msk [vmem:[#allocation5 + $0x28] sm:$0xff] %vm2702, %v2617
        %2709 = vst.msk [vmem:[#allocation5 + $0x30] sm:$0xff] %vm2702, %v2619
        %2710 = vst.msk [vmem:[#allocation5 + $0x38] sm:$0xff] %vm2702, %v2621
        %2711 = vst.msk [vmem:[#allocation5 + $0x40] sm:$0xff] %vm2702, %v2623
        %2712 = vst.msk [vmem:[#allocation5 + $0x48] sm:$0xff] %vm2702, %v2625
        %2713 = vst.msk [vmem:[#allocation5 + $0x50] sm:$0xff] %vm2702, %v2627
        %2714 = vst.msk [vmem:[#allocation5 + $0x58] sm:$0xff] %vm2702, %v2629
        %2715 = vst.msk [vmem:[#allocation5 + $0x60] sm:$0xff] %vm2702, %v2631
        %2716 = vst.msk [vmem:[#allocation5 + $0x68] sm:$0xff] %vm2702, %v2633
        %2717 = vst.msk [vmem:[#allocation5 + $0x70] sm:$0xff] %vm2702, %v2635
        %2718 = vst.msk [vmem:[#allocation5 + $0x78] sm:$0xff] %vm2702, %v2637
        %2719 = vst.msk [vmem:[#allocation5 + $0x80] sm:$0xff] %vm2702, %v2639
        %2720 = vst.msk [vmem:[#allocation5 + $0x88] sm:$0xff] %vm2702, %v2641
        %2721 = vst.msk [vmem:[#allocation5 + $0x90] sm:$0xff] %vm2702, %v2643
        %2722 = vst.msk [vmem:[#allocation5 + $0x98] sm:$0xff] %vm2702, %v2645
        %2723 = vst.msk [vmem:[#allocation5 + $0xa0] sm:$0xff] %vm2702, %v2647
        %2724 = vst.msk [vmem:[#allocation5 + $0xa8] sm:$0xff] %vm2702, %v2649
        %2725 = vst.msk [vmem:[#allocation5 + $0xb0] sm:$0xff] %vm2702, %v2651
        %2726 = vst.msk [vmem:[#allocation5 + $0xb8] sm:$0xff] %vm2702, %v2653
        %2727 = vst.msk [vmem:[#allocation5 + $0xc0] sm:$0xff] %vm2702, %v2655
        %2728 = vst.msk [vmem:[#allocation5 + $0xc8] sm:$0xff] %vm2702, %v2657
        %2729 = vst.msk [vmem:[#allocation5 + $0xd0] sm:$0xff] %vm2702, %v2659
        %2730 = vst.msk [vmem:[#allocation5 + $0xd8] sm:$0xff] %vm2702, %v2661
        %2731 = vst.msk [vmem:[#allocation5 + $0xe0] sm:$0xff] %vm2702, %v2663
        %2732 = vst.msk [vmem:[#allocation5 + $0xe8] sm:$0xff] %vm2702, %v2665
        %2733 = vst.msk [vmem:[#allocation5 + $0xf0] sm:$0xff] %vm2702, %v2667
        %2734 = vst.msk [vmem:[#allocation5 + $0xf8] sm:$0xff] %vm2702, %v2669
        %v2735 = vld [vmem:[#allocation4 + $0x9] sm:$0xff]
        %v2736 = vld [vmem:[#allocation4 + $0x11] sm:$0xff]
        %v2737 = vld [vmem:[#allocation4 + $0x29] sm:$0xff]
        %v2738 = vld [vmem:[#allocation4 + $0x31] sm:$0xff]
        %v2739 = vld [vmem:[#allocation4 + $0x49] sm:$0xff]
        %v2740 = vld [vmem:[#allocation4 + $0x51] sm:$0xff]
        %v2741 = vld [vmem:[#allocation4 + $0x69] sm:$0xff]
        %v2742 = vld [vmem:[#allocation4 + $0x71] sm:$0xff]
        %v2743 = vld [vmem:[#allocation4 + $0x89] sm:$0xff]
        %v2744 = vld [vmem:[#allocation4 + $0x91] sm:$0xff]
        %v2745 = vld [vmem:[#allocation4 + $0xa9] sm:$0xff]
        %v2746 = vld [vmem:[#allocation4 + $0xb1] sm:$0xff]
        %v2747 = vld [vmem:[#allocation4 + $0xc9] sm:$0xff]
        %v2748 = vld [vmem:[#allocation4 + $0xd1] sm:$0xff]
        %v2749 = vld [vmem:[#allocation4 + $0xe9] sm:$0xff]
        %v2750 = vld [vmem:[#allocation4 + $0xf1] sm:$0xff]
        %v2751 = vld [vmem:[#allocation4 + $0x109] sm:$0xff]
        %v2752 = vld [vmem:[#allocation4 + $0x111] sm:$0xff]
        %v2753 = vld [vmem:[#allocation4 + $0x129] sm:$0xff]
        %v2754 = vld [vmem:[#allocation4 + $0x131] sm:$0xff]
        %v2755 = vld [vmem:[#allocation4 + $0x149] sm:$0xff]
        %v2756 = vld [vmem:[#allocation4 + $0x151] sm:$0xff]
        %v2757 = vld [vmem:[#allocation4 + $0x169] sm:$0xff]
        %v2758 = vld [vmem:[#allocation4 + $0x171] sm:$0xff]
        %v2759 = vld [vmem:[#allocation4 + $0x189] sm:$0xff]
        %v2760 = vld [vmem:[#allocation4 + $0x191] sm:$0xff]
        %v2761 = vld [vmem:[#allocation4 + $0x1a9] sm:$0xff]
        %v2762 = vld [vmem:[#allocation4 + $0x1b1] sm:$0xff]
        %v2763 = vld [vmem:[#allocation4 + $0x1c9] sm:$0xff]
        %v2764 = vld [vmem:[#allocation4 + $0x1d1] sm:$0xff]
        %v2765 = vld [vmem:[#allocation4 + $0x1e9] sm:$0xff]
        %v2766 = vld [vmem:[#allocation4 + $0x1f1] sm:$0xff]
        %2799 = vrot.lane.b32.xlu0 %v2735, 16
        %v2800 = vpop.permute.xlu0 %2799
        %2801 = vrot.lane.b32.xlu0 %v2736, 16
        %v2802 = vpop.permute.xlu0 %2801
        %2803 = vrot.lane.b32.xlu0 %v2737, 16
        %v2804 = vpop.permute.xlu0 %2803
        %2805 = vrot.lane.b32.xlu0 %v2738, 16
        %v2806 = vpop.permute.xlu0 %2805
        %2807 = vrot.lane.b32.xlu0 %v2739, 16
        %v2808 = vpop.permute.xlu0 %2807
        %2809 = vrot.lane.b32.xlu0 %v2740, 16
        %v2810 = vpop.permute.xlu0 %2809
        %2811 = vrot.lane.b32.xlu0 %v2741, 16
        %v2812 = vpop.permute.xlu0 %2811
        %2813 = vrot.lane.b32.xlu0 %v2742, 16
        %v2814 = vpop.permute.xlu0 %2813
        %2815 = vrot.lane.b32.xlu0 %v2743, 16
        %v2816 = vpop.permute.xlu0 %2815
        %2817 = vrot.lane.b32.xlu0 %v2744, 16
        %v2818 = vpop.permute.xlu0 %2817
        %2819 = vrot.lane.b32.xlu0 %v2745, 16
        %v2820 = vpop.permute.xlu0 %2819
        %2821 = vrot.lane.b32.xlu0 %v2746, 16
        %v2822 = vpop.permute.xlu0 %2821
        %2823 = vrot.lane.b32.xlu0 %v2747, 16
        %v2824 = vpop.permute.xlu0 %2823
        %2825 = vrot.lane.b32.xlu0 %v2748, 16
        %v2826 = vpop.permute.xlu0 %2825
        %2827 = vrot.lane.b32.xlu0 %v2749, 16
        %v2828 = vpop.permute.xlu0 %2827
        %2829 = vrot.lane.b32.xlu0 %v2750, 16
        %v2830 = vpop.permute.xlu0 %2829
        %2831 = vrot.lane.b32.xlu0 %v2751, 16
        %v2832 = vpop.permute.xlu0 %2831
        %2833 = vrot.lane.b32.xlu0 %v2752, 16
        %v2834 = vpop.permute.xlu0 %2833
        %2835 = vrot.lane.b32.xlu0 %v2753, 16
        %v2836 = vpop.permute.xlu0 %2835
        %2837 = vrot.lane.b32.xlu0 %v2754, 16
        %v2838 = vpop.permute.xlu0 %2837
        %2839 = vrot.lane.b32.xlu0 %v2755, 16
        %v2840 = vpop.permute.xlu0 %2839
        %2841 = vrot.lane.b32.xlu0 %v2756, 16
        %v2842 = vpop.permute.xlu0 %2841
        %2843 = vrot.lane.b32.xlu0 %v2757, 16
        %v2844 = vpop.permute.xlu0 %2843
        %2845 = vrot.lane.b32.xlu0 %v2758, 16
        %v2846 = vpop.permute.xlu0 %2845
        %2847 = vrot.lane.b32.xlu0 %v2759, 16
        %v2848 = vpop.permute.xlu0 %2847
        %2849 = vrot.lane.b32.xlu0 %v2760, 16
        %v2850 = vpop.permute.xlu0 %2849
        %2851 = vrot.lane.b32.xlu0 %v2761, 16
        %v2852 = vpop.permute.xlu0 %2851
        %2853 = vrot.lane.b32.xlu0 %v2762, 16
        %v2854 = vpop.permute.xlu0 %2853
        %2855 = vrot.lane.b32.xlu0 %v2763, 16
        %v2856 = vpop.permute.xlu0 %2855
        %2857 = vrot.lane.b32.xlu0 %v2764, 16
        %v2858 = vpop.permute.xlu0 %2857
        %2859 = vrot.lane.b32.xlu0 %v2765, 16
        %v2860 = vpop.permute.xlu0 %2859
        %2861 = vrot.lane.b32.xlu0 %v2766, 16
        %v2862 = vpop.permute.xlu0 %2861
        %vm2895 = vcmask 195712
        %2896 = vst.msk [vmem:[#allocation5] sm:$0xff] %vm2895, %v2800
        %2897 = vst.msk [vmem:[#allocation5 + $0x8] sm:$0xff] %vm2895, %v2802
        %2898 = vst.msk [vmem:[#allocation5 + $0x10] sm:$0xff] %vm2895, %v2804
        %2899 = vst.msk [vmem:[#allocation5 + $0x18] sm:$0xff] %vm2895, %v2806
        %2900 = vst.msk [vmem:[#allocation5 + $0x20] sm:$0xff] %vm2895, %v2808
        %2901 = vst.msk [vmem:[#allocation5 + $0x28] sm:$0xff] %vm2895, %v2810
        %2902 = vst.msk [vmem:[#allocation5 + $0x30] sm:$0xff] %vm2895, %v2812
        %2903 = vst.msk [vmem:[#allocation5 + $0x38] sm:$0xff] %vm2895, %v2814
        %2904 = vst.msk [vmem:[#allocation5 + $0x40] sm:$0xff] %vm2895, %v2816
        %2905 = vst.msk [vmem:[#allocation5 + $0x48] sm:$0xff] %vm2895, %v2818
        %2906 = vst.msk [vmem:[#allocation5 + $0x50] sm:$0xff] %vm2895, %v2820
        %2907 = vst.msk [vmem:[#allocation5 + $0x58] sm:$0xff] %vm2895, %v2822
        %2908 = vst.msk [vmem:[#allocation5 + $0x60] sm:$0xff] %vm2895, %v2824
        %2909 = vst.msk [vmem:[#allocation5 + $0x68] sm:$0xff] %vm2895, %v2826
        %2910 = vst.msk [vmem:[#allocation5 + $0x70] sm:$0xff] %vm2895, %v2828
        %2911 = vst.msk [vmem:[#allocation5 + $0x78] sm:$0xff] %vm2895, %v2830
        %2912 = vst.msk [vmem:[#allocation5 + $0x80] sm:$0xff] %vm2895, %v2832
        %2913 = vst.msk [vmem:[#allocation5 + $0x88] sm:$0xff] %vm2895, %v2834
        %2914 = vst.msk [vmem:[#allocation5 + $0x90] sm:$0xff] %vm2895, %v2836
        %2915 = vst.msk [vmem:[#allocation5 + $0x98] sm:$0xff] %vm2895, %v2838
        %2916 = vst.msk [vmem:[#allocation5 + $0xa0] sm:$0xff] %vm2895, %v2840
        %2917 = vst.msk [vmem:[#allocation5 + $0xa8] sm:$0xff] %vm2895, %v2842
        %2918 = vst.msk [vmem:[#allocation5 + $0xb0] sm:$0xff] %vm2895, %v2844
        %2919 = vst.msk [vmem:[#allocation5 + $0xb8] sm:$0xff] %vm2895, %v2846
        %2920 = vst.msk [vmem:[#allocation5 + $0xc0] sm:$0xff] %vm2895, %v2848
        %2921 = vst.msk [vmem:[#allocation5 + $0xc8] sm:$0xff] %vm2895, %v2850
        %2922 = vst.msk [vmem:[#allocation5 + $0xd0] sm:$0xff] %vm2895, %v2852
        %2923 = vst.msk [vmem:[#allocation5 + $0xd8] sm:$0xff] %vm2895, %v2854
        %2924 = vst.msk [vmem:[#allocation5 + $0xe0] sm:$0xff] %vm2895, %v2856
        %2925 = vst.msk [vmem:[#allocation5 + $0xe8] sm:$0xff] %vm2895, %v2858
        %2926 = vst.msk [vmem:[#allocation5 + $0xf0] sm:$0xff] %vm2895, %v2860
        %2927 = vst.msk [vmem:[#allocation5 + $0xf8] sm:$0xff] %vm2895, %v2862
        %v2928 = vld [vmem:[%s2445 + $0x7] sm:$0xff]
        %v2929 = vld [vmem:[%s2445 + $0xf] sm:$0xff]
        %v2930 = vld [vmem:[%s2445 + $0x27] sm:$0xff]
        %v2931 = vld [vmem:[%s2445 + $0x2f] sm:$0xff]
        %v2932 = vld [vmem:[%s2445 + $0x47] sm:$0xff]
        %v2933 = vld [vmem:[%s2445 + $0x4f] sm:$0xff]
        %v2934 = vld [vmem:[%s2445 + $0x67] sm:$0xff]
        %v2935 = vld [vmem:[%s2445 + $0x6f] sm:$0xff]
        %v2936 = vld [vmem:[%s2445 + $0x87] sm:$0xff]
        %v2937 = vld [vmem:[%s2445 + $0x8f] sm:$0xff]
        %v2938 = vld [vmem:[%s2445 + $0xa7] sm:$0xff]
        %v2939 = vld [vmem:[%s2445 + $0xaf] sm:$0xff]
        %v2940 = vld [vmem:[%s2445 + $0xc7] sm:$0xff]
        %v2941 = vld [vmem:[%s2445 + $0xcf] sm:$0xff]
        %v2942 = vld [vmem:[%s2445 + $0xe7] sm:$0xff]
        %v2943 = vld [vmem:[%s2445 + $0xef] sm:$0xff]
        %v2944 = vld [vmem:[%s2445 + $0x107] sm:$0xff]
        %v2945 = vld [vmem:[%s2445 + $0x10f] sm:$0xff]
        %v2946 = vld [vmem:[%s2445 + $0x127] sm:$0xff]
        %v2947 = vld [vmem:[%s2445 + $0x12f] sm:$0xff]
        %v2948 = vld [vmem:[%s2445 + $0x147] sm:$0xff]
        %v2949 = vld [vmem:[%s2445 + $0x14f] sm:$0xff]
        %v2950 = vld [vmem:[%s2445 + $0x167] sm:$0xff]
        %v2951 = vld [vmem:[%s2445 + $0x16f] sm:$0xff]
        %v2952 = vld [vmem:[%s2445 + $0x187] sm:$0xff]
        %v2953 = vld [vmem:[%s2445 + $0x18f] sm:$0xff]
        %v2954 = vld [vmem:[%s2445 + $0x1a7] sm:$0xff]
        %v2955 = vld [vmem:[%s2445 + $0x1af] sm:$0xff]
        %v2956 = vld [vmem:[%s2445 + $0x1c7] sm:$0xff]
        %v2957 = vld [vmem:[%s2445 + $0x1cf] sm:$0xff]
        %v2958 = vld [vmem:[%s2445 + $0x1e7] sm:$0xff]
        %v2959 = vld [vmem:[%s2445 + $0x1ef] sm:$0xff]
        %2992 = vrot.lane.b32.xlu0 %v2928, 24
        %v2993 = vpop.permute.xlu0 %2992
        %2994 = vrot.lane.b32.xlu0 %v2929, 24
        %v2995 = vpop.permute.xlu0 %2994
        %2996 = vrot.lane.b32.xlu0 %v2930, 24
        %v2997 = vpop.permute.xlu0 %2996
        %2998 = vrot.lane.b32.xlu0 %v2931, 24
        %v2999 = vpop.permute.xlu0 %2998
        %3000 = vrot.lane.b32.xlu0 %v2932, 24
        %v3001 = vpop.permute.xlu0 %3000
        %3002 = vrot.lane.b32.xlu0 %v2933, 24
        %v3003 = vpop.permute.xlu0 %3002
        %3004 = vrot.lane.b32.xlu0 %v2934, 24
        %v3005 = vpop.permute.xlu0 %3004
        %3006 = vrot.lane.b32.xlu0 %v2935, 24
        %v3007 = vpop.permute.xlu0 %3006
        %3008 = vrot.lane.b32.xlu0 %v2936, 24
        %v3009 = vpop.permute.xlu0 %3008
        %3010 = vrot.lane.b32.xlu0 %v2937, 24
        %v3011 = vpop.permute.xlu0 %3010
        %3012 = vrot.lane.b32.xlu0 %v2938, 24
        %v3013 = vpop.permute.xlu0 %3012
        %3014 = vrot.lane.b32.xlu0 %v2939, 24
        %v3015 = vpop.permute.xlu0 %3014
        %3016 = vrot.lane.b32.xlu0 %v2940, 24
        %v3017 = vpop.permute.xlu0 %3016
        %3018 = vrot.lane.b32.xlu0 %v2941, 24
        %v3019 = vpop.permute.xlu0 %3018
        %3020 = vrot.lane.b32.xlu0 %v2942, 24
        %v3021 = vpop.permute.xlu0 %3020
        %3022 = vrot.lane.b32.xlu0 %v2943, 24
        %v3023 = vpop.permute.xlu0 %3022
        %3024 = vrot.lane.b32.xlu0 %v2944, 24
        %v3025 = vpop.permute.xlu0 %3024
        %3026 = vrot.lane.b32.xlu0 %v2945, 24
        %v3027 = vpop.permute.xlu0 %3026
        %3028 = vrot.lane.b32.xlu0 %v2946, 24
        %v3029 = vpop.permute.xlu0 %3028
        %3030 = vrot.lane.b32.xlu0 %v2947, 24
        %v3031 = vpop.permute.xlu0 %3030
        %3032 = vrot.lane.b32.xlu0 %v2948, 24
        %v3033 = vpop.permute.xlu0 %3032
        %3034 = vrot.lane.b32.xlu0 %v2949, 24
        %v3035 = vpop.permute.xlu0 %3034
        %3036 = vrot.lane.b32.xlu0 %v2950, 24
        %v3037 = vpop.permute.xlu0 %3036
        %3038 = vrot.lane.b32.xlu0 %v2951, 24
        %v3039 = vpop.permute.xlu0 %3038
        %3040 = vrot.lane.b32.xlu0 %v2952, 24
        %v3041 = vpop.permute.xlu0 %3040
        %3042 = vrot.lane.b32.xlu0 %v2953, 24
        %v3043 = vpop.permute.xlu0 %3042
        %3044 = vrot.lane.b32.xlu0 %v2954, 24
        %v3045 = vpop.permute.xlu0 %3044
        %3046 = vrot.lane.b32.xlu0 %v2955, 24
        %v3047 = vpop.permute.xlu0 %3046
        %3048 = vrot.lane.b32.xlu0 %v2956, 24
        %v3049 = vpop.permute.xlu0 %3048
        %3050 = vrot.lane.b32.xlu0 %v2957, 24
        %v3051 = vpop.permute.xlu0 %3050
        %3052 = vrot.lane.b32.xlu0 %v2958, 24
        %v3053 = vpop.permute.xlu0 %3052
        %3054 = vrot.lane.b32.xlu0 %v2959, 24
        %v3055 = vpop.permute.xlu0 %3054
        %vm3088 = vcmask 261312
        %3089 = vst.msk [vmem:[#allocation5] sm:$0xff] %vm3088, %v2993
        %3090 = vst.msk [vmem:[#allocation5 + $0x8] sm:$0xff] %vm3088, %v2995
        %3091 = vst.msk [vmem:[#allocation5 + $0x10] sm:$0xff] %vm3088, %v2997
        %3092 = vst.msk [vmem:[#allocation5 + $0x18] sm:$0xff] %vm3088, %v2999
        %3093 = vst.msk [vmem:[#allocation5 + $0x20] sm:$0xff] %vm3088, %v3001
        %3094 = vst.msk [vmem:[#allocation5 + $0x28] sm:$0xff] %vm3088, %v3003
        %3095 = vst.msk [vmem:[#allocation5 + $0x30] sm:$0xff] %vm3088, %v3005
        %3096 = vst.msk [vmem:[#allocation5 + $0x38] sm:$0xff] %vm3088, %v3007
        %3097 = vst.msk [vmem:[#allocation5 + $0x40] sm:$0xff] %vm3088, %v3009
        %3098 = vst.msk [vmem:[#allocation5 + $0x48] sm:$0xff] %vm3088, %v3011
        %3099 = vst.msk [vmem:[#allocation5 + $0x50] sm:$0xff] %vm3088, %v3013
        %3100 = vst.msk [vmem:[#allocation5 + $0x58] sm:$0xff] %vm3088, %v3015
        %3101 = vst.msk [vmem:[#allocation5 + $0x60] sm:$0xff] %vm3088, %v3017
        %3102 = vst.msk [vmem:[#allocation5 + $0x68] sm:$0xff] %vm3088, %v3019
        %3103 = vst.msk [vmem:[#allocation5 + $0x70] sm:$0xff] %vm3088, %v3021
        %3104 = vst.msk [vmem:[#allocation5 + $0x78] sm:$0xff] %vm3088, %v3023
        %3105 = vst.msk [vmem:[#allocation5 + $0x80] sm:$0xff] %vm3088, %v3025
        %3106 = vst.msk [vmem:[#allocation5 + $0x88] sm:$0xff] %vm3088, %v3027
        %3107 = vst.msk [vmem:[#allocation5 + $0x90] sm:$0xff] %vm3088, %v3029
        %3108 = vst.msk [vmem:[#allocation5 + $0x98] sm:$0xff] %vm3088, %v3031
        %3109 = vst.msk [vmem:[#allocation5 + $0xa0] sm:$0xff] %vm3088, %v3033
        %3110 = vst.msk [vmem:[#allocation5 + $0xa8] sm:$0xff] %vm3088, %v3035
        %3111 = vst.msk [vmem:[#allocation5 + $0xb0] sm:$0xff] %vm3088, %v3037
        %3112 = vst.msk [vmem:[#allocation5 + $0xb8] sm:$0xff] %vm3088, %v3039
        %3113 = vst.msk [vmem:[#allocation5 + $0xc0] sm:$0xff] %vm3088, %v3041
        %3114 = vst.msk [vmem:[#allocation5 + $0xc8] sm:$0xff] %vm3088, %v3043
        %3115 = vst.msk [vmem:[#allocation5 + $0xd0] sm:$0xff] %vm3088, %v3045
        %3116 = vst.msk [vmem:[#allocation5 + $0xd8] sm:$0xff] %vm3088, %v3047
        %3117 = vst.msk [vmem:[#allocation5 + $0xe0] sm:$0xff] %vm3088, %v3049
        %3118 = vst.msk [vmem:[#allocation5 + $0xe8] sm:$0xff] %vm3088, %v3051
        %3119 = vst.msk [vmem:[#allocation5 + $0xf0] sm:$0xff] %vm3088, %v3053
        %3120 = vst.msk [vmem:[#allocation5 + $0xf8] sm:$0xff] %vm3088, %v3055
        %v3121 = vld [vmem:[%s2445 + $0x8] sm:$0xff]
        %v3122 = vld [vmem:[%s2445 + $0x10] sm:$0xff]
        %v3123 = vld [vmem:[%s2445 + $0x28] sm:$0xff]
        %v3124 = vld [vmem:[%s2445 + $0x30] sm:$0xff]
        %v3125 = vld [vmem:[%s2445 + $0x48] sm:$0xff]
        %v3126 = vld [vmem:[%s2445 + $0x50] sm:$0xff]
        %v3127 = vld [vmem:[%s2445 + $0x68] sm:$0xff]
        %v3128 = vld [vmem:[%s2445 + $0x70] sm:$0xff]
        %v3129 = vld [vmem:[%s2445 + $0x88] sm:$0xff]
        %v3130 = vld [vmem:[%s2445 + $0x90] sm:$0xff]
        %v3131 = vld [vmem:[%s2445 + $0xa8] sm:$0xff]
        %v3132 = vld [vmem:[%s2445 + $0xb0] sm:$0xff]
        %v3133 = vld [vmem:[%s2445 + $0xc8] sm:$0xff]
        %v3134 = vld [vmem:[%s2445 + $0xd0] sm:$0xff]
        %v3135 = vld [vmem:[%s2445 + $0xe8] sm:$0xff]
        %v3136 = vld [vmem:[%s2445 + $0xf0] sm:$0xff]
        %v3137 = vld [vmem:[%s2445 + $0x108] sm:$0xff]
        %v3138 = vld [vmem:[%s2445 + $0x110] sm:$0xff]
        %v3139 = vld [vmem:[%s2445 + $0x128] sm:$0xff]
        %v3140 = vld [vmem:[%s2445 + $0x130] sm:$0xff]
        %v3141 = vld [vmem:[%s2445 + $0x148] sm:$0xff]
        %v3142 = vld [vmem:[%s2445 + $0x150] sm:$0xff]
        %v3143 = vld [vmem:[%s2445 + $0x168] sm:$0xff]
        %v3144 = vld [vmem:[%s2445 + $0x170] sm:$0xff]
        %v3145 = vld [vmem:[%s2445 + $0x188] sm:$0xff]
        %v3146 = vld [vmem:[%s2445 + $0x190] sm:$0xff]
        %v3147 = vld [vmem:[%s2445 + $0x1a8] sm:$0xff]
        %v3148 = vld [vmem:[%s2445 + $0x1b0] sm:$0xff]
        %v3149 = vld [vmem:[%s2445 + $0x1c8] sm:$0xff]
        %v3150 = vld [vmem:[%s2445 + $0x1d0] sm:$0xff]
        %v3151 = vld [vmem:[%s2445 + $0x1e8] sm:$0xff]
        %v3152 = vld [vmem:[%s2445 + $0x1f0] sm:$0xff]
        %3185 = vrot.lane.b32.xlu0 %v3121, 32
        %v3186 = vpop.permute.xlu0 %3185
        %3187 = vrot.lane.b32.xlu0 %v3122, 32
        %v3188 = vpop.permute.xlu0 %3187
        %3189 = vrot.lane.b32.xlu0 %v3123, 32
        %v3190 = vpop.permute.xlu0 %3189
        %3191 = vrot.lane.b32.xlu0 %v3124, 32
        %v3192 = vpop.permute.xlu0 %3191
        %3193 = vrot.lane.b32.xlu0 %v3125, 32
        %v3194 = vpop.permute.xlu0 %3193
        %3195 = vrot.lane.b32.xlu0 %v3126, 32
        %v3196 = vpop.permute.xlu0 %3195
        %3197 = vrot.lane.b32.xlu0 %v3127, 32
        %v3198 = vpop.permute.xlu0 %3197
        %3199 = vrot.lane.b32.xlu0 %v3128, 32
        %v3200 = vpop.permute.xlu0 %3199
        %3201 = vrot.lane.b32.xlu0 %v3129, 32
        %v3202 = vpop.permute.xlu0 %3201
        %3203 = vrot.lane.b32.xlu0 %v3130, 32
        %v3204 = vpop.permute.xlu0 %3203
        %3205 = vrot.lane.b32.xlu0 %v3131, 32
        %v3206 = vpop.permute.xlu0 %3205
        %3207 = vrot.lane.b32.xlu0 %v3132, 32
        %v3208 = vpop.permute.xlu0 %3207
        %3209 = vrot.lane.b32.xlu0 %v3133, 32
        %v3210 = vpop.permute.xlu0 %3209
        %3211 = vrot.lane.b32.xlu0 %v3134, 32
        %v3212 = vpop.permute.xlu0 %3211
        %3213 = vrot.lane.b32.xlu0 %v3135, 32
        %v3214 = vpop.permute.xlu0 %3213
        %3215 = vrot.lane.b32.xlu0 %v3136, 32
        %v3216 = vpop.permute.xlu0 %3215
        %3217 = vrot.lane.b32.xlu0 %v3137, 32
        %v3218 = vpop.permute.xlu0 %3217
        %3219 = vrot.lane.b32.xlu0 %v3138, 32
        %v3220 = vpop.permute.xlu0 %3219
        %3221 = vrot.lane.b32.xlu0 %v3139, 32
        %v3222 = vpop.permute.xlu0 %3221
        %3223 = vrot.lane.b32.xlu0 %v3140, 32
        %v3224 = vpop.permute.xlu0 %3223
        %3225 = vrot.lane.b32.xlu0 %v3141, 32
        %v3226 = vpop.permute.xlu0 %3225
        %3227 = vrot.lane.b32.xlu0 %v3142, 32
        %v3228 = vpop.permute.xlu0 %3227
        %3229 = vrot.lane.b32.xlu0 %v3143, 32
        %v3230 = vpop.permute.xlu0 %3229
        %3231 = vrot.lane.b32.xlu0 %v3144, 32
        %v3232 = vpop.permute.xlu0 %3231
        %3233 = vrot.lane.b32.xlu0 %v3145, 32
        %v3234 = vpop.permute.xlu0 %3233
        %3235 = vrot.lane.b32.xlu0 %v3146, 32
        %v3236 = vpop.permute.xlu0 %3235
        %3237 = vrot.lane.b32.xlu0 %v3147, 32
        %v3238 = vpop.permute.xlu0 %3237
        %3239 = vrot.lane.b32.xlu0 %v3148, 32
        %v3240 = vpop.permute.xlu0 %3239
        %3241 = vrot.lane.b32.xlu0 %v3149, 32
        %v3242 = vpop.permute.xlu0 %3241
        %3243 = vrot.lane.b32.xlu0 %v3150, 32
        %v3244 = vpop.permute.xlu0 %3243
        %3245 = vrot.lane.b32.xlu0 %v3151, 32
        %v3246 = vpop.permute.xlu0 %3245
        %3247 = vrot.lane.b32.xlu0 %v3152, 32
        %v3248 = vpop.permute.xlu0 %3247
        %vm3281 = vcmask 326912
        %3282 = vst.msk [vmem:[#allocation5] sm:$0xff] %vm3281, %v3186
        %3283 = vst.msk [vmem:[#allocation5 + $0x8] sm:$0xff] %vm3281, %v3188
        %3284 = vst.msk [vmem:[#allocation5 + $0x10] sm:$0xff] %vm3281, %v3190
        %3285 = vst.msk [vmem:[#allocation5 + $0x18] sm:$0xff] %vm3281, %v3192
        %3286 = vst.msk [vmem:[#allocation5 + $0x20] sm:$0xff] %vm3281, %v3194
        %3287 = vst.msk [vmem:[#allocation5 + $0x28] sm:$0xff] %vm3281, %v3196
        %3288 = vst.msk [vmem:[#allocation5 + $0x30] sm:$0xff] %vm3281, %v3198
        %3289 = vst.msk [vmem:[#allocation5 + $0x38] sm:$0xff] %vm3281, %v3200
        %3290 = vst.msk [vmem:[#allocation5 + $0x40] sm:$0xff] %vm3281, %v3202
        %3291 = vst.msk [vmem:[#allocation5 + $0x48] sm:$0xff] %vm3281, %v3204
        %3292 = vst.msk [vmem:[#allocation5 + $0x50] sm:$0xff] %vm3281, %v3206
        %3293 = vst.msk [vmem:[#allocation5 + $0x58] sm:$0xff] %vm3281, %v3208
        %3294 = vst.msk [vmem:[#allocation5 + $0x60] sm:$0xff] %vm3281, %v3210
        %3295 = vst.msk [vmem:[#allocation5 + $0x68] sm:$0xff] %vm3281, %v3212
        %3296 = vst.msk [vmem:[#allocation5 + $0x70] sm:$0xff] %vm3281, %v3214
        %3297 = vst.msk [vmem:[#allocation5 + $0x78] sm:$0xff] %vm3281, %v3216
        %3298 = vst.msk [vmem:[#allocation5 + $0x80] sm:$0xff] %vm3281, %v3218
        %3299 = vst.msk [vmem:[#allocation5 + $0x88] sm:$0xff] %vm3281, %v3220
        %3300 = vst.msk [vmem:[#allocation5 + $0x90] sm:$0xff] %vm3281, %v3222
        %3301 = vst.msk [vmem:[#allocation5 + $0x98] sm:$0xff] %vm3281, %v3224
        %3302 = vst.msk [vmem:[#allocation5 + $0xa0] sm:$0xff] %vm3281, %v3226
        %3303 = vst.msk [vmem:[#allocation5 + $0xa8] sm:$0xff] %vm3281, %v3228
        %3304 = vst.msk [vmem:[#allocation5 + $0xb0] sm:$0xff] %vm3281, %v3230
        %3305 = vst.msk [vmem:[#allocation5 + $0xb8] sm:$0xff] %vm3281, %v3232
        %3306 = vst.msk [vmem:[#allocation5 + $0xc0] sm:$0xff] %vm3281, %v3234
        %3307 = vst.msk [vmem:[#allocation5 + $0xc8] sm:$0xff] %vm3281, %v3236
        %3308 = vst.msk [vmem:[#allocation5 + $0xd0] sm:$0xff] %vm3281, %v3238
        %3309 = vst.msk [vmem:[#allocation5 + $0xd8] sm:$0xff] %vm3281, %v3240
        %3310 = vst.msk [vmem:[#allocation5 + $0xe0] sm:$0xff] %vm3281, %v3242
        %3311 = vst.msk [vmem:[#allocation5 + $0xe8] sm:$0xff] %vm3281, %v3244
        %3312 = vst.msk [vmem:[#allocation5 + $0xf0] sm:$0xff] %vm3281, %v3246
        %3313 = vst.msk [vmem:[#allocation5 + $0xf8] sm:$0xff] %vm3281, %v3248
        %v3314 = vld [vmem:[%s2445 + $0x9] sm:$0xff]
        %v3315 = vld [vmem:[%s2445 + $0x11] sm:$0xff]
        %v3316 = vld [vmem:[%s2445 + $0x29] sm:$0xff]
        %v3317 = vld [vmem:[%s2445 + $0x31] sm:$0xff]
        %v3318 = vld [vmem:[%s2445 + $0x49] sm:$0xff]
        %v3319 = vld [vmem:[%s2445 + $0x51] sm:$0xff]
        %v3320 = vld [vmem:[%s2445 + $0x69] sm:$0xff]
        %v3321 = vld [vmem:[%s2445 + $0x71] sm:$0xff]
        %v3322 = vld [vmem:[%s2445 + $0x89] sm:$0xff]
        %v3323 = vld [vmem:[%s2445 + $0x91] sm:$0xff]
        %v3324 = vld [vmem:[%s2445 + $0xa9] sm:$0xff]
        %v3325 = vld [vmem:[%s2445 + $0xb1] sm:$0xff]
        %v3326 = vld [vmem:[%s2445 + $0xc9] sm:$0xff]
        %v3327 = vld [vmem:[%s2445 + $0xd1] sm:$0xff]
        %v3328 = vld [vmem:[%s2445 + $0xe9] sm:$0xff]
        %v3329 = vld [vmem:[%s2445 + $0xf1] sm:$0xff]
        %v3330 = vld [vmem:[%s2445 + $0x109] sm:$0xff]
        %v3331 = vld [vmem:[%s2445 + $0x111] sm:$0xff]
        %v3332 = vld [vmem:[%s2445 + $0x129] sm:$0xff]
        %v3333 = vld [vmem:[%s2445 + $0x131] sm:$0xff]
        %v3334 = vld [vmem:[%s2445 + $0x149] sm:$0xff]
        %v3335 = vld [vmem:[%s2445 + $0x151] sm:$0xff]
        %v3336 = vld [vmem:[%s2445 + $0x169] sm:$0xff]
        %v3337 = vld [vmem:[%s2445 + $0x171] sm:$0xff]
        %v3338 = vld [vmem:[%s2445 + $0x189] sm:$0xff]
        %v3339 = vld [vmem:[%s2445 + $0x191] sm:$0xff]
        %v3340 = vld [vmem:[%s2445 + $0x1a9] sm:$0xff]
        %v3341 = vld [vmem:[%s2445 + $0x1b1] sm:$0xff]
        %v3342 = vld [vmem:[%s2445 + $0x1c9] sm:$0xff]
        %v3343 = vld [vmem:[%s2445 + $0x1d1] sm:$0xff]
        %v3344 = vld [vmem:[%s2445 + $0x1e9] sm:$0xff]
        %v3345 = vld [vmem:[%s2445 + $0x1f1] sm:$0xff]
        %3378 = vrot.lane.b32.xlu0 %v3314, 40
        %v3379 = vpop.permute.xlu0 %3378
        %3380 = vrot.lane.b32.xlu0 %v3315, 40
        %v3381 = vpop.permute.xlu0 %3380
        %3382 = vrot.lane.b32.xlu0 %v3316, 40
        %v3383 = vpop.permute.xlu0 %3382
        %3384 = vrot.lane.b32.xlu0 %v3317, 40
        %v3385 = vpop.permute.xlu0 %3384
        %3386 = vrot.lane.b32.xlu0 %v3318, 40
        %v3387 = vpop.permute.xlu0 %3386
        %3388 = vrot.lane.b32.xlu0 %v3319, 40
        %v3389 = vpop.permute.xlu0 %3388
        %3390 = vrot.lane.b32.xlu0 %v3320, 40
        %v3391 = vpop.permute.xlu0 %3390
        %3392 = vrot.lane.b32.xlu0 %v3321, 40
        %v3393 = vpop.permute.xlu0 %3392
        %3394 = vrot.lane.b32.xlu0 %v3322, 40
        %v3395 = vpop.permute.xlu0 %3394
        %3396 = vrot.lane.b32.xlu0 %v3323, 40
        %v3397 = vpop.permute.xlu0 %3396
        %3398 = vrot.lane.b32.xlu0 %v3324, 40
        %v3399 = vpop.permute.xlu0 %3398
        %3400 = vrot.lane.b32.xlu0 %v3325, 40
        %v3401 = vpop.permute.xlu0 %3400
        %3402 = vrot.lane.b32.xlu0 %v3326, 40
        %v3403 = vpop.permute.xlu0 %3402
        %3404 = vrot.lane.b32.xlu0 %v3327, 40
        %v3405 = vpop.permute.xlu0 %3404
        %3406 = vrot.lane.b32.xlu0 %v3328, 40
        %v3407 = vpop.permute.xlu0 %3406
        %3408 = vrot.lane.b32.xlu0 %v3329, 40
        %v3409 = vpop.permute.xlu0 %3408
        %3410 = vrot.lane.b32.xlu0 %v3330, 40
        %v3411 = vpop.permute.xlu0 %3410
        %3412 = vrot.lane.b32.xlu0 %v3331, 40
        %v3413 = vpop.permute.xlu0 %3412
        %3414 = vrot.lane.b32.xlu0 %v3332, 40
        %v3415 = vpop.permute.xlu0 %3414
        %3416 = vrot.lane.b32.xlu0 %v3333, 40
        %v3417 = vpop.permute.xlu0 %3416
        %3418 = vrot.lane.b32.xlu0 %v3334, 40
        %v3419 = vpop.permute.xlu0 %3418
        %3420 = vrot.lane.b32.xlu0 %v3335, 40
        %v3421 = vpop.permute.xlu0 %3420
        %3422 = vrot.lane.b32.xlu0 %v3336, 40
        %v3423 = vpop.permute.xlu0 %3422
        %3424 = vrot.lane.b32.xlu0 %v3337, 40
        %v3425 = vpop.permute.xlu0 %3424
        %3426 = vrot.lane.b32.xlu0 %v3338, 40
        %v3427 = vpop.permute.xlu0 %3426
        %3428 = vrot.lane.b32.xlu0 %v3339, 40
        %v3429 = vpop.permute.xlu0 %3428
        %3430 = vrot.lane.b32.xlu0 %v3340, 40
        %v3431 = vpop.permute.xlu0 %3430
        %3432 = vrot.lane.b32.xlu0 %v3341, 40
        %v3433 = vpop.permute.xlu0 %3432
        %3434 = vrot.lane.b32.xlu0 %v3342, 40
        %v3435 = vpop.permute.xlu0 %3434
        %3436 = vrot.lane.b32.xlu0 %v3343, 40
        %v3437 = vpop.permute.xlu0 %3436
        %3438 = vrot.lane.b32.xlu0 %v3344, 40
        %v3439 = vpop.permute.xlu0 %3438
        %3440 = vrot.lane.b32.xlu0 %v3345, 40
        %v3441 = vpop.permute.xlu0 %3440
        %vm3474 = vcmask 392512
        %3475 = vst.msk [vmem:[#allocation5] sm:$0xff] %vm3474, %v3379
        %3476 = vst.msk [vmem:[#allocation5 + $0x8] sm:$0xff] %vm3474, %v3381
        %3477 = vst.msk [vmem:[#allocation5 + $0x10] sm:$0xff] %vm3474, %v3383
        %3478 = vst.msk [vmem:[#allocation5 + $0x18] sm:$0xff] %vm3474, %v3385
        %3479 = vst.msk [vmem:[#allocation5 + $0x20] sm:$0xff] %vm3474, %v3387
        %3480 = vst.msk [vmem:[#allocation5 + $0x28] sm:$0xff] %vm3474, %v3389
        %3481 = vst.msk [vmem:[#allocation5 + $0x30] sm:$0xff] %vm3474, %v3391
        %3482 = vst.msk [vmem:[#allocation5 + $0x38] sm:$0xff] %vm3474, %v3393
        %3483 = vst.msk [vmem:[#allocation5 + $0x40] sm:$0xff] %vm3474, %v3395
        %3484 = vst.msk [vmem:[#allocation5 + $0x48] sm:$0xff] %vm3474, %v3397
        %3485 = vst.msk [vmem:[#allocation5 + $0x50] sm:$0xff] %vm3474, %v3399
        %3486 = vst.msk [vmem:[#allocation5 + $0x58] sm:$0xff] %vm3474, %v3401
        %3487 = vst.msk [vmem:[#allocation5 + $0x60] sm:$0xff] %vm3474, %v3403
        %3488 = vst.msk [vmem:[#allocation5 + $0x68] sm:$0xff] %vm3474, %v3405
        %3489 = vst.msk [vmem:[#allocation5 + $0x70] sm:$0xff] %vm3474, %v3407
        %3490 = vst.msk [vmem:[#allocation5 + $0x78] sm:$0xff] %vm3474, %v3409
        %3491 = vst.msk [vmem:[#allocation5 + $0x80] sm:$0xff] %vm3474, %v3411
        %3492 = vst.msk [vmem:[#allocation5 + $0x88] sm:$0xff] %vm3474, %v3413
        %3493 = vst.msk [vmem:[#allocation5 + $0x90] sm:$0xff] %vm3474, %v3415
        %3494 = vst.msk [vmem:[#allocation5 + $0x98] sm:$0xff] %vm3474, %v3417
        %3495 = vst.msk [vmem:[#allocation5 + $0xa0] sm:$0xff] %vm3474, %v3419
        %3496 = vst.msk [vmem:[#allocation5 + $0xa8] sm:$0xff] %vm3474, %v3421
        %3497 = vst.msk [vmem:[#allocation5 + $0xb0] sm:$0xff] %vm3474, %v3423
        %3498 = vst.msk [vmem:[#allocation5 + $0xb8] sm:$0xff] %vm3474, %v3425
        %3499 = vst.msk [vmem:[#allocation5 + $0xc0] sm:$0xff] %vm3474, %v3427
        %3500 = vst.msk [vmem:[#allocation5 + $0xc8] sm:$0xff] %vm3474, %v3429
        %3501 = vst.msk [vmem:[#allocation5 + $0xd0] sm:$0xff] %vm3474, %v3431
        %3502 = vst.msk [vmem:[#allocation5 + $0xd8] sm:$0xff] %vm3474, %v3433
        %3503 = vst.msk [vmem:[#allocation5 + $0xe0] sm:$0xff] %vm3474, %v3435
        %3504 = vst.msk [vmem:[#allocation5 + $0xe8] sm:$0xff] %vm3474, %v3437
        %3505 = vst.msk [vmem:[#allocation5 + $0xf0] sm:$0xff] %vm3474, %v3439
        %3506 = vst.msk [vmem:[#allocation5 + $0xf8] sm:$0xff] %vm3474, %v3441
        %s3507 = scalar_lea.vmem [#allocation4], 64
        %v3508 = vld [vmem:[%s3507 + $0x7] sm:$0xff]
        %v3509 = vld [vmem:[%s3507 + $0xf] sm:$0xff]
        %v3510 = vld [vmem:[%s3507 + $0x27] sm:$0xff]
        %v3511 = vld [vmem:[%s3507 + $0x2f] sm:$0xff]
        %v3512 = vld [vmem:[%s3507 + $0x47] sm:$0xff]
        %v3513 = vld [vmem:[%s3507 + $0x4f] sm:$0xff]
        %v3514 = vld [vmem:[%s3507 + $0x67] sm:$0xff]
        %v3515 = vld [vmem:[%s3507 + $0x6f] sm:$0xff]
        %v3516 = vld [vmem:[%s3507 + $0x87] sm:$0xff]
        %v3517 = vld [vmem:[%s3507 + $0x8f] sm:$0xff]
        %v3518 = vld [vmem:[%s3507 + $0xa7] sm:$0xff]
        %v3519 = vld [vmem:[%s3507 + $0xaf] sm:$0xff]
        %v3520 = vld [vmem:[%s3507 + $0xc7] sm:$0xff]
        %v3521 = vld [vmem:[%s3507 + $0xcf] sm:$0xff]
        %v3522 = vld [vmem:[%s3507 + $0xe7] sm:$0xff]
        %v3523 = vld [vmem:[%s3507 + $0xef] sm:$0xff]
        %v3524 = vld [vmem:[%s3507 + $0x107] sm:$0xff]
        %v3525 = vld [vmem:[%s3507 + $0x10f] sm:$0xff]
        %v3526 = vld [vmem:[%s3507 + $0x127] sm:$0xff]
        %v3527 = vld [vmem:[%s3507 + $0x12f] sm:$0xff]
        %v3528 = vld [vmem:[%s3507 + $0x147] sm:$0xff]
        %v3529 = vld [vmem:[%s3507 + $0x14f] sm:$0xff]
        %v3530 = vld [vmem:[%s3507 + $0x167] sm:$0xff]
        %v3531 = vld [vmem:[%s3507 + $0x16f] sm:$0xff]
        %v3532 = vld [vmem:[%s3507 + $0x187] sm:$0xff]
        %v3533 = vld [vmem:[%s3507 + $0x18f] sm:$0xff]
        %v3534 = vld [vmem:[%s3507 + $0x1a7] sm:$0xff]
        %v3535 = vld [vmem:[%s3507 + $0x1af] sm:$0xff]
        %v3536 = vld [vmem:[%s3507 + $0x1c7] sm:$0xff]
        %v3537 = vld [vmem:[%s3507 + $0x1cf] sm:$0xff]
        %v3538 = vld [vmem:[%s3507 + $0x1e7] sm:$0xff]
        %v3539 = vld [vmem:[%s3507 + $0x1ef] sm:$0xff]
        %3572 = vrot.lane.b32.xlu0 %v3508, 48
        %v3573 = vpop.permute.xlu0 %3572
        %3574 = vrot.lane.b32.xlu0 %v3509, 48
        %v3575 = vpop.permute.xlu0 %3574
        %3576 = vrot.lane.b32.xlu0 %v3510, 48
        %v3577 = vpop.permute.xlu0 %3576
        %3578 = vrot.lane.b32.xlu0 %v3511, 48
        %v3579 = vpop.permute.xlu0 %3578
        %3580 = vrot.lane.b32.xlu0 %v3512, 48
        %v3581 = vpop.permute.xlu0 %3580
        %3582 = vrot.lane.b32.xlu0 %v3513, 48
        %v3583 = vpop.permute.xlu0 %3582
        %3584 = vrot.lane.b32.xlu0 %v3514, 48
        %v3585 = vpop.permute.xlu0 %3584
        %3586 = vrot.lane.b32.xlu0 %v3515, 48
        %v3587 = vpop.permute.xlu0 %3586
        %3588 = vrot.lane.b32.xlu0 %v3516, 48
        %v3589 = vpop.permute.xlu0 %3588
        %3590 = vrot.lane.b32.xlu0 %v3517, 48
        %v3591 = vpop.permute.xlu0 %3590
        %3592 = vrot.lane.b32.xlu0 %v3518, 48
        %v3593 = vpop.permute.xlu0 %3592
        %3594 = vrot.lane.b32.xlu0 %v3519, 48
        %v3595 = vpop.permute.xlu0 %3594
        %3596 = vrot.lane.b32.xlu0 %v3520, 48
        %v3597 = vpop.permute.xlu0 %3596
        %3598 = vrot.lane.b32.xlu0 %v3521, 48
        %v3599 = vpop.permute.xlu0 %3598
        %3600 = vrot.lane.b32.xlu0 %v3522, 48
        %v3601 = vpop.permute.xlu0 %3600
        %3602 = vrot.lane.b32.xlu0 %v3523, 48
        %v3603 = vpop.permute.xlu0 %3602
        %3604 = vrot.lane.b32.xlu0 %v3524, 48
        %v3605 = vpop.permute.xlu0 %3604
        %3606 = vrot.lane.b32.xlu0 %v3525, 48
        %v3607 = vpop.permute.xlu0 %3606
        %3608 = vrot.lane.b32.xlu0 %v3526, 48
        %v3609 = vpop.permute.xlu0 %3608
        %3610 = vrot.lane.b32.xlu0 %v3527, 48
        %v3611 = vpop.permute.xlu0 %3610
        %3612 = vrot.lane.b32.xlu0 %v3528, 48
        %v3613 = vpop.permute.xlu0 %3612
        %3614 = vrot.lane.b32.xlu0 %v3529, 48
        %v3615 = vpop.permute.xlu0 %3614
        %3616 = vrot.lane.b32.xlu0 %v3530, 48
        %v3617 = vpop.permute.xlu0 %3616
        %3618 = vrot.lane.b32.xlu0 %v3531, 48
        %v3619 = vpop.permute.xlu0 %3618
        %3620 = vrot.lane.b32.xlu0 %v3532, 48
        %v3621 = vpop.permute.xlu0 %3620
        %3622 = vrot.lane.b32.xlu0 %v3533, 48
        %v3623 = vpop.permute.xlu0 %3622
        %3624 = vrot.lane.b32.xlu0 %v3534, 48
        %v3625 = vpop.permute.xlu0 %3624
        %3626 = vrot.lane.b32.xlu0 %v3535, 48
        %v3627 = vpop.permute.xlu0 %3626
        %3628 = vrot.lane.b32.xlu0 %v3536, 48
        %v3629 = vpop.permute.xlu0 %3628
        %3630 = vrot.lane.b32.xlu0 %v3537, 48
        %v3631 = vpop.permute.xlu0 %3630
        %3632 = vrot.lane.b32.xlu0 %v3538, 48
        %v3633 = vpop.permute.xlu0 %3632
        %3634 = vrot.lane.b32.xlu0 %v3539, 48
        %v3635 = vpop.permute.xlu0 %3634
        %vm3668 = vcmask 458112
        %3669 = vst.msk [vmem:[#allocation5] sm:$0xff] %vm3668, %v3573
        %3670 = vst.msk [vmem:[#allocation5 + $0x8] sm:$0xff] %vm3668, %v3575
        %3671 = vst.msk [vmem:[#allocation5 + $0x10] sm:$0xff] %vm3668, %v3577
        %3672 = vst.msk [vmem:[#allocation5 + $0x18] sm:$0xff] %vm3668, %v3579
        %3673 = vst.msk [vmem:[#allocation5 + $0x20] sm:$0xff] %vm3668, %v3581
        %3674 = vst.msk [vmem:[#allocation5 + $0x28] sm:$0xff] %vm3668, %v3583
        %3675 = vst.msk [vmem:[#allocation5 + $0x30] sm:$0xff] %vm3668, %v3585
        %3676 = vst.msk [vmem:[#allocation5 + $0x38] sm:$0xff] %vm3668, %v3587
        %3677 = vst.msk [vmem:[#allocation5 + $0x40] sm:$0xff] %vm3668, %v3589
        %3678 = vst.msk [vmem:[#allocation5 + $0x48] sm:$0xff] %vm3668, %v3591
        %3679 = vst.msk [vmem:[#allocation5 + $0x50] sm:$0xff] %vm3668, %v3593
        %3680 = vst.msk [vmem:[#allocation5 + $0x58] sm:$0xff] %vm3668, %v3595
        %3681 = vst.msk [vmem:[#allocation5 + $0x60] sm:$0xff] %vm3668, %v3597
        %3682 = vst.msk [vmem:[#allocation5 + $0x68] sm:$0xff] %vm3668, %v3599
        %3683 = vst.msk [vmem:[#allocation5 + $0x70] sm:$0xff] %vm3668, %v3601
        %3684 = vst.msk [vmem:[#allocation5 + $0x78] sm:$0xff] %vm3668, %v3603
        %3685 = vst.msk [vmem:[#allocation5 + $0x80] sm:$0xff] %vm3668, %v3605
        %3686 = vst.msk [vmem:[#allocation5 + $0x88] sm:$0xff] %vm3668, %v3607
        %3687 = vst.msk [vmem:[#allocation5 + $0x90] sm:$0xff] %vm3668, %v3609
        %3688 = vst.msk [vmem:[#allocation5 + $0x98] sm:$0xff] %vm3668, %v3611
        %3689 = vst.msk [vmem:[#allocation5 + $0xa0] sm:$0xff] %vm3668, %v3613
        %3690 = vst.msk [vmem:[#allocation5 + $0xa8] sm:$0xff] %vm3668, %v3615
        %3691 = vst.msk [vmem:[#allocation5 + $0xb0] sm:$0xff] %vm3668, %v3617
        %3692 = vst.msk [vmem:[#allocation5 + $0xb8] sm:$0xff] %vm3668, %v3619
        %3693 = vst.msk [vmem:[#allocation5 + $0xc0] sm:$0xff] %vm3668, %v3621
        %3694 = vst.msk [vmem:[#allocation5 + $0xc8] sm:$0xff] %vm3668, %v3623
        %3695 = vst.msk [vmem:[#allocation5 + $0xd0] sm:$0xff] %vm3668, %v3625
        %3696 = vst.msk [vmem:[#allocation5 + $0xd8] sm:$0xff] %vm3668, %v3627
        %3697 = vst.msk [vmem:[#allocation5 + $0xe0] sm:$0xff] %vm3668, %v3629
        %3698 = vst.msk [vmem:[#allocation5 + $0xe8] sm:$0xff] %vm3668, %v3631
        %3699 = vst.msk [vmem:[#allocation5 + $0xf0] sm:$0xff] %vm3668, %v3633
        %3700 = vst.msk [vmem:[#allocation5 + $0xf8] sm:$0xff] %vm3668, %v3635
        %v3701 = vld [vmem:[%s3507 + $0x8] sm:$0xff]
        %v3702 = vld [vmem:[%s3507 + $0x10] sm:$0xff]
        %v3703 = vld [vmem:[%s3507 + $0x28] sm:$0xff]
        %v3704 = vld [vmem:[%s3507 + $0x30] sm:$0xff]
        %v3705 = vld [vmem:[%s3507 + $0x48] sm:$0xff]
        %v3706 = vld [vmem:[%s3507 + $0x50] sm:$0xff]
        %v3707 = vld [vmem:[%s3507 + $0x68] sm:$0xff]
        %v3708 = vld [vmem:[%s3507 + $0x70] sm:$0xff]
        %v3709 = vld [vmem:[%s3507 + $0x88] sm:$0xff]
        %v3710 = vld [vmem:[%s3507 + $0x90] sm:$0xff]
        %v3711 = vld [vmem:[%s3507 + $0xa8] sm:$0xff]
        %v3712 = vld [vmem:[%s3507 + $0xb0] sm:$0xff]
        %v3713 = vld [vmem:[%s3507 + $0xc8] sm:$0xff]
        %v3714 = vld [vmem:[%s3507 + $0xd0] sm:$0xff]
        %v3715 = vld [vmem:[%s3507 + $0xe8] sm:$0xff]
        %v3716 = vld [vmem:[%s3507 + $0xf0] sm:$0xff]
        %v3717 = vld [vmem:[%s3507 + $0x108] sm:$0xff]
        %v3718 = vld [vmem:[%s3507 + $0x110] sm:$0xff]
        %v3719 = vld [vmem:[%s3507 + $0x128] sm:$0xff]
        %v3720 = vld [vmem:[%s3507 + $0x130] sm:$0xff]
        %v3721 = vld [vmem:[%s3507 + $0x148] sm:$0xff]
        %v3722 = vld [vmem:[%s3507 + $0x150] sm:$0xff]
        %v3723 = vld [vmem:[%s3507 + $0x168] sm:$0xff]
        %v3724 = vld [vmem:[%s3507 + $0x170] sm:$0xff]
        %v3725 = vld [vmem:[%s3507 + $0x188] sm:$0xff]
        %v3726 = vld [vmem:[%s3507 + $0x190] sm:$0xff]
        %v3727 = vld [vmem:[%s3507 + $0x1a8] sm:$0xff]
        %v3728 = vld [vmem:[%s3507 + $0x1b0] sm:$0xff]
        %v3729 = vld [vmem:[%s3507 + $0x1c8] sm:$0xff]
        %v3730 = vld [vmem:[%s3507 + $0x1d0] sm:$0xff]
        %v3731 = vld [vmem:[%s3507 + $0x1e8] sm:$0xff]
        %v3732 = vld [vmem:[%s3507 + $0x1f0] sm:$0xff]
        %3765 = vrot.lane.b32.xlu0 %v3701, 56
        %v3766 = vpop.permute.xlu0 %3765
        %3767 = vrot.lane.b32.xlu0 %v3702, 56
        %v3768 = vpop.permute.xlu0 %3767
        %3769 = vrot.lane.b32.xlu0 %v3703, 56
        %v3770 = vpop.permute.xlu0 %3769
        %3771 = vrot.lane.b32.xlu0 %v3704, 56
        %v3772 = vpop.permute.xlu0 %3771
        %3773 = vrot.lane.b32.xlu0 %v3705, 56
        %v3774 = vpop.permute.xlu0 %3773
        %3775 = vrot.lane.b32.xlu0 %v3706, 56
        %v3776 = vpop.permute.xlu0 %3775
        %3777 = vrot.lane.b32.xlu0 %v3707, 56
        %v3778 = vpop.permute.xlu0 %3777
        %3779 = vrot.lane.b32.xlu0 %v3708, 56
        %v3780 = vpop.permute.xlu0 %3779
        %3781 = vrot.lane.b32.xlu0 %v3709, 56
        %v3782 = vpop.permute.xlu0 %3781
        %3783 = vrot.lane.b32.xlu0 %v3710, 56
        %v3784 = vpop.permute.xlu0 %3783
        %3785 = vrot.lane.b32.xlu0 %v3711, 56
        %v3786 = vpop.permute.xlu0 %3785
        %3787 = vrot.lane.b32.xlu0 %v3712, 56
        %v3788 = vpop.permute.xlu0 %3787
        %3789 = vrot.lane.b32.xlu0 %v3713, 56
        %v3790 = vpop.permute.xlu0 %3789
        %3791 = vrot.lane.b32.xlu0 %v3714, 56
        %v3792 = vpop.permute.xlu0 %3791
        %3793 = vrot.lane.b32.xlu0 %v3715, 56
        %v3794 = vpop.permute.xlu0 %3793
        %3795 = vrot.lane.b32.xlu0 %v3716, 56
        %v3796 = vpop.permute.xlu0 %3795
        %3797 = vrot.lane.b32.xlu0 %v3717, 56
        %v3798 = vpop.permute.xlu0 %3797
        %3799 = vrot.lane.b32.xlu0 %v3718, 56
        %v3800 = vpop.permute.xlu0 %3799
        %3801 = vrot.lane.b32.xlu0 %v3719, 56
        %v3802 = vpop.permute.xlu0 %3801
        %3803 = vrot.lane.b32.xlu0 %v3720, 56
        %v3804 = vpop.permute.xlu0 %3803
        %3805 = vrot.lane.b32.xlu0 %v3721, 56
        %v3806 = vpop.permute.xlu0 %3805
        %3807 = vrot.lane.b32.xlu0 %v3722, 56
        %v3808 = vpop.permute.xlu0 %3807
        %3809 = vrot.lane.b32.xlu0 %v3723, 56
        %v3810 = vpop.permute.xlu0 %3809
        %3811 = vrot.lane.b32.xlu0 %v3724, 56
        %v3812 = vpop.permute.xlu0 %3811
        %3813 = vrot.lane.b32.xlu0 %v3725, 56
        %v3814 = vpop.permute.xlu0 %3813
        %3815 = vrot.lane.b32.xlu0 %v3726, 56
        %v3816 = vpop.permute.xlu0 %3815
        %3817 = vrot.lane.b32.xlu0 %v3727, 56
        %v3818 = vpop.permute.xlu0 %3817
        %3819 = vrot.lane.b32.xlu0 %v3728, 56
        %v3820 = vpop.permute.xlu0 %3819
        %3821 = vrot.lane.b32.xlu0 %v3729, 56
        %v3822 = vpop.permute.xlu0 %3821
        %3823 = vrot.lane.b32.xlu0 %v3730, 56
        %v3824 = vpop.permute.xlu0 %3823
        %3825 = vrot.lane.b32.xlu0 %v3731, 56
        %v3826 = vpop.permute.xlu0 %3825
        %3827 = vrot.lane.b32.xlu0 %v3732, 56
        %v3828 = vpop.permute.xlu0 %3827
        %vm3861 = vcmask 523712
        %3862 = vst.msk [vmem:[#allocation5] sm:$0xff] %vm3861, %v3766
        %3863 = vst.msk [vmem:[#allocation5 + $0x8] sm:$0xff] %vm3861, %v3768
        %3864 = vst.msk [vmem:[#allocation5 + $0x10] sm:$0xff] %vm3861, %v3770
        %3865 = vst.msk [vmem:[#allocation5 + $0x18] sm:$0xff] %vm3861, %v3772
        %3866 = vst.msk [vmem:[#allocation5 + $0x20] sm:$0xff] %vm3861, %v3774
        %3867 = vst.msk [vmem:[#allocation5 + $0x28] sm:$0xff] %vm3861, %v3776
        %3868 = vst.msk [vmem:[#allocation5 + $0x30] sm:$0xff] %vm3861, %v3778
        %3869 = vst.msk [vmem:[#allocation5 + $0x38] sm:$0xff] %vm3861, %v3780
        %3870 = vst.msk [vmem:[#allocation5 + $0x40] sm:$0xff] %vm3861, %v3782
        %3871 = vst.msk [vmem:[#allocation5 + $0x48] sm:$0xff] %vm3861, %v3784
        %3872 = vst.msk [vmem:[#allocation5 + $0x50] sm:$0xff] %vm3861, %v3786
        %3873 = vst.msk [vmem:[#allocation5 + $0x58] sm:$0xff] %vm3861, %v3788
        %3874 = vst.msk [vmem:[#allocation5 + $0x60] sm:$0xff] %vm3861, %v3790
        %3875 = vst.msk [vmem:[#allocation5 + $0x68] sm:$0xff] %vm3861, %v3792
        %3876 = vst.msk [vmem:[#allocation5 + $0x70] sm:$0xff] %vm3861, %v3794
        %3877 = vst.msk [vmem:[#allocation5 + $0x78] sm:$0xff] %vm3861, %v3796
        %3878 = vst.msk [vmem:[#allocation5 + $0x80] sm:$0xff] %vm3861, %v3798
        %3879 = vst.msk [vmem:[#allocation5 + $0x88] sm:$0xff] %vm3861, %v3800
        %3880 = vst.msk [vmem:[#allocation5 + $0x90] sm:$0xff] %vm3861, %v3802
        %3881 = vst.msk [vmem:[#allocation5 + $0x98] sm:$0xff] %vm3861, %v3804
        %3882 = vst.msk [vmem:[#allocation5 + $0xa0] sm:$0xff] %vm3861, %v3806
        %3883 = vst.msk [vmem:[#allocation5 + $0xa8] sm:$0xff] %vm3861, %v3808
        %3884 = vst.msk [vmem:[#allocation5 + $0xb0] sm:$0xff] %vm3861, %v3810
        %3885 = vst.msk [vmem:[#allocation5 + $0xb8] sm:$0xff] %vm3861, %v3812
        %3886 = vst.msk [vmem:[#allocation5 + $0xc0] sm:$0xff] %vm3861, %v3814
        %3887 = vst.msk [vmem:[#allocation5 + $0xc8] sm:$0xff] %vm3861, %v3816
        %3888 = vst.msk [vmem:[#allocation5 + $0xd0] sm:$0xff] %vm3861, %v3818
        %3889 = vst.msk [vmem:[#allocation5 + $0xd8] sm:$0xff] %vm3861, %v3820
        %3890 = vst.msk [vmem:[#allocation5 + $0xe0] sm:$0xff] %vm3861, %v3822
        %3891 = vst.msk [vmem:[#allocation5 + $0xe8] sm:$0xff] %vm3861, %v3824
        %3892 = vst.msk [vmem:[#allocation5 + $0xf0] sm:$0xff] %vm3861, %v3826
        %3893 = vst.msk [vmem:[#allocation5 + $0xf8] sm:$0xff] %vm3861, %v3828
        %v3894 = vld [vmem:[%s3507 + $0x9] sm:$0xff]
        %v3895 = vld [vmem:[%s3507 + $0x11] sm:$0xff]
        %v3896 = vld [vmem:[%s3507 + $0x29] sm:$0xff]
        %v3897 = vld [vmem:[%s3507 + $0x31] sm:$0xff]
        %v3898 = vld [vmem:[%s3507 + $0x49] sm:$0xff]
        %v3899 = vld [vmem:[%s3507 + $0x51] sm:$0xff]
        %v3900 = vld [vmem:[%s3507 + $0x69] sm:$0xff]
        %v3901 = vld [vmem:[%s3507 + $0x71] sm:$0xff]
        %v3902 = vld [vmem:[%s3507 + $0x89] sm:$0xff]
        %v3903 = vld [vmem:[%s3507 + $0x91] sm:$0xff]
        %v3904 = vld [vmem:[%s3507 + $0xa9] sm:$0xff]
        %v3905 = vld [vmem:[%s3507 + $0xb1] sm:$0xff]
        %v3906 = vld [vmem:[%s3507 + $0xc9] sm:$0xff]
        %v3907 = vld [vmem:[%s3507 + $0xd1] sm:$0xff]
        %v3908 = vld [vmem:[%s3507 + $0xe9] sm:$0xff]
        %v3909 = vld [vmem:[%s3507 + $0xf1] sm:$0xff]
        %v3910 = vld [vmem:[%s3507 + $0x109] sm:$0xff]
        %v3911 = vld [vmem:[%s3507 + $0x111] sm:$0xff]
        %v3912 = vld [vmem:[%s3507 + $0x129] sm:$0xff]
        %v3913 = vld [vmem:[%s3507 + $0x131] sm:$0xff]
        %v3914 = vld [vmem:[%s3507 + $0x149] sm:$0xff]
        %v3915 = vld [vmem:[%s3507 + $0x151] sm:$0xff]
        %v3916 = vld [vmem:[%s3507 + $0x169] sm:$0xff]
        %v3917 = vld [vmem:[%s3507 + $0x171] sm:$0xff]
        %v3918 = vld [vmem:[%s3507 + $0x189] sm:$0xff]
        %v3919 = vld [vmem:[%s3507 + $0x191] sm:$0xff]
        %v3920 = vld [vmem:[%s3507 + $0x1a9] sm:$0xff]
        %v3921 = vld [vmem:[%s3507 + $0x1b1] sm:$0xff]
        %v3922 = vld [vmem:[%s3507 + $0x1c9] sm:$0xff]
        %v3923 = vld [vmem:[%s3507 + $0x1d1] sm:$0xff]
        %v3924 = vld [vmem:[%s3507 + $0x1e9] sm:$0xff]
        %v3925 = vld [vmem:[%s3507 + $0x1f1] sm:$0xff]
        %3958 = vrot.lane.b32.xlu0 %v3894, 64
        %v3959 = vpop.permute.xlu0 %3958
        %3960 = vrot.lane.b32.xlu0 %v3895, 64
        %v3961 = vpop.permute.xlu0 %3960
        %3962 = vrot.lane.b32.xlu0 %v3896, 64
        %v3963 = vpop.permute.xlu0 %3962
        %3964 = vrot.lane.b32.xlu0 %v3897, 64
        %v3965 = vpop.permute.xlu0 %3964
        %3966 = vrot.lane.b32.xlu0 %v3898, 64
        %v3967 = vpop.permute.xlu0 %3966
        %3968 = vrot.lane.b32.xlu0 %v3899, 64
        %v3969 = vpop.permute.xlu0 %3968
        %3970 = vrot.lane.b32.xlu0 %v3900, 64
        %v3971 = vpop.permute.xlu0 %3970
        %3972 = vrot.lane.b32.xlu0 %v3901, 64
        %v3973 = vpop.permute.xlu0 %3972
        %3974 = vrot.lane.b32.xlu0 %v3902, 64
        %v3975 = vpop.permute.xlu0 %3974
        %3976 = vrot.lane.b32.xlu0 %v3903, 64
        %v3977 = vpop.permute.xlu0 %3976
        %3978 = vrot.lane.b32.xlu0 %v3904, 64
        %v3979 = vpop.permute.xlu0 %3978
        %3980 = vrot.lane.b32.xlu0 %v3905, 64
        %v3981 = vpop.permute.xlu0 %3980
        %3982 = vrot.lane.b32.xlu0 %v3906, 64
        %v3983 = vpop.permute.xlu0 %3982
        %3984 = vrot.lane.b32.xlu0 %v3907, 64
        %v3985 = vpop.permute.xlu0 %3984
        %3986 = vrot.lane.b32.xlu0 %v3908, 64
        %v3987 = vpop.permute.xlu0 %3986
        %3988 = vrot.lane.b32.xlu0 %v3909, 64
        %v3989 = vpop.permute.xlu0 %3988
        %3990 = vrot.lane.b32.xlu0 %v3910, 64
        %v3991 = vpop.permute.xlu0 %3990
        %3992 = vrot.lane.b32.xlu0 %v3911, 64
        %v3993 = vpop.permute.xlu0 %3992
        %3994 = vrot.lane.b32.xlu0 %v3912, 64
        %v3995 = vpop.permute.xlu0 %3994
        %3996 = vrot.lane.b32.xlu0 %v3913, 64
        %v3997 = vpop.permute.xlu0 %3996
        %3998 = vrot.lane.b32.xlu0 %v3914, 64
        %v3999 = vpop.permute.xlu0 %3998
        %4000 = vrot.lane.b32.xlu0 %v3915, 64
        %v4001 = vpop.permute.xlu0 %4000
        %4002 = vrot.lane.b32.xlu0 %v3916, 64
        %v4003 = vpop.permute.xlu0 %4002
        %4004 = vrot.lane.b32.xlu0 %v3917, 64
        %v4005 = vpop.permute.xlu0 %4004
        %4006 = vrot.lane.b32.xlu0 %v3918, 64
        %v4007 = vpop.permute.xlu0 %4006
        %4008 = vrot.lane.b32.xlu0 %v3919, 64
        %v4009 = vpop.permute.xlu0 %4008
        %4010 = vrot.lane.b32.xlu0 %v3920, 64
        %v4011 = vpop.permute.xlu0 %4010
        %4012 = vrot.lane.b32.xlu0 %v3921, 64
        %v4013 = vpop.permute.xlu0 %4012
        %4014 = vrot.lane.b32.xlu0 %v3922, 64
        %v4015 = vpop.permute.xlu0 %4014
        %4016 = vrot.lane.b32.xlu0 %v3923, 64
        %v4017 = vpop.permute.xlu0 %4016
        %4018 = vrot.lane.b32.xlu0 %v3924, 64
        %v4019 = vpop.permute.xlu0 %4018
        %4020 = vrot.lane.b32.xlu0 %v3925, 64
        %v4021 = vpop.permute.xlu0 %4020
        %vm4054 = vcmask 589312
        %4055 = vst.msk [vmem:[#allocation5] sm:$0xff] %vm4054, %v3959
        %4056 = vst.msk [vmem:[#allocation5 + $0x8] sm:$0xff] %vm4054, %v3961
        %4057 = vst.msk [vmem:[#allocation5 + $0x10] sm:$0xff] %vm4054, %v3963
        %4058 = vst.msk [vmem:[#allocation5 + $0x18] sm:$0xff] %vm4054, %v3965
        %4059 = vst.msk [vmem:[#allocation5 + $0x20] sm:$0xff] %vm4054, %v3967
        %4060 = vst.msk [vmem:[#allocation5 + $0x28] sm:$0xff] %vm4054, %v3969
        %4061 = vst.msk [vmem:[#allocation5 + $0x30] sm:$0xff] %vm4054, %v3971
        %4062 = vst.msk [vmem:[#allocation5 + $0x38] sm:$0xff] %vm4054, %v3973
        %4063 = vst.msk [vmem:[#allocation5 + $0x40] sm:$0xff] %vm4054, %v3975
        %4064 = vst.msk [vmem:[#allocation5 + $0x48] sm:$0xff] %vm4054, %v3977
        %4065 = vst.msk [vmem:[#allocation5 + $0x50] sm:$0xff] %vm4054, %v3979
        %4066 = vst.msk [vmem:[#allocation5 + $0x58] sm:$0xff] %vm4054, %v3981
        %4067 = vst.msk [vmem:[#allocation5 + $0x60] sm:$0xff] %vm4054, %v3983
        %4068 = vst.msk [vmem:[#allocation5 + $0x68] sm:$0xff] %vm4054, %v3985
        %4069 = vst.msk [vmem:[#allocation5 + $0x70] sm:$0xff] %vm4054, %v3987
        %4070 = vst.msk [vmem:[#allocation5 + $0x78] sm:$0xff] %vm4054, %v3989
        %4071 = vst.msk [vmem:[#allocation5 + $0x80] sm:$0xff] %vm4054, %v3991
        %4072 = vst.msk [vmem:[#allocation5 + $0x88] sm:$0xff] %vm4054, %v3993
        %4073 = vst.msk [vmem:[#allocation5 + $0x90] sm:$0xff] %vm4054, %v3995
        %4074 = vst.msk [vmem:[#allocation5 + $0x98] sm:$0xff] %vm4054, %v3997
        %4075 = vst.msk [vmem:[#allocation5 + $0xa0] sm:$0xff] %vm4054, %v3999
        %4076 = vst.msk [vmem:[#allocation5 + $0xa8] sm:$0xff] %vm4054, %v4001
        %4077 = vst.msk [vmem:[#allocation5 + $0xb0] sm:$0xff] %vm4054, %v4003
        %4078 = vst.msk [vmem:[#allocation5 + $0xb8] sm:$0xff] %vm4054, %v4005
        %4079 = vst.msk [vmem:[#allocation5 + $0xc0] sm:$0xff] %vm4054, %v4007
        %4080 = vst.msk [vmem:[#allocation5 + $0xc8] sm:$0xff] %vm4054, %v4009
        %4081 = vst.msk [vmem:[#allocation5 + $0xd0] sm:$0xff] %vm4054, %v4011
        %4082 = vst.msk [vmem:[#allocation5 + $0xd8] sm:$0xff] %vm4054, %v4013
        %4083 = vst.msk [vmem:[#allocation5 + $0xe0] sm:$0xff] %vm4054, %v4015
        %4084 = vst.msk [vmem:[#allocation5 + $0xe8] sm:$0xff] %vm4054, %v4017
        %4085 = vst.msk [vmem:[#allocation5 + $0xf0] sm:$0xff] %vm4054, %v4019
        %4086 = vst.msk [vmem:[#allocation5 + $0xf8] sm:$0xff] %vm4054, %v4021
        %v4087 = vld [vmem:[#allocation5] sm:$0xff]
        %v4088 = vld [vmem:[#allocation5 + $0x8] sm:$0xff]
        %v4089 = vld [vmem:[#allocation5 + $0x10] sm:$0xff]
        %v4090 = vld [vmem:[#allocation5 + $0x18] sm:$0xff]
        %v4091 = vld [vmem:[#allocation5 + $0x20] sm:$0xff]
        %v4092 = vld [vmem:[#allocation5 + $0x28] sm:$0xff]
        %v4093 = vld [vmem:[#allocation5 + $0x30] sm:$0xff]
        %v4094 = vld [vmem:[#allocation5 + $0x38] sm:$0xff]
        %v4095 = vld [vmem:[#allocation5 + $0x40] sm:$0xff]
        %v4096 = vld [vmem:[#allocation5 + $0x48] sm:$0xff]
        %v4097 = vld [vmem:[#allocation5 + $0x50] sm:$0xff]
        %v4098 = vld [vmem:[#allocation5 + $0x58] sm:$0xff]
        %v4099 = vld [vmem:[#allocation5 + $0x60] sm:$0xff]
        %v4100 = vld [vmem:[#allocation5 + $0x68] sm:$0xff]
        %v4101 = vld [vmem:[#allocation5 + $0x70] sm:$0xff]
        %v4102 = vld [vmem:[#allocation5 + $0x78] sm:$0xff]
        %v4103 = vld [vmem:[#allocation5 + $0x80] sm:$0xff]
        %v4104 = vld [vmem:[#allocation5 + $0x88] sm:$0xff]
        %v4105 = vld [vmem:[#allocation5 + $0x90] sm:$0xff]
        %v4106 = vld [vmem:[#allocation5 + $0x98] sm:$0xff]
        %v4107 = vld [vmem:[#allocation5 + $0xa0] sm:$0xff]
        %v4108 = vld [vmem:[#allocation5 + $0xa8] sm:$0xff]
        %v4109 = vld [vmem:[#allocation5 + $0xb0] sm:$0xff]
        %v4110 = vld [vmem:[#allocation5 + $0xb8] sm:$0xff]
        %v4111 = vld [vmem:[#allocation5 + $0xc0] sm:$0xff]
        %v4112 = vld [vmem:[#allocation5 + $0xc8] sm:$0xff]
        %v4113 = vld [vmem:[#allocation5 + $0xd0] sm:$0xff]
        %v4114 = vld [vmem:[#allocation5 + $0xd8] sm:$0xff]
        %v4115 = vld [vmem:[#allocation5 + $0xe0] sm:$0xff]
        %v4116 = vld [vmem:[#allocation5 + $0xe8] sm:$0xff]
        %v4117 = vld [vmem:[#allocation5 + $0xf0] sm:$0xff]
        %v4118 = vld [vmem:[#allocation5 + $0xf8] sm:$0xff]
        %v4119 = vld [vmem:[%s3] sm:$0xff]
        %v4120 = vld [vmem:[%s3 + $0x8] sm:$0xff]
        %v4121 = vld [vmem:[%s3 + $0x10] sm:$0xff]
        %v4122 = vld [vmem:[%s3 + $0x18] sm:$0xff]
        %v4123 = vld [vmem:[%s3 + $0x20] sm:$0xff]
        %v4124 = vld [vmem:[%s3 + $0x28] sm:$0xff]
        %v4125 = vld [vmem:[%s3 + $0x30] sm:$0xff]
        %v4126 = vld [vmem:[%s3 + $0x38] sm:$0xff]
        %v4127 = vld [vmem:[%s3 + $0x40] sm:$0xff]
        %v4128 = vld [vmem:[%s4] sm:$0x1]
        %v4130 = vlaneseq
        %v4131 = vshrl.u32 %v4130, 7
        %v4132 = vsub.s32 0, %v4131
        %v4133 = vrot.slane %v4128, %v4132
        %vm4135 = vcmask 588800
        %v4137 = vsel %vm4135, %v4087, 0
        %v4140 = vsel %vm4135, %v4088, 0
        %v4143 = vsel %vm4135, %v4089, 0
        %v4146 = vsel %vm4135, %v4090, 0
        %v4149 = vsel %vm4135, %v4091, 0
        %v4152 = vsel %vm4135, %v4092, 0
        %v4155 = vsel %vm4135, %v4093, 0
        %v4158 = vsel %vm4135, %v4094, 0
        %v4161 = vsel %vm4135, %v4095, 0
        %v4164 = vsel %vm4135, %v4096, 0
        %v4167 = vsel %vm4135, %v4097, 0
        %v4170 = vsel %vm4135, %v4098, 0
        %v4173 = vsel %vm4135, %v4099, 0
        %v4176 = vsel %vm4135, %v4100, 0
        %v4179 = vsel %vm4135, %v4101, 0
        %v4182 = vsel %vm4135, %v4102, 0
        %v4185 = vsel %vm4135, %v4103, 0
        %v4188 = vsel %vm4135, %v4104, 0
        %v4191 = vsel %vm4135, %v4105, 0
        %v4194 = vsel %vm4135, %v4106, 0
        %v4197 = vsel %vm4135, %v4107, 0
        %v4200 = vsel %vm4135, %v4108, 0
        %v4203 = vsel %vm4135, %v4109, 0
        %v4206 = vsel %vm4135, %v4110, 0
        %v4209 = vsel %vm4135, %v4111, 0
        %v4212 = vsel %vm4135, %v4112, 0
        %v4215 = vsel %vm4135, %v4113, 0
        %v4218 = vsel %vm4135, %v4114, 0
        %v4221 = vsel %vm4135, %v4115, 0
        %v4224 = vsel %vm4135, %v4116, 0
        %v4227 = vsel %vm4135, %v4117, 0
        %v4230 = vsel %vm4135, %v4118, 0
        %4232 = vmatprep.subr.mxu0 0.0
        %4233 = vmatpush1.msra.mxu0 %v4119
        %4234 = vmatprep.subr.mxu0 0.0
        %4235 = vmatpush1.msra.mxu0 %v4120
        %4236 = vmatprep.subr.mxu0 0.0
        %4237 = vmatpush1.msra.mxu0 %v4121
        %4238 = vmatprep.subr.mxu0 0.0
        %4239 = vmatpush1.msra.mxu0 %v4122
        %4240 = vmatprep.subr.mxu0 0.0
        %4241 = vmatpush1.msra.mxu0 %v4123
        %4242 = vmatprep.subr.mxu0 0.0
        %4243 = vmatpush1.msra.mxu0 %v4124
        %4244 = vmatprep.subr.mxu0 0.0
        %4245 = vmatpush1.msra.mxu0 %v4125
        %4246 = vmatprep.subr.mxu0 0.0
        %4247 = vmatpush1.msra.mxu0 %v4126
        %4248 = vmatprep.subr.mxu0 0.0
        %4249 = vmatpush1.msra.mxu0 %v4127
        %4250 = vmatprep.subr.mxu0 0.0
        %4251 = vmatpush1.msra.mxu0 0.0
        %4252 = vmatprep.subr.mxu0 0.0
        %4253 = vmatpush1.msra.mxu0 0.0
        %4254 = vmatprep.subr.mxu0 0.0
        %4255 = vmatpush1.msra.mxu0 0.0
        %4256 = vmatprep.subr.mxu0 0.0
        %4257 = vmatpush1.msra.mxu0 0.0
        %4258 = vmatprep.subr.mxu0 0.0
        %4259 = vmatpush1.msra.mxu0 0.0
        %4260 = vmatprep.subr.mxu0 0.0
        %4261 = vmatpush1.msra.mxu0 0.0
        %4262 = vmatprep.subr.mxu0 0.0
        %4263 = vmatpush1.msra.mxu0 0.0
        %4264 = vmatprep.subr.mxu0 0.0
        %4265 = vmatpush1.msra.mxu0 0.0
        %4266 = vmatprep.subr.mxu0 0.0
        %4267 = vmatpush1.msra.mxu0 0.0
        %4268 = vmatprep.subr.mxu0 0.0
        %4269 = vmatpush1.msra.mxu0 0.0
        %4270 = vmatprep.subr.mxu0 0.0
        %4271 = vmatpush1.msra.mxu0 0.0
        %4272 = vmatprep.subr.mxu0 0.0
        %4273 = vmatpush1.msra.mxu0 0.0
        %4274 = vmatprep.subr.mxu0 0.0
        %4275 = vmatpush1.msra.mxu0 0.0
        %4276 = vmatprep.subr.mxu0 0.0
        %4277 = vmatpush1.msra.mxu0 0.0
        %4278 = vmatprep.subr.mxu0 0.0
        %4279 = vmatpush1.msra.mxu0 0.0
        %4280 = vmatprep.subr.mxu0 0.0
        %4281 = vmatpush1.msra.mxu0 0.0
        %4282 = vmatprep.subr.mxu0 0.0
        %4283 = vmatpush1.msra.mxu0 0.0
        %4284 = vmatprep.subr.mxu0 0.0
        %4285 = vmatpush1.msra.mxu0 0.0
        %4286 = vmatprep.subr.mxu0 0.0
        %4287 = vmatpush1.msra.mxu0 0.0
        %4288 = vmatprep.subr.mxu0 0.0
        %4289 = vmatpush1.msra.mxu0 0.0
        %4290 = vmatprep.subr.mxu0 0.0
        %4291 = vmatpush1.msra.mxu0 0.0
        %4292 = vmatprep.subr.mxu0 0.0
        %4293 = vmatpush1.msra.mxu0 0.0
        %4294 = vmatprep.subr.mxu0 0.0
        %4295 = vmatpush1.msra.mxu0 0.0
        %4296 = vmatprep.mubr.f32.mxu0 0.0
        %4297 = vmatmul.mubr.f32.gmra.mrb[0].mxu0 %v4137
        %v4298 = vpop.f32.mrb[0].mxu0
        %v4299 = vadd.f32 %v4133, %v4298
        %v4300 = vpop.f32.mrb[0].mxu0
        %4301 = vmatprep.mubr.f32.mxu0 0.0
        %4302 = vmatmul.mubr.f32.gmra.mrb[0].mxu0 %v4140
        %v4303 = vpop.f32.mrb[0].mxu0
        %v4304 = vadd.f32 %v4133, %v4303
        %v4305 = vpop.f32.mrb[0].mxu0
        %4306 = vmatprep.mubr.f32.mxu0 0.0
        %4307 = vmatmul.mubr.f32.gmra.mrb[0].mxu0 %v4143
        %v4308 = vpop.f32.mrb[0].mxu0
        %v4309 = vadd.f32 %v4133, %v4308
        %v4310 = vpop.f32.mrb[0].mxu0
        %4311 = vmatprep.mubr.f32.mxu0 0.0
        %4312 = vmatmul.mubr.f32.gmra.mrb[0].mxu0 %v4146
        %v4313 = vpop.f32.mrb[0].mxu0
        %v4314 = vadd.f32 %v4133, %v4313
        %v4315 = vpop.f32.mrb[0].mxu0
        %4316 = vmatprep.mubr.f32.mxu0 0.0
        %4317 = vmatmul.mubr.f32.gmra.mrb[0].mxu0 %v4149
        %v4318 = vpop.f32.mrb[0].mxu0
        %v4319 = vadd.f32 %v4133, %v4318
        %v4320 = vpop.f32.mrb[0].mxu0
        %4321 = vmatprep.mubr.f32.mxu0 0.0
        %4322 = vmatmul.mubr.f32.gmra.mrb[0].mxu0 %v4152
        %v4323 = vpop.f32.mrb[0].mxu0
        %v4324 = vadd.f32 %v4133, %v4323
        %v4325 = vpop.f32.mrb[0].mxu0
        %4326 = vmatprep.mubr.f32.mxu0 0.0
        %4327 = vmatmul.mubr.f32.gmra.mrb[0].mxu0 %v4155
        %v4328 = vpop.f32.mrb[0].mxu0
        %v4329 = vadd.f32 %v4133, %v4328
        %v4330 = vpop.f32.mrb[0].mxu0
        %4331 = vmatprep.mubr.f32.mxu0 0.0
        %4332 = vmatmul.mubr.f32.gmra.mrb[0].mxu0 %v4158
        %v4333 = vpop.f32.mrb[0].mxu0
        %v4334 = vadd.f32 %v4133, %v4333
        %v4335 = vpop.f32.mrb[0].mxu0
        %4336 = vmatprep.mubr.f32.mxu0 0.0
        %4337 = vmatmul.mubr.f32.gmra.mrb[0].mxu0 %v4161
        %v4338 = vpop.f32.mrb[0].mxu0
        %v4339 = vadd.f32 %v4133, %v4338
        %v4340 = vpop.f32.mrb[0].mxu0
        %4341 = vmatprep.mubr.f32.mxu0 0.0
        %4342 = vmatmul.mubr.f32.gmra.mrb[0].mxu0 %v4164
        %v4343 = vpop.f32.mrb[0].mxu0
        %v4344 = vadd.f32 %v4133, %v4343
        %v4345 = vpop.f32.mrb[0].mxu0
        %4346 = vmatprep.mubr.f32.mxu0 0.0
        %4347 = vmatmul.mubr.f32.gmra.mrb[0].mxu0 %v4167
        %v4348 = vpop.f32.mrb[0].mxu0
        %v4349 = vadd.f32 %v4133, %v4348
        %v4350 = vpop.f32.mrb[0].mxu0
        %4351 = vmatprep.mubr.f32.mxu0 0.0
        %4352 = vmatmul.mubr.f32.gmra.mrb[0].mxu0 %v4170
        %v4353 = vpop.f32.mrb[0].mxu0
        %v4354 = vadd.f32 %v4133, %v4353
        %v4355 = vpop.f32.mrb[0].mxu0
        %4356 = vmatprep.mubr.f32.mxu0 0.0
        %4357 = vmatmul.mubr.f32.gmra.mrb[0].mxu0 %v4173
        %v4358 = vpop.f32.mrb[0].mxu0
        %v4359 = vadd.f32 %v4133, %v4358
        %v4360 = vpop.f32.mrb[0].mxu0
        %4361 = vmatprep.mubr.f32.mxu0 0.0
        %4362 = vmatmul.mubr.f32.gmra.mrb[0].mxu0 %v4176
        %v4363 = vpop.f32.mrb[0].mxu0
        %v4364 = vadd.f32 %v4133, %v4363
        %v4365 = vpop.f32.mrb[0].mxu0
        %4366 = vmatprep.mubr.f32.mxu0 0.0
        %4367 = vmatmul.mubr.f32.gmra.mrb[0].mxu0 %v4179
        %v4368 = vpop.f32.mrb[0].mxu0
        %v4369 = vadd.f32 %v4133, %v4368
        %v4370 = vpop.f32.mrb[0].mxu0
        %4371 = vmatprep.mubr.f32.mxu0 0.0
        %4372 = vmatmul.mubr.f32.gmra.mrb[0].mxu0 %v4182
        %v4373 = vpop.f32.mrb[0].mxu0
        %v4374 = vadd.f32 %v4133, %v4373
        %v4375 = vpop.f32.mrb[0].mxu0
        %4376 = vmatprep.mubr.f32.mxu0 0.0
        %4377 = vmatmul.mubr.f32.gmra.mrb[0].mxu0 %v4185
        %v4378 = vpop.f32.mrb[0].mxu0
        %v4379 = vadd.f32 %v4133, %v4378
        %v4380 = vpop.f32.mrb[0].mxu0
        %4381 = vmatprep.mubr.f32.mxu0 0.0
        %4382 = vmatmul.mubr.f32.gmra.mrb[0].mxu0 %v4188
        %v4383 = vpop.f32.mrb[0].mxu0
        %v4384 = vadd.f32 %v4133, %v4383
        %v4385 = vpop.f32.mrb[0].mxu0
        %4386 = vmatprep.mubr.f32.mxu0 0.0
        %4387 = vmatmul.mubr.f32.gmra.mrb[0].mxu0 %v4191
        %v4388 = vpop.f32.mrb[0].mxu0
        %v4389 = vadd.f32 %v4133, %v4388
        %v4390 = vpop.f32.mrb[0].mxu0
        %4391 = vmatprep.mubr.f32.mxu0 0.0
        %4392 = vmatmul.mubr.f32.gmra.mrb[0].mxu0 %v4194
        %v4393 = vpop.f32.mrb[0].mxu0
        %v4394 = vadd.f32 %v4133, %v4393
        %v4395 = vpop.f32.mrb[0].mxu0
        %4396 = vmatprep.mubr.f32.mxu0 0.0
        %4397 = vmatmul.mubr.f32.gmra.mrb[0].mxu0 %v4197
        %v4398 = vpop.f32.mrb[0].mxu0
        %v4399 = vadd.f32 %v4133, %v4398
        %v4400 = vpop.f32.mrb[0].mxu0
        %4401 = vmatprep.mubr.f32.mxu0 0.0
        %4402 = vmatmul.mubr.f32.gmra.mrb[0].mxu0 %v4200
        %v4403 = vpop.f32.mrb[0].mxu0
        %v4404 = vadd.f32 %v4133, %v4403
        %v4405 = vpop.f32.mrb[0].mxu0
        %4406 = vmatprep.mubr.f32.mxu0 0.0
        %4407 = vmatmul.mubr.f32.gmra.mrb[0].mxu0 %v4203
        %v4408 = vpop.f32.mrb[0].mxu0
        %v4409 = vadd.f32 %v4133, %v4408
        %v4410 = vpop.f32.mrb[0].mxu0
        %4411 = vmatprep.mubr.f32.mxu0 0.0
        %4412 = vmatmul.mubr.f32.gmra.mrb[0].mxu0 %v4206
        %v4413 = vpop.f32.mrb[0].mxu0
        %v4414 = vadd.f32 %v4133, %v4413
        %v4415 = vpop.f32.mrb[0].mxu0
        %4416 = vmatprep.mubr.f32.mxu0 0.0
        %4417 = vmatmul.mubr.f32.gmra.mrb[0].mxu0 %v4209
        %v4418 = vpop.f32.mrb[0].mxu0
        %v4419 = vadd.f32 %v4133, %v4418
        %v4420 = vpop.f32.mrb[0].mxu0
        %4421 = vmatprep.mubr.f32.mxu0 0.0
        %4422 = vmatmul.mubr.f32.gmra.mrb[0].mxu0 %v4212
        %v4423 = vpop.f32.mrb[0].mxu0
        %v4424 = vadd.f32 %v4133, %v4423
        %v4425 = vpop.f32.mrb[0].mxu0
        %4426 = vmatprep.mubr.f32.mxu0 0.0
        %4427 = vmatmul.mubr.f32.gmra.mrb[0].mxu0 %v4215
        %v4428 = vpop.f32.mrb[0].mxu0
        %v4429 = vadd.f32 %v4133, %v4428
        %v4430 = vpop.f32.mrb[0].mxu0
        %4431 = vmatprep.mubr.f32.mxu0 0.0
        %4432 = vmatmul.mubr.f32.gmra.mrb[0].mxu0 %v4218
        %v4433 = vpop.f32.mrb[0].mxu0
        %v4434 = vadd.f32 %v4133, %v4433
        %v4435 = vpop.f32.mrb[0].mxu0
        %4436 = vmatprep.mubr.f32.mxu0 0.0
        %4437 = vmatmul.mubr.f32.gmra.mrb[0].mxu0 %v4221
        %v4438 = vpop.f32.mrb[0].mxu0
        %v4439 = vadd.f32 %v4133, %v4438
        %v4440 = vpop.f32.mrb[0].mxu0
        %4441 = vmatprep.mubr.f32.mxu0 0.0
        %4442 = vmatmul.mubr.f32.gmra.mrb[0].mxu0 %v4224
        %v4443 = vpop.f32.mrb[0].mxu0
        %v4444 = vadd.f32 %v4133, %v4443
        %v4445 = vpop.f32.mrb[0].mxu0
        %4446 = vmatprep.mubr.f32.mxu0 0.0
        %4447 = vmatmul.mubr.f32.gmra.mrb[0].mxu0 %v4227
        %v4448 = vpop.f32.mrb[0].mxu0
        %v4449 = vadd.f32 %v4133, %v4448
        %v4450 = vpop.f32.mrb[0].mxu0
        %4451 = vmatprep.mubr.f32.mxu0 0.0
        %4452 = vmatmul.mubr.f32.gmra.mrb[0].mxu0 %v4230
        %v4453 = vpop.f32.mrb[0].mxu0
        %v4454 = vadd.f32 %v4133, %v4453
        %v4455 = vpop.f32.mrb[0].mxu0
        %4456 = vdwg.mxu0
        %v4457 = vmax.f32 %v4299, 0.0
        %v4458 = vmax.f32 %v4304, 0.0
        %v4459 = vmax.f32 %v4309, 0.0
        %v4460 = vmax.f32 %v4314, 0.0
        %v4461 = vmax.f32 %v4319, 0.0
        %v4462 = vmax.f32 %v4324, 0.0
        %v4463 = vmax.f32 %v4329, 0.0
        %v4464 = vmax.f32 %v4334, 0.0
        %v4465 = vmax.f32 %v4339, 0.0
        %v4466 = vmax.f32 %v4344, 0.0
        %v4467 = vmax.f32 %v4349, 0.0
        %v4468 = vmax.f32 %v4354, 0.0
        %v4469 = vmax.f32 %v4359, 0.0
        %v4470 = vmax.f32 %v4364, 0.0
        %v4471 = vmax.f32 %v4369, 0.0
        %v4472 = vmax.f32 %v4374, 0.0
        %v4473 = vmax.f32 %v4379, 0.0
        %v4474 = vmax.f32 %v4384, 0.0
        %v4475 = vmax.f32 %v4389, 0.0
        %v4476 = vmax.f32 %v4394, 0.0
        %v4477 = vmax.f32 %v4399, 0.0
        %v4478 = vmax.f32 %v4404, 0.0
        %v4479 = vmax.f32 %v4409, 0.0
        %v4480 = vmax.f32 %v4414, 0.0
        %v4481 = vmax.f32 %v4419, 0.0
        %v4482 = vmax.f32 %v4424, 0.0
        %v4483 = vmax.f32 %v4429, 0.0
        %v4484 = vmax.f32 %v4434, 0.0
        %v4485 = vmax.f32 %v4439, 0.0
        %v4486 = vmax.f32 %v4444, 0.0
        %v4487 = vmax.f32 %v4449, 0.0
        %v4488 = vmax.f32 %v4454, 0.0
        %4489 = vxpose.xlu0.b32.start [1/16] %v4457, 128
        %4490 = vxpose.xlu0.b32.cont [2/16] %v4458, 128
        %4491 = vxpose.xlu0.b32.cont [3/16] %v4459, 128
        %4492 = vxpose.xlu0.b32.cont [4/16] %v4460, 128
        %4493 = vxpose.xlu0.b32.cont [5/16] %v4461, 128
        %4494 = vxpose.xlu0.b32.cont [6/16] %v4462, 128
        %4495 = vxpose.xlu0.b32.cont [7/16] %v4463, 128
        %4496 = vxpose.xlu0.b32.cont [8/16] %v4464, 128
        %4497 = vxpose.xlu0.b32.cont [9/16] %v4465, 128
        %4498 = vxpose.xlu0.b32.cont [10/16] %v4466, 128
        %4499 = vxpose.xlu0.b32.cont [11/16] %v4467, 128
        %4500 = vxpose.xlu0.b32.cont [12/16] %v4468, 128
        %4501 = vxpose.xlu0.b32.cont [13/16] %v4469, 128
        %4502 = vxpose.xlu0.b32.cont [14/16] %v4470, 128
        %4503 = vxpose.xlu0.b32.cont [15/16] %v4471, 128
        %4504 = vxpose.xlu0.b32.end [16/16] %v4472, 128
        %v4505 = vpop.trf.xlu0
        %v4506 = vpop.trf.xlu0
        %v4507 = vpop.trf.xlu0
        %v4508 = vpop.trf.xlu0
        %v4509 = vpop.trf.xlu0
        %v4510 = vpop.trf.xlu0
        %v4511 = vpop.trf.xlu0
        %v4512 = vpop.trf.xlu0
        %v4513 = vpop.trf.xlu0
        %v4514 = vpop.trf.xlu0
        %v4515 = vpop.trf.xlu0
        %v4516 = vpop.trf.xlu0
        %v4517 = vpop.trf.xlu0
        %v4518 = vpop.trf.xlu0
        %v4519 = vpop.trf.xlu0
        %v4520 = vpop.trf.xlu0
        %4521 = vxpose.xlu0.b32.start [1/16] %v4473, 128
        %4522 = vxpose.xlu0.b32.cont [2/16] %v4474, 128
        %4523 = vxpose.xlu0.b32.cont [3/16] %v4475, 128
        %4524 = vxpose.xlu0.b32.cont [4/16] %v4476, 128
        %4525 = vxpose.xlu0.b32.cont [5/16] %v4477, 128
        %4526 = vxpose.xlu0.b32.cont [6/16] %v4478, 128
        %4527 = vxpose.xlu0.b32.cont [7/16] %v4479, 128
        %4528 = vxpose.xlu0.b32.cont [8/16] %v4480, 128
        %4529 = vxpose.xlu0.b32.cont [9/16] %v4481, 128
        %4530 = vxpose.xlu0.b32.cont [10/16] %v4482, 128
        %4531 = vxpose.xlu0.b32.cont [11/16] %v4483, 128
        %4532 = vxpose.xlu0.b32.cont [12/16] %v4484, 128
        %4533 = vxpose.xlu0.b32.cont [13/16] %v4485, 128
        %4534 = vxpose.xlu0.b32.cont [14/16] %v4486, 128
        %4535 = vxpose.xlu0.b32.cont [15/16] %v4487, 128
        %4536 = vxpose.xlu0.b32.end [16/16] %v4488, 128
        %v4537 = vpop.trf.xlu0
        %v4538 = vpop.trf.xlu0
        %v4539 = vpop.trf.xlu0
        %v4540 = vpop.trf.xlu0
        %v4541 = vpop.trf.xlu0
        %v4542 = vpop.trf.xlu0
        %v4543 = vpop.trf.xlu0
        %v4544 = vpop.trf.xlu0
        %v4545 = vpop.trf.xlu0
        %v4546 = vpop.trf.xlu0
        %v4547 = vpop.trf.xlu0
        %v4548 = vpop.trf.xlu0
        %v4549 = vpop.trf.xlu0
        %v4550 = vpop.trf.xlu0
        %v4551 = vpop.trf.xlu0
        %v4552 = vpop.trf.xlu0
        %4553 = vst [vmem:[%s217] sm:$0xff] %v4505
        %4554 = vst [vmem:[%s217 + $0x8] sm:$0xff] %v4537
        %s4555 = sand.u32 %s137, 1
        %s4556 = scalar_lea.sflag [#allocation7], %s4555
        %s4557 = sand.u32 %s137, 1
        %s4558 = smul.addr %s4557, 16
        %s4559 = scalar_lea.vmem [#allocation6], %s4558
        // Predicated region
        $region41: #{tpu_custom_call.1} parent=39 // pred_check
          %p4560 = pneg %p147
        $region42: #{tpu_custom_call.1} parent=39 // pred_check_branch
          %4562 = sbr.rel (%p4560) target = $region44
        $region43: #{tpu_custom_call.1} parent=39 // pred_region
          %s4564 = ssub.s32 256, 256
          %4565 = vsyncadd %s4556, %s4564
          %s4566 = smul.addr %s19, 2
          %s4567 = smul.addr %s4566, 128
          %s4568 = scalar_lea.hbm %s5, %s4567
          %s4570 = sshll.u32 %s4559, 4
          %s4571 = int_to_ptr.vmem [resolvable:$true] %s4570
          %4573 = dma.vmem_to_hbm [thread:$0]  %s4571, 256, %s4568, %s4556
        $region44: #{tpu_custom_call.1} parent=39 // pred_fallthru
          _
      $region40: #{tpu_custom_call.1} parent=5 // pred_fallthru
        _
      %p4574 = scmp.le.s32.totalorder 2, %s14
      // Predicated region
      $region45: #{tpu_custom_call.1} parent=5 // pred_check
        %p4575 = pneg %p4574
      $region46: #{tpu_custom_call.1} parent=5 // pred_check_branch
        %4577 = sbr.rel (%p4575) target = $region48
      $region47: #{tpu_custom_call.1} parent=5 // pred_region
        %s4578 = ssub.s32 %s14, 2
        // Predicated region
        $region49: #{tpu_custom_call.1} parent=47 // pred_check
          %p4579 = pneg %p153
        $region50: #{tpu_custom_call.1} parent=47 // pred_check_branch
          %4581 = sbr.rel (%p4579) target = $region52
        $region51: #{tpu_custom_call.1} parent=47 // pred_region
          %s4582 = sand.u32 %s138, 1
          %s4583 = scalar_lea.sflag [#allocation7], %s4582
          %s4584 = sand.u32 %s138, 1
          %s4585 = smul.addr %s4584, 16
          %s4586 = scalar_lea.vmem [#allocation6], %s4585
          %4587 = dma.done %s4583, 256
        $region52: #{tpu_custom_call.1} parent=47 // pred_fallthru
          _
      $region48: #{tpu_custom_call.1} parent=5 // pred_fallthru
        _
    $region6: #{tpu_custom_call.1} parent=1 // loop_footer
      %s18 = sadd.s32 1, %s14
    $region7: #{tpu_custom_call.1} parent=1 // loop_footer_branch
      %13 = sbr.rel target = $region3
    $region8: #{tpu_custom_call.1} parent=1 // loop_exit
      _
    %4588 = vsyncpa [#allocation7], 1
    %s4589 = scalar_lea.sflag [#allocation7], 1
    %4590 = vsyncpa %s4589, 1

</llo_original>
